<compile_context>
chip_gen: v7x
topology: tpu7x:2x2x1
jax: 0.10.0
libtpu: 0.0.40
codegen_flags: <defaults>
</compile_context>

<pallas_src>
import functools

import jax
import jax.numpy as jnp
from jax.experimental import pallas as pl
from jax.experimental.pallas import tpu as pltpu


# ----------------------------------------------------------------------------
# Pallas kernel: one (TH rows, W cols, C channels) tile of one image.
# ----------------------------------------------------------------------------
def _fam_kernel(x1_ref, x2_ref, x1t_ref, x2t_ref, x1b_ref, x2b_ref,
                w_ref, b_ref, o_ref, pad_ref, *, TH, W, C, R):
    r = pl.program_id(1)                           # row-tile index inside image
    TP = TH * W                                    # pixels in this tile
    BASE = 1 + W                                   # offset of pixel 0 in pad_ref

    x1 = x1_ref[0]                                 # (TP, C) f32
    x2 = x2_ref[0]
    x = x1 * x2                                    # FAM gating (VPU, f32)

    # Halo rows (image row just above / below the tile).  Their index_maps are
    # clamped at the image border, so zero them when the tile touches it.
    top = jnp.where(r > 0, x1t_ref[0] * x2t_ref[0], 0.0)       # (W, C)
    bot = jnp.where(r < R - 1, x1b_ref[0] * x2b_ref[0], 0.0)   # (W, C)

    # Zero-padded slab:
    #   [0]=0 | [1, 1+W)=top halo | [1+W, 1+W+TP)=x | next W rows=bot halo | [last]=0
    # Every row is rewritten each grid step (no init-once state -> megacore safe).
    pad_ref[pl.ds(0, 1), :] = jnp.zeros((1, C), jnp.float32)
    pad_ref[pl.ds(1, W), :] = top
    pad_ref[pl.ds(BASE, TP), :] = x
    pad_ref[pl.ds(BASE + TP, W), :] = bot
    pad_ref[pl.ds(BASE + TP + W, 1), :] = jnp.zeros((1, C), jnp.float32)

    # Left/right image-border masks (the only wrap the flat row-major layout
    # does not zero by itself).  Cheap VPU work, far from the bottleneck.
    col = jax.lax.broadcasted_iota(jnp.int32, (TP, C), 0) % W
    mask_l = col >= 1                              # neighbour at dw = -1 exists
    mask_r = col <= W - 2                          # neighbour at dw = +1 exists

    # 9 taps -> 9 accumulating MXU matmuls (f32 accumulate), no cat slab.
    acc = jnp.zeros((TP, C), jnp.float32)
    k = 0
    for dh in (-1, 0, 1):
        for dw in (-1, 0, 1):
            off = dh * W + dw
            tap = pad_ref[pl.ds(BASE + off, TP), :]            # (TP, C)
            if dw == -1:
                tap = jnp.where(mask_l, tap, 0.0)
            elif dw == 1:
                tap = jnp.where(mask_r, tap, 0.0)
            acc = acc + jnp.dot(tap, w_ref[k],
                                preferred_element_type=jnp.float32)
            k += 1

    # Bias + residual add, then store.
    # TODO(synk): for C=32 a lane-dense (TP//4, 4*C) output view would turn the
    # masked 32-lane stores into full 128-lane stores (next biggest lever).
    o_ref[0] = (x1 + acc + b_ref[...]).astype(o_ref.dtype)


# ----------------------------------------------------------------------------
# Wrappers
# ----------------------------------------------------------------------------
def _pick_tile_rows(H, W, max_pixels):
    """Largest divisor TH of H with TH*W <= max_pixels (at least 1)."""
    best = 1
    for th in range(1, H + 1):
        if H % th == 0 and th * W <= max_pixels:
            best = th
    return best


def fam_pallas_nhwc(x1, x2, weight_oihw, bias, *, max_tile_pixels=2048):
    """FAM forward, NHWC in / NHWC out (no layout transposes needed)."""
    N, H, W, C = x1.shape
    if W % 8 != 0:
        # TODO(synk): widths not a multiple of 8 would need padded row blocks;
        # not needed for MIMO-UNet image sizes.
        raise ValueError("fam_pallas_nhwc requires W % 8 == 0")

    TH = _pick_tile_rows(H, W, max_tile_pixels)
    R = H // TH
    TP = TH * W
    HW = H * W

    x1_2d = x1.reshape(N, HW, C).astype(jnp.float32)
    x2_2d = x2.reshape(N, HW, C).astype(jnp.float32)

    # (Cout, Cin, 3, 3) -> (3, 3, Cin, Cout) -> (9, Cin, Cout), f32.
    w9 = jnp.transpose(weight_oihw, (2, 3, 1, 0)).reshape(9, C, C)
    w9 = w9.astype(jnp.float32)
    b2 = bias.reshape(1, C).astype(jnp.float32)

    # Index maps.  Halo rows clamp at the image border (zeroed in-kernel).
    main_map = lambda n, r: (n, r, 0)
    top_map = lambda n, r: (n, jnp.maximum(r * TH - 1, 0), 0)
    bot_map = lambda n, r: (n, jnp.minimum((r + 1) * TH, H - 1), 0)

    grid_spec = pltpu.PrefetchScalarGridSpec(
        num_scalar_prefetch=0,
        grid=(N, R),
        in_specs=[
            pl.BlockSpec((1, TP, C), main_map),                 # x1 tile
            pl.BlockSpec((1, TP, C), main_map),                 # x2 tile
            pl.BlockSpec((1, W, C), top_map),                   # x1 top-halo row
            pl.BlockSpec((1, W, C), top_map),                   # x2 top-halo row
            pl.BlockSpec((1, W, C), bot_map),                   # x1 bottom-halo row
            pl.BlockSpec((1, W, C), bot_map),                   # x2 bottom-halo row
            pl.BlockSpec((9, C, C), lambda n, r: (0, 0, 0)),    # conv weight
            pl.BlockSpec((1, C), lambda n, r: (0, 0)),          # bias
        ],
        out_specs=pl.BlockSpec((1, TP, C), main_map),
        scratch_shapes=[pltpu.VMEM((TP + 2 * W + 2, C), jnp.float32)],
    )

    # VMEM budget derived from the actual buffers (BlockSpec double-buffers).
    f32b = 4
    block_bytes = (
        2 * 2 * TP * C * f32b            # x1/x2 tiles (double-buffered)
        + 4 * 2 * W * C * f32b           # halo rows
        + 2 * 9 * C * C * f32b           # weights
        + 2 * max(C, 128) * f32b         # bias (lane padding)
        + 2 * TP * C * f32b              # output tile
        + (TP + 2 * W + 2) * C * f32b    # pad scratch
    )
    vmem_limit = int(min(100 << 20, max(2 * block_bytes + (4 << 20), 32 << 20)))

    out2d = pl.pallas_call(
        functools.partial(_fam_kernel, TH=TH, W=W, C=C, R=R),
        out_shape=jax.ShapeDtypeStruct((N, HW, C), jnp.float32),
        grid_spec=grid_spec,
        compiler_params=pltpu.CompilerParams(
            dimension_semantics=("parallel", "parallel"),
            vmem_limit_bytes=vmem_limit),
    )(x1_2d, x2_2d, x1_2d, x2_2d, x1_2d, x2_2d, w9, b2)

    return out2d.reshape(N, H, W, C)


def fam_pallas(x1_nchw, x2_nchw, weight_oihw, bias, *, max_tile_pixels=2048):
    """NCHW adapter matching the PyTorch module (two XLA transposes of glue)."""
    x1 = jnp.transpose(x1_nchw, (0, 2, 3, 1))
    x2 = jnp.transpose(x2_nchw, (0, 2, 3, 1))
    out = fam_pallas_nhwc(x1, x2, weight_oihw, bias,
                          max_tile_pixels=max_tile_pixels)
    return jnp.transpose(out, (0, 3, 1, 2))


# ----------------------------------------------------------------------------
# Pure-JAX reference reproducing the PyTorch FAM forward (NCHW in/out).
# ----------------------------------------------------------------------------
def fam_reference(x1_nchw, x2_nchw, weight_oihw, bias):
    x = x1_nchw * x2_nchw
    xh = jnp.transpose(x, (0, 2, 3, 1))                      # NHWC
    w_hwio = jnp.transpose(weight_oihw, (2, 3, 1, 0))        # HWIO
    y = jax.lax.conv_general_dilated(
        xh, w_hwio, (1, 1), 'SAME',
        dimension_numbers=('NHWC', 'HWIO', 'NHWC'),
        precision=jax.lax.Precision.HIGHEST)
    y = y + bias.reshape(1, 1, 1, -1)
    return x1_nchw + jnp.transpose(y, (0, 3, 1, 2))


if __name__ == "__main__":
    key = jax.random.PRNGKey(0)
    k1, k2, kw, kb = jax.random.split(key, 4)
    N, C, H, W = 2, 32, 16, 16                               # FAM(channel=32)
    x1 = jax.random.normal(k1, (N, C, H, W), jnp.float32)
    x2 = jax.random.normal(k2, (N, C, H, W), jnp.float32)
    weight = 0.1 * jax.random.normal(kw, (C, C, 3, 3), jnp.float32)  # OIHW
    bias = 0.1 * jax.random.normal(kb, (C,), jnp.float32)

    ref = fam_reference(x1, x2, weight, bias)

    # 1) single row-tile per image (whole image per grid step).
    out = jax.block_until_ready(fam_pallas(x1, x2, weight, bias))
    assert out.shape == (N, C, H, W), out.shape
    err = float(jnp.max(jnp.abs(out - ref)))
    if err > 2e-2:
        raise AssertionError(f"single-tile mismatch: max abs err = {err}")

    # 2) row-tiled path with halo exchange (TH=8 -> 2 row tiles per image).
    out_t = jax.block_until_ready(
        fam_pallas(x1, x2, weight, bias, max_tile_pixels=8 * W))
    err_t = float(jnp.max(jnp.abs(out_t - ref)))
    if err_t > 2e-2:
        raise AssertionError(f"row-tiled mismatch: max abs err = {err_t}")

    print("KERNEL_OK")
</pallas_src>

<mosaic_0001>
module attributes {stable_mosaic.version = 11 : i64} {
  func.func @_fam_kernel(%arg0: i32, %arg1: i32, %arg2: memref<1x256x32xf32, #tpu.memory_space<vmem>>, %arg3: memref<1x256x32xf32, #tpu.memory_space<vmem>>, %arg4: memref<1x16x32xf32, #tpu.memory_space<vmem>>, %arg5: memref<1x16x32xf32, #tpu.memory_space<vmem>>, %arg6: memref<1x16x32xf32, #tpu.memory_space<vmem>>, %arg7: memref<1x16x32xf32, #tpu.memory_space<vmem>>, %arg8: memref<9x32x32xf32, #tpu.memory_space<vmem>>, %arg9: memref<1x32xf32, #tpu.memory_space<vmem>>, %arg10: memref<1x256x32xf32, #tpu.memory_space<vmem>>, %arg11: memref<290x32xf32, #tpu.memory_space<vmem>>) attributes {dimension_semantics = [#tpu.dimension_semantics<parallel>, #tpu.dimension_semantics<parallel>], iteration_bounds = array<i64: 2, 1>, scalar_prefetch = 0 : i64, scratch_operands = 1 : i64, tpu.core_type = #tpu.core_type<tc>, window_params = [{transform_indices = @transform_0, window_bounds = array<i64: 1, 256, 32>}, {transform_indices = @transform_1, window_bounds = array<i64: 1, 256, 32>}, {transform_indices = @transform_2, window_bounds = array<i64: 1, 16, 32>}, {transform_indices = @transform_3, window_bounds = array<i64: 1, 16, 32>}, {transform_indices = @transform_4, window_bounds = array<i64: 1, 16, 32>}, {transform_indices = @transform_5, window_bounds = array<i64: 1, 16, 32>}, {pipeline_mode = #tpu.pipeline_mode<synchronous>, transform_indices = @transform_6, window_bounds = array<i64: 9, 32, 32>}, {pipeline_mode = #tpu.pipeline_mode<synchronous>, transform_indices = @transform_7, window_bounds = array<i64: 1, 32>}, {transform_indices = @transform_8, window_bounds = array<i64: 1, 256, 32>}]} {
    %c0 = arith.constant 0 : index
    %c0_0 = arith.constant 0 : index
    %c0_1 = arith.constant 0 : index
    %0 = vector.load %arg2[%c0, %c0_0, %c0_1] : memref<1x256x32xf32, #tpu.memory_space<vmem>>, vector<1x256x32xf32>
    %1 = vector.shape_cast %0 : vector<1x256x32xf32> to vector<256x32xf32>
    %c0_2 = arith.constant 0 : index
    %c0_3 = arith.constant 0 : index
    %c0_4 = arith.constant 0 : index
    %2 = vector.load %arg3[%c0_2, %c0_3, %c0_4] : memref<1x256x32xf32, #tpu.memory_space<vmem>>, vector<1x256x32xf32>
    %3 = vector.shape_cast %2 : vector<1x256x32xf32> to vector<256x32xf32>
    %4 = arith.mulf %1, %3 : vector<256x32xf32>
    %c0_i32 = arith.constant 0 : i32
    %5 = arith.cmpi sgt, %arg1, %c0_i32 : i32
    %c0_5 = arith.constant 0 : index
    %c0_6 = arith.constant 0 : index
    %c0_7 = arith.constant 0 : index
    %6 = vector.load %arg4[%c0_5, %c0_6, %c0_7] : memref<1x16x32xf32, #tpu.memory_space<vmem>>, vector<1x16x32xf32>
    %7 = vector.shape_cast %6 : vector<1x16x32xf32> to vector<16x32xf32>
    %c0_8 = arith.constant 0 : index
    %c0_9 = arith.constant 0 : index
    %c0_10 = arith.constant 0 : index
    %8 = vector.load %arg5[%c0_8, %c0_9, %c0_10] : memref<1x16x32xf32, #tpu.memory_space<vmem>>, vector<1x16x32xf32>
    %9 = vector.shape_cast %8 : vector<1x16x32xf32> to vector<16x32xf32>
    %10 = arith.mulf %7, %9 : vector<16x32xf32>
    %cst = arith.constant 0.000000e+00 : f32
    %11 = vector.broadcast %cst : f32 to vector<16x32xf32>
    %12 = arith.select %5, %10, %11 : vector<16x32xf32>
    %c0_i32_11 = arith.constant 0 : i32
    %13 = arith.cmpi slt, %arg1, %c0_i32_11 : i32
    %c0_12 = arith.constant 0 : index
    %c0_13 = arith.constant 0 : index
    %c0_14 = arith.constant 0 : index
    %14 = vector.load %arg6[%c0_12, %c0_13, %c0_14] : memref<1x16x32xf32, #tpu.memory_space<vmem>>, vector<1x16x32xf32>
    %15 = vector.shape_cast %14 : vector<1x16x32xf32> to vector<16x32xf32>
    %c0_15 = arith.constant 0 : index
    %c0_16 = arith.constant 0 : index
    %c0_17 = arith.constant 0 : index
    %16 = vector.load %arg7[%c0_15, %c0_16, %c0_17] : memref<1x16x32xf32, #tpu.memory_space<vmem>>, vector<1x16x32xf32>
    %17 = vector.shape_cast %16 : vector<1x16x32xf32> to vector<16x32xf32>
    %18 = arith.mulf %15, %17 : vector<16x32xf32>
    %cst_18 = arith.constant 0.000000e+00 : f32
    %19 = vector.broadcast %cst_18 : f32 to vector<16x32xf32>
    %20 = arith.select %13, %18, %19 : vector<16x32xf32>
    %cst_19 = arith.constant 0.000000e+00 : f32
    %21 = vector.broadcast %cst_19 : f32 to vector<1x32xf32>
    %c0_20 = arith.constant 0 : index
    %c0_21 = arith.constant 0 : index
    %22 = vector.load %arg11[%c0_20, %c0_21] : memref<290x32xf32, #tpu.memory_space<vmem>>, vector<1x32xf32>
    tpu.vector_store %arg11[%c0_20, %c0_21], %21 {strides = array<i32>} : memref<290x32xf32, #tpu.memory_space<vmem>>, vector<1x32xf32>,
    %c1 = arith.constant 1 : index
    %c0_22 = arith.constant 0 : index
    %23 = vector.load %arg11[%c1, %c0_22] : memref<290x32xf32, #tpu.memory_space<vmem>>, vector<16x32xf32>
    tpu.vector_store %arg11[%c1, %c0_22], %12 {strides = array<i32>} : memref<290x32xf32, #tpu.memory_space<vmem>>, vector<16x32xf32>,
    %c17 = arith.constant 17 : index
    %c0_23 = arith.constant 0 : index
    %24 = vector.load %arg11[%c17, %c0_23] : memref<290x32xf32, #tpu.memory_space<vmem>>, vector<256x32xf32>
    tpu.vector_store %arg11[%c17, %c0_23], %4 {strides = array<i32>} : memref<290x32xf32, #tpu.memory_space<vmem>>, vector<256x32xf32>,
    %c273 = arith.constant 273 : index
    %c0_24 = arith.constant 0 : index
    %25 = vector.load %arg11[%c273, %c0_24] : memref<290x32xf32, #tpu.memory_space<vmem>>, vector<16x32xf32>
    tpu.vector_store %arg11[%c273, %c0_24], %20 {strides = array<i32>} : memref<290x32xf32, #tpu.memory_space<vmem>>, vector<16x32xf32>,
    %cst_25 = arith.constant 0.000000e+00 : f32
    %26 = vector.broadcast %cst_25 : f32 to vector<1x32xf32>
    %c289 = arith.constant 289 : index
    %c0_26 = arith.constant 0 : index
    %27 = vector.load %arg11[%c289, %c0_26] : memref<290x32xf32, #tpu.memory_space<vmem>>, vector<1x32xf32>
    tpu.vector_store %arg11[%c289, %c0_26], %26 {strides = array<i32>} : memref<290x32xf32, #tpu.memory_space<vmem>>, vector<1x32xf32>,
    %28 = tpu.iota {dimensions = array<i32: 0>} : vector<256x32xi32>
    %c16_i32 = arith.constant 16 : i32
    %c0_i32_27 = arith.constant 0 : i32
    %29 = arith.cmpi eq, %c16_i32, %c0_i32_27 : i32
    %c1_i32 = arith.constant 1 : i32
    %30 = arith.select %29, %c1_i32, %c16_i32 : i32
    %31 = vector.broadcast %30 : i32 to vector<256x32xi32>
    %32 = arith.remsi %28, %31 : vector<256x32xi32>
    %c0_i32_28 = arith.constant 0 : i32
    %33 = vector.broadcast %c0_i32_28 : i32 to vector<256x32xi32>
    %34 = arith.cmpi ne, %32, %33 : vector<256x32xi32>
    %c0_i32_29 = arith.constant 0 : i32
    %35 = vector.broadcast %c0_i32_29 : i32 to vector<256x32xi32>
    %36 = arith.cmpi slt, %32, %35 : vector<256x32xi32>
    %c0_i32_30 = arith.constant 0 : i32
    %37 = arith.cmpi slt, %30, %c0_i32_30 : i32
    %38 = vector.broadcast %37 : i1 to vector<256x32xi1>
    %39 = vector.broadcast %38 : vector<256x32xi1> to vector<256x32xi1>
    %40 = arith.xori %36, %39 : vector<256x32xi1>
    %41 = arith.andi %40, %34 : vector<256x32xi1>
    %42 = vector.broadcast %30 : i32 to vector<256x32xi32>
    %43 = arith.addi %32, %42 : vector<256x32xi32>
    %44 = arith.select %41, %43, %32 : vector<256x32xi1>, vector<256x32xi32>
    %c1_i32_31 = arith.constant 1 : i32
    %45 = vector.broadcast %c1_i32_31 : i32 to vector<256x32xi32>
    %46 = arith.cmpi sge, %44, %45 : vector<256x32xi32>
    %c14_i32 = arith.constant 14 : i32
    %47 = vector.broadcast %c14_i32 : i32 to vector<256x32xi32>
    %48 = arith.cmpi sle, %44, %47 : vector<256x32xi32>
    %cst_32 = arith.constant 0.000000e+00 : f32
    %49 = vector.broadcast %cst_32 : f32 to vector<256x32xf32>
    %c0_33 = arith.constant 0 : index
    %c0_34 = arith.constant 0 : index
    %50 = vector.load %arg11[%c0_33, %c0_34] : memref<290x32xf32, #tpu.memory_space<vmem>>, vector<256x32xf32>
    %cst_35 = arith.constant 0.000000e+00 : f32
    %51 = vector.broadcast %cst_35 : f32 to vector<256x32xf32>
    %52 = arith.select %46, %50, %51 : vector<256x32xi1>, vector<256x32xf32>
    %c0_36 = arith.constant 0 : index
    %c0_37 = arith.constant 0 : index
    %c0_38 = arith.constant 0 : index
    %53 = vector.load %arg8[%c0_36, %c0_37, %c0_38] : memref<9x32x32xf32, #tpu.memory_space<vmem>>, vector<1x32x32xf32>
    %54 = vector.shape_cast %53 : vector<1x32x32xf32> to vector<32x32xf32>
    %cst_39 = arith.constant dense<0.000000e+00> : vector<256x32xf32>
    %55 = tpu.matmul %52, %54, %cst_39 {dimension_numbers = #tpu.dot_dimension_numbers<[1], [0], [0], [1], [0, 0, 1, 1], [], []>} : vector<256x32xf32>, vector<32x32xf32>, vector<256x32xf32> -> vector<256x32xf32>
    %56 = arith.addf %49, %55 : vector<256x32xf32>
    %c1_40 = arith.constant 1 : index
    %c0_41 = arith.constant 0 : index
    %57 = vector.load %arg11[%c1_40, %c0_41] : memref<290x32xf32, #tpu.memory_space<vmem>>, vector<256x32xf32>
    %c1_42 = arith.constant 1 : index
    %c0_43 = arith.constant 0 : index
    %c0_44 = arith.constant 0 : index
    %58 = vector.load %arg8[%c1_42, %c0_43, %c0_44] : memref<9x32x32xf32, #tpu.memory_space<vmem>>, vector<1x32x32xf32>
    %59 = vector.shape_cast %58 : vector<1x32x32xf32> to vector<32x32xf32>
    %cst_45 = arith.constant dense<0.000000e+00> : vector<256x32xf32>
    %60 = tpu.matmul %57, %59, %cst_45 {dimension_numbers = #tpu.dot_dimension_numbers<[1], [0], [0], [1], [0, 0, 1, 1], [], []>} : vector<256x32xf32>, vector<32x32xf32>, vector<256x32xf32> -> vector<256x32xf32>
    %61 = arith.addf %56, %60 : vector<256x32xf32>
    %c2 = arith.constant 2 : index
    %c0_46 = arith.constant 0 : index
    %62 = vector.load %arg11[%c2, %c0_46] : memref<290x32xf32, #tpu.memory_space<vmem>>, vector<256x32xf32>
    %cst_47 = arith.constant 0.000000e+00 : f32
    %63 = vector.broadcast %cst_47 : f32 to vector<256x32xf32>
    %64 = arith.select %48, %62, %63 : vector<256x32xi1>, vector<256x32xf32>
    %c2_48 = arith.constant 2 : index
    %c0_49 = arith.constant 0 : index
    %c0_50 = arith.constant 0 : index
    %65 = vector.load %arg8[%c2_48, %c0_49, %c0_50] : memref<9x32x32xf32, #tpu.memory_space<vmem>>, vector<1x32x32xf32>
    %66 = vector.shape_cast %65 : vector<1x32x32xf32> to vector<32x32xf32>
    %cst_51 = arith.constant dense<0.000000e+00> : vector<256x32xf32>
    %67 = tpu.matmul %64, %66, %cst_51 {dimension_numbers = #tpu.dot_dimension_numbers<[1], [0], [0], [1], [0, 0, 1, 1], [], []>} : vector<256x32xf32>, vector<32x32xf32>, vector<256x32xf32> -> vector<256x32xf32>
    %68 = arith.addf %61, %67 : vector<256x32xf32>
    %c16 = arith.constant 16 : index
    %c0_52 = arith.constant 0 : index
    %69 = vector.load %arg11[%c16, %c0_52] : memref<290x32xf32, #tpu.memory_space<vmem>>, vector<256x32xf32>
    %cst_53 = arith.constant 0.000000e+00 : f32
    %70 = vector.broadcast %cst_53 : f32 to vector<256x32xf32>
    %71 = arith.select %46, %69, %70 : vector<256x32xi1>, vector<256x32xf32>
    %c3 = arith.constant 3 : index
    %c0_54 = arith.constant 0 : index
    %c0_55 = arith.constant 0 : index
    %72 = vector.load %arg8[%c3, %c0_54, %c0_55] : memref<9x32x32xf32, #tpu.memory_space<vmem>>, vector<1x32x32xf32>
    %73 = vector.shape_cast %72 : vector<1x32x32xf32> to vector<32x32xf32>
    %cst_56 = arith.constant dense<0.000000e+00> : vector<256x32xf32>
    %74 = tpu.matmul %71, %73, %cst_56 {dimension_numbers = #tpu.dot_dimension_numbers<[1], [0], [0], [1], [0, 0, 1, 1], [], []>} : vector<256x32xf32>, vector<32x32xf32>, vector<256x32xf32> -> vector<256x32xf32>
    %75 = arith.addf %68, %74 : vector<256x32xf32>
    %c17_57 = arith.constant 17 : index
    %c0_58 = arith.constant 0 : index
    %76 = vector.load %arg11[%c17_57, %c0_58] : memref<290x32xf32, #tpu.memory_space<vmem>>, vector<256x32xf32>
    %c4 = arith.constant 4 : index
    %c0_59 = arith.constant 0 : index
    %c0_60 = arith.constant 0 : index
    %77 = vector.load %arg8[%c4, %c0_59, %c0_60] : memref<9x32x32xf32, #tpu.memory_space<vmem>>, vector<1x32x32xf32>
    %78 = vector.shape_cast %77 : vector<1x32x32xf32> to vector<32x32xf32>
    %cst_61 = arith.constant dense<0.000000e+00> : vector<256x32xf32>
    %79 = tpu.matmul %76, %78, %cst_61 {dimension_numbers = #tpu.dot_dimension_numbers<[1], [0], [0], [1], [0, 0, 1, 1], [], []>} : vector<256x32xf32>, vector<32x32xf32>, vector<256x32xf32> -> vector<256x32xf32>
    %80 = arith.addf %75, %79 : vector<256x32xf32>
    %c18 = arith.constant 18 : index
    %c0_62 = arith.constant 0 : index
    %81 = vector.load %arg11[%c18, %c0_62] : memref<290x32xf32, #tpu.memory_space<vmem>>, vector<256x32xf32>
    %cst_63 = arith.constant 0.000000e+00 : f32
    %82 = vector.broadcast %cst_63 : f32 to vector<256x32xf32>
    %83 = arith.select %48, %81, %82 : vector<256x32xi1>, vector<256x32xf32>
    %c5 = arith.constant 5 : index
    %c0_64 = arith.constant 0 : index
    %c0_65 = arith.constant 0 : index
    %84 = vector.load %arg8[%c5, %c0_64, %c0_65] : memref<9x32x32xf32, #tpu.memory_space<vmem>>, vector<1x32x32xf32>
    %85 = vector.shape_cast %84 : vector<1x32x32xf32> to vector<32x32xf32>
    %cst_66 = arith.constant dense<0.000000e+00> : vector<256x32xf32>
    %86 = tpu.matmul %83, %85, %cst_66 {dimension_numbers = #tpu.dot_dimension_numbers<[1], [0], [0], [1], [0, 0, 1, 1], [], []>} : vector<256x32xf32>, vector<32x32xf32>, vector<256x32xf32> -> vector<256x32xf32>
    %87 = arith.addf %80, %86 : vector<256x32xf32>
    %c32 = arith.constant 32 : index
    %c0_67 = arith.constant 0 : index
    %88 = vector.load %arg11[%c32, %c0_67] : memref<290x32xf32, #tpu.memory_space<vmem>>, vector<256x32xf32>
    %cst_68 = arith.constant 0.000000e+00 : f32
    %89 = vector.broadcast %cst_68 : f32 to vector<256x32xf32>
    %90 = arith.select %46, %88, %89 : vector<256x32xi1>, vector<256x32xf32>
    %c6 = arith.constant 6 : index
    %c0_69 = arith.constant 0 : index
    %c0_70 = arith.constant 0 : index
    %91 = vector.load %arg8[%c6, %c0_69, %c0_70] : memref<9x32x32xf32, #tpu.memory_space<vmem>>, vector<1x32x32xf32>
    %92 = vector.shape_cast %91 : vector<1x32x32xf32> to vector<32x32xf32>
    %cst_71 = arith.constant dense<0.000000e+00> : vector<256x32xf32>
    %93 = tpu.matmul %90, %92, %cst_71 {dimension_numbers = #tpu.dot_dimension_numbers<[1], [0], [0], [1], [0, 0, 1, 1], [], []>} : vector<256x32xf32>, vector<32x32xf32>, vector<256x32xf32> -> vector<256x32xf32>
    %94 = arith.addf %87, %93 : vector<256x32xf32>
    %c33 = arith.constant 33 : index
    %c0_72 = arith.constant 0 : index
    %95 = vector.load %arg11[%c33, %c0_72] : memref<290x32xf32, #tpu.memory_space<vmem>>, vector<256x32xf32>
    %c7 = arith.constant 7 : index
    %c0_73 = arith.constant 0 : index
    %c0_74 = arith.constant 0 : index
    %96 = vector.load %arg8[%c7, %c0_73, %c0_74] : memref<9x32x32xf32, #tpu.memory_space<vmem>>, vector<1x32x32xf32>
    %97 = vector.shape_cast %96 : vector<1x32x32xf32> to vector<32x32xf32>
    %cst_75 = arith.constant dense<0.000000e+00> : vector<256x32xf32>
    %98 = tpu.matmul %95, %97, %cst_75 {dimension_numbers = #tpu.dot_dimension_numbers<[1], [0], [0], [1], [0, 0, 1, 1], [], []>} : vector<256x32xf32>, vector<32x32xf32>, vector<256x32xf32> -> vector<256x32xf32>
    %99 = arith.addf %94, %98 : vector<256x32xf32>
    %c34 = arith.constant 34 : index
    %c0_76 = arith.constant 0 : index
    %100 = vector.load %arg11[%c34, %c0_76] : memref<290x32xf32, #tpu.memory_space<vmem>>, vector<256x32xf32>
    %cst_77 = arith.constant 0.000000e+00 : f32
    %101 = vector.broadcast %cst_77 : f32 to vector<256x32xf32>
    %102 = arith.select %48, %100, %101 : vector<256x32xi1>, vector<256x32xf32>
    %c8 = arith.constant 8 : index
    %c0_78 = arith.constant 0 : index
    %c0_79 = arith.constant 0 : index
    %103 = vector.load %arg8[%c8, %c0_78, %c0_79] : memref<9x32x32xf32, #tpu.memory_space<vmem>>, vector<1x32x32xf32>
    %104 = vector.shape_cast %103 : vector<1x32x32xf32> to vector<32x32xf32>
    %cst_80 = arith.constant dense<0.000000e+00> : vector<256x32xf32>
    %105 = tpu.matmul %102, %104, %cst_80 {dimension_numbers = #tpu.dot_dimension_numbers<[1], [0], [0], [1], [0, 0, 1, 1], [], []>} : vector<256x32xf32>, vector<32x32xf32>, vector<256x32xf32> -> vector<256x32xf32>
    %106 = arith.addf %99, %105 : vector<256x32xf32>
    %107 = arith.addf %1, %106 : vector<256x32xf32>
    %c0_81 = arith.constant 0 : index
    %c0_82 = arith.constant 0 : index
    %108 = vector.load %arg9[%c0_81, %c0_82] : memref<1x32xf32, #tpu.memory_space<vmem>>, vector<1x32xf32>
    %109 = vector.broadcast %108 : vector<1x32xf32> to vector<256x32xf32>
    %110 = arith.addf %107, %109 : vector<256x32xf32>
    %c0_83 = arith.constant 0 : index
    %c0_84 = arith.constant 0 : index
    %c0_85 = arith.constant 0 : index
    %111 = vector.load %arg10[%c0_83, %c0_84, %c0_85] : memref<1x256x32xf32, #tpu.memory_space<vmem>>, vector<1x256x32xf32>
    %112 = vector.shape_cast %111 : vector<1x256x32xf32> to vector<256x32xf32>
    %113 = vector.shape_cast %110 : vector<256x32xf32> to vector<1x256x32xf32>
    tpu.vector_store %arg10[%c0_83, %c0_84, %c0_85], %113 {strides = array<i32>} : memref<1x256x32xf32, #tpu.memory_space<vmem>>, vector<1x256x32xf32>,
    return
  }
  func.func @transform_0(%arg0: i32, %arg1: i32) -> (i32, i32, i32) {
    %c0_i32 = arith.constant 0 : i32
    %c0_i32_0 = arith.constant 0 : i32
    return %arg0, %arg1, %c0_i32 : i32, i32, i32
  }
  func.func @transform_1(%arg0: i32, %arg1: i32) -> (i32, i32, i32) {
    %c0_i32 = arith.constant 0 : i32
    %c0_i32_0 = arith.constant 0 : i32
    return %arg0, %arg1, %c0_i32 : i32, i32, i32
  }
  func.func @transform_2(%arg0: i32, %arg1: i32) -> (i32, i32, i32) {
    %c16_i32 = arith.constant 16 : i32
    %0 = arith.muli %arg1, %c16_i32 : i32
    %c1_i32 = arith.constant 1 : i32
    %1 = arith.subi %0, %c1_i32 : i32
    %c0_i32 = arith.constant 0 : i32
    %2 = arith.maxsi %1, %c0_i32 : i32
    %c0_i32_0 = arith.constant 0 : i32
    %c0_i32_1 = arith.constant 0 : i32
    return %arg0, %2, %c0_i32_0 : i32, i32, i32
  }
  func.func @transform_3(%arg0: i32, %arg1: i32) -> (i32, i32, i32) {
    %c16_i32 = arith.constant 16 : i32
    %0 = arith.muli %arg1, %c16_i32 : i32
    %c1_i32 = arith.constant 1 : i32
    %1 = arith.subi %0, %c1_i32 : i32
    %c0_i32 = arith.constant 0 : i32
    %2 = arith.maxsi %1, %c0_i32 : i32
    %c0_i32_0 = arith.constant 0 : i32
    %c0_i32_1 = arith.constant 0 : i32
    return %arg0, %2, %c0_i32_0 : i32, i32, i32
  }
  func.func @transform_4(%arg0: i32, %arg1: i32) -> (i32, i32, i32) {
    %c1_i32 = arith.constant 1 : i32
    %0 = arith.addi %arg1, %c1_i32 : i32
    %c16_i32 = arith.constant 16 : i32
    %1 = arith.muli %0, %c16_i32 : i32
    %c15_i32 = arith.constant 15 : i32
    %2 = arith.minsi %1, %c15_i32 : i32
    %c0_i32 = arith.constant 0 : i32
    %c0_i32_0 = arith.constant 0 : i32
    return %arg0, %2, %c0_i32 : i32, i32, i32
  }
  func.func @transform_5(%arg0: i32, %arg1: i32) -> (i32, i32, i32) {
    %c1_i32 = arith.constant 1 : i32
    %0 = arith.addi %arg1, %c1_i32 : i32
    %c16_i32 = arith.constant 16 : i32
    %1 = arith.muli %0, %c16_i32 : i32
    %c15_i32 = arith.constant 15 : i32
    %2 = arith.minsi %1, %c15_i32 : i32
    %c0_i32 = arith.constant 0 : i32
    %c0_i32_0 = arith.constant 0 : i32
    return %arg0, %2, %c0_i32 : i32, i32, i32
  }
  func.func @transform_6(%arg0: i32, %arg1: i32) -> (i32, i32, i32) {
    %c0_i32 = arith.constant 0 : i32
    %c0_i32_0 = arith.constant 0 : i32
    %c0_i32_1 = arith.constant 0 : i32
    %c0_i32_2 = arith.constant 0 : i32
    return %c0_i32, %c0_i32_0, %c0_i32_1 : i32, i32, i32
  }
  func.func @transform_7(%arg0: i32, %arg1: i32) -> (i32, i32) {
    %c0_i32 = arith.constant 0 : i32
    %c0_i32_0 = arith.constant 0 : i32
    %c0_i32_1 = arith.constant 0 : i32
    return %c0_i32, %c0_i32_0 : i32, i32
  }
  func.func @transform_8(%arg0: i32, %arg1: i32) -> (i32, i32, i32) {
    %c0_i32 = arith.constant 0 : i32
    %c0_i32_0 = arith.constant 0 : i32
    return %arg0, %arg1, %c0_i32 : i32, i32, i32
  }
}

</mosaic_0001>

<llo_original>
// kernel: tpu_custom_call.1
$region0: #{tpu_custom_call.1}
  #allocation0 [shape = 'u32[]', space=smem, size = 0x4, offset = 0x4, fixed_abs, tag = 'smem constant byte address 0x4 - core index']
  #allocation1 [shape = 'u32[144,128]{1,0:T(1,128)}', space=vmem, size = 0x12000, scoped, tag = 'internal scratch']
  #allocation2 [shape = 'f32[290,32]{1,0:T(8,128)}', space=vmem, size = 0x25000, scoped, tag = 'scratch operand']
  %s0 = inlined_call_operand.vmem [shape: f32[2,256,32], index: 0, kind: input, shape index: {}]
  %s1 = inlined_call_operand.vmem [shape: f32[2,256,32], index: 1, kind: input, shape index: {}]
  %s2 = inlined_call_operand.vmem [shape: f32[2,256,32], index: 2, kind: input, shape index: {}]
  %s3 = inlined_call_operand.vmem [shape: f32[2,256,32], index: 3, kind: input, shape index: {}]
  %s4 = inlined_call_operand.vmem [shape: f32[2,256,32], index: 4, kind: input, shape index: {}]
  %s5 = inlined_call_operand.vmem [shape: f32[2,256,32], index: 5, kind: input, shape index: {}]
  %s6 = inlined_call_operand.vmem [shape: f32[9,32,32], index: 6, kind: input, shape index: {}]
  %s7 = inlined_call_operand.vmem [shape: f32[1,32], index: 7, kind: input, shape index: {}]
  %s8 = inlined_call_operand.vmem [shape: f32[2,256,32], index: 8, kind: output, shape index: {}]
  %s9 = sld [smem:[#allocation0]]
  $region65: #{tpu_custom_call.1} parent=0
    _
  %s11 = ssub.s32 1, %s9
  %s12 = scalar_select 0, %s11, %s9
  loop: start=0, step=1, limit=4
  $region2: #{tpu_custom_call.1} parent=0 // loop_pre_header
    _
  $region3: #{tpu_custom_call.1} parent=0 // loop_header
    %s14 = sphi 0, %s18
    %p15 = scmp.ge.s32.totalorder %s14, 4
    %s21 = sphi 0, %s33
    %s22 = sphi 0, %s29
    %s23 = sphi 0, %s21
    %s24 = sphi 0, %s22
    %s25 = sphi 0, %s23
    %s26 = sphi 0, %s24
    %s38 = sphi 0, %s40
    %s41 = sphi 0, %s38
    %s42 = sphi 0, %s41
    %s58 = sphi 0, %s42
    %s66 = sphi 0, %s68
    %s69 = sphi 0, %s66
    %s70 = sphi 0, %s69
    %s86 = sphi 0, %s70
    %s102 = sphi 0, %s104
    %s105 = sphi 0, %s102
    %s106 = sphi 0, %s105
    %s122 = sphi 0, %s106
    %s138 = sphi 0, %s140
    %s141 = sphi 0, %s138
    %s142 = sphi 0, %s141
    %s158 = sphi 0, %s142
    %s174 = sphi 0, %s176
    %s177 = sphi 0, %s174
    %s178 = sphi 0, %s177
    %s194 = sphi 0, %s178
    %s210 = sphi 0, %s212
    %s213 = sphi 0, %s210
    %s214 = sphi 0, %s213
    %s230 = sphi 0, %s214
    %s234 = sphi 0, %s234
    %s236 = sphi 0, %s234
    %s237 = sphi 0, %s236
    %s251 = sphi 0, %s237
    %s255 = sphi 0, %s255
    %s257 = sphi 0, %s255
    %s258 = sphi 0, %s257
    %s272 = sphi 0, %s258
    %s280 = sphi 0, %s282
    %s283 = sphi 0, %s280
    %s284 = sphi 0, %s283
    %s300 = sphi 0, %s284
  $region4: #{tpu_custom_call.1} parent=0 // loop_header_branch
    %17 = sbr.rel (%p15) target = $region8
  $region5: #{tpu_custom_call.1} parent=0 // loop_body
    %s19 = ssub.s32 %s14, 1
    %s20 = ssub.s32 %s14, 2
    %s27 = sadd.s32 1, %s22
    %p28 = scmp.ge.s32.totalorder %s27, 1
    %s29 = scalar_select %p28, 0, %s27
    %s30 = sadd.s32 1, %s21
    %s31 = scalar_select %p28, %s30, %s21
    %p32 = scmp.ge.s32.totalorder %s31, 2
    %s33 = scalar_select %p32, 0, %s31
    %s34 = ssub.s32 %s21, %s33
    %s35 = ssub.s32 %s22, %s29
    %s36 = sor.u32 %s34, %s35
    %p37 = scmp.eq.s32.totalorder %s36, 0
    %s39 = sadd.s32 %s38, 1
    %s40 = scalar_select %p37, %s38, %s39
    %p43 = pneg %p37
    %p44 = scmp.eq.s32.totalorder %s14, 1
    %p45 = por %p43, %p44
    %p46 = scmp.ne.s32.totalorder %s38, %s41
    %p47 = scmp.eq.s32.totalorder %s14, 0
    %p48 = por %p46, %p47
    %p49 = scmp.ne.s32.totalorder %s38, %s41
    %p50 = scmp.eq.s32.totalorder %s19, 1
    %p51 = por %p49, %p50
    %p52 = scmp.ne.s32.totalorder %s41, %s42
    %p53 = scmp.eq.s32.totalorder %s19, 0
    %p54 = por %p52, %p53
    %p55 = scmp.ne.s32.totalorder %s41, %s42
    %p56 = scmp.eq.s32.totalorder %s20, 1
    %p57 = por %p55, %p56
    %p59 = scmp.ne.s32.totalorder %s42, %s58
    %p60 = scmp.eq.s32.totalorder %s20, 0
    %p61 = por %p59, %p60
    %s62 = ssub.s32 %s21, %s33
    %s63 = ssub.s32 %s22, %s29
    %s64 = sor.u32 %s62, %s63
    %p65 = scmp.eq.s32.totalorder %s64, 0
    %s67 = sadd.s32 %s66, 1
    %s68 = scalar_select %p65, %s66, %s67
    %p71 = pneg %p65
    %p72 = scmp.eq.s32.totalorder %s14, 1
    %p73 = por %p71, %p72
    %p74 = scmp.ne.s32.totalorder %s66, %s69
    %p75 = scmp.eq.s32.totalorder %s14, 0
    %p76 = por %p74, %p75
    %p77 = scmp.ne.s32.totalorder %s66, %s69
    %p78 = scmp.eq.s32.totalorder %s19, 1
    %p79 = por %p77, %p78
    %p80 = scmp.ne.s32.totalorder %s69, %s70
    %p81 = scmp.eq.s32.totalorder %s19, 0
    %p82 = por %p80, %p81
    %p83 = scmp.ne.s32.totalorder %s69, %s70
    %p84 = scmp.eq.s32.totalorder %s20, 1
    %p85 = por %p83, %p84
    %p87 = scmp.ne.s32.totalorder %s70, %s86
    %p88 = scmp.eq.s32.totalorder %s20, 0
    %p89 = por %p87, %p88
    %s90 = smul.u32 %s22, 16
    %s91 = ssub.s32 %s90, 1
    %p92 = scmp.gt.s32.totalorder %s91, 0
    %s93 = scalar_select %p92, %s91, 0
    %s94 = smul.u32 %s29, 16
    %s95 = ssub.s32 %s94, 1
    %p96 = scmp.gt.s32.totalorder %s95, 0
    %s97 = scalar_select %p96, %s95, 0
    %s98 = ssub.s32 %s21, %s33
    %s99 = ssub.s32 %s93, %s97
    %s100 = sor.u32 %s98, %s99
    %p101 = scmp.eq.s32.totalorder %s100, 0
    %s103 = sadd.s32 %s102, 1
    %s104 = scalar_select %p101, %s102, %s103
    %p107 = pneg %p101
    %p108 = scmp.eq.s32.totalorder %s14, 1
    %p109 = por %p107, %p108
    %p110 = scmp.ne.s32.totalorder %s102, %s105
    %p111 = scmp.eq.s32.totalorder %s14, 0
    %p112 = por %p110, %p111
    %p113 = scmp.ne.s32.totalorder %s102, %s105
    %p114 = scmp.eq.s32.totalorder %s19, 1
    %p115 = por %p113, %p114
    %p116 = scmp.ne.s32.totalorder %s105, %s106
    %p117 = scmp.eq.s32.totalorder %s19, 0
    %p118 = por %p116, %p117
    %p119 = scmp.ne.s32.totalorder %s105, %s106
    %p120 = scmp.eq.s32.totalorder %s20, 1
    %p121 = por %p119, %p120
    %p123 = scmp.ne.s32.totalorder %s106, %s122
    %p124 = scmp.eq.s32.totalorder %s20, 0
    %p125 = por %p123, %p124
    %s126 = smul.u32 %s22, 16
    %s127 = ssub.s32 %s126, 1
    %p128 = scmp.gt.s32.totalorder %s127, 0
    %s129 = scalar_select %p128, %s127, 0
    %s130 = smul.u32 %s29, 16
    %s131 = ssub.s32 %s130, 1
    %p132 = scmp.gt.s32.totalorder %s131, 0
    %s133 = scalar_select %p132, %s131, 0
    %s134 = ssub.s32 %s21, %s33
    %s135 = ssub.s32 %s129, %s133
    %s136 = sor.u32 %s134, %s135
    %p137 = scmp.eq.s32.totalorder %s136, 0
    %s139 = sadd.s32 %s138, 1
    %s140 = scalar_select %p137, %s138, %s139
    %p143 = pneg %p137
    %p144 = scmp.eq.s32.totalorder %s14, 1
    %p145 = por %p143, %p144
    %p146 = scmp.ne.s32.totalorder %s138, %s141
    %p147 = scmp.eq.s32.totalorder %s14, 0
    %p148 = por %p146, %p147
    %p149 = scmp.ne.s32.totalorder %s138, %s141
    %p150 = scmp.eq.s32.totalorder %s19, 1
    %p151 = por %p149, %p150
    %p152 = scmp.ne.s32.totalorder %s141, %s142
    %p153 = scmp.eq.s32.totalorder %s19, 0
    %p154 = por %p152, %p153
    %p155 = scmp.ne.s32.totalorder %s141, %s142
    %p156 = scmp.eq.s32.totalorder %s20, 1
    %p157 = por %p155, %p156
    %p159 = scmp.ne.s32.totalorder %s142, %s158
    %p160 = scmp.eq.s32.totalorder %s20, 0
    %p161 = por %p159, %p160
    %s162 = sadd.s32 %s22, 1
    %s163 = smul.u32 %s162, 16
    %p164 = scmp.lt.s32.totalorder %s163, 15
    %s165 = scalar_select %p164, %s163, 15
    %s166 = sadd.s32 %s29, 1
    %s167 = smul.u32 %s166, 16
    %p168 = scmp.lt.s32.totalorder %s167, 15
    %s169 = scalar_select %p168, %s167, 15
    %s170 = ssub.s32 %s21, %s33
    %s171 = ssub.s32 %s165, %s169
    %s172 = sor.u32 %s170, %s171
    %p173 = scmp.eq.s32.totalorder %s172, 0
    %s175 = sadd.s32 %s174, 1
    %s176 = scalar_select %p173, %s174, %s175
    %p179 = pneg %p173
    %p180 = scmp.eq.s32.totalorder %s14, 1
    %p181 = por %p179, %p180
    %p182 = scmp.ne.s32.totalorder %s174, %s177
    %p183 = scmp.eq.s32.totalorder %s14, 0
    %p184 = por %p182, %p183
    %p185 = scmp.ne.s32.totalorder %s174, %s177
    %p186 = scmp.eq.s32.totalorder %s19, 1
    %p187 = por %p185, %p186
    %p188 = scmp.ne.s32.totalorder %s177, %s178
    %p189 = scmp.eq.s32.totalorder %s19, 0
    %p190 = por %p188, %p189
    %p191 = scmp.ne.s32.totalorder %s177, %s178
    %p192 = scmp.eq.s32.totalorder %s20, 1
    %p193 = por %p191, %p192
    %p195 = scmp.ne.s32.totalorder %s178, %s194
    %p196 = scmp.eq.s32.totalorder %s20, 0
    %p197 = por %p195, %p196
    %s198 = sadd.s32 %s22, 1
    %s199 = smul.u32 %s198, 16
    %p200 = scmp.lt.s32.totalorder %s199, 15
    %s201 = scalar_select %p200, %s199, 15
    %s202 = sadd.s32 %s29, 1
    %s203 = smul.u32 %s202, 16
    %p204 = scmp.lt.s32.totalorder %s203, 15
    %s205 = scalar_select %p204, %s203, 15
    %s206 = ssub.s32 %s21, %s33
    %s207 = ssub.s32 %s201, %s205
    %s208 = sor.u32 %s206, %s207
    %p209 = scmp.eq.s32.totalorder %s208, 0
    %s211 = sadd.s32 %s210, 1
    %s212 = scalar_select %p209, %s210, %s211
    %p215 = pneg %p209
    %p216 = scmp.eq.s32.totalorder %s14, 1
    %p217 = por %p215, %p216
    %p218 = scmp.ne.s32.totalorder %s210, %s213
    %p219 = scmp.eq.s32.totalorder %s14, 0
    %p220 = por %p218, %p219
    %p221 = scmp.ne.s32.totalorder %s210, %s213
    %p222 = scmp.eq.s32.totalorder %s19, 1
    %p223 = por %p221, %p222
    %p224 = scmp.ne.s32.totalorder %s213, %s214
    %p225 = scmp.eq.s32.totalorder %s19, 0
    %p226 = por %p224, %p225
    %p227 = scmp.ne.s32.totalorder %s213, %s214
    %p228 = scmp.eq.s32.totalorder %s20, 1
    %p229 = por %p227, %p228
    %p231 = scmp.ne.s32.totalorder %s214, %s230
    %p232 = scmp.eq.s32.totalorder %s20, 0
    %p233 = por %p231, %p232
    %s235 = sadd.s32 %s234, 1
    %p238 = scmp.eq.s32.totalorder %s14, 1
    %p239 = scmp.ne.s32.totalorder %s234, %s236
    %p240 = scmp.eq.s32.totalorder %s14, 0
    %p241 = por %p239, %p240
    %p242 = scmp.ne.s32.totalorder %s234, %s236
    %p243 = scmp.eq.s32.totalorder %s19, 1
    %p244 = por %p242, %p243
    %p245 = scmp.ne.s32.totalorder %s236, %s237
    %p246 = scmp.eq.s32.totalorder %s19, 0
    %p247 = por %p245, %p246
    %p248 = scmp.ne.s32.totalorder %s236, %s237
    %p249 = scmp.eq.s32.totalorder %s20, 1
    %p250 = por %p248, %p249
    %p252 = scmp.ne.s32.totalorder %s237, %s251
    %p253 = scmp.eq.s32.totalorder %s20, 0
    %p254 = por %p252, %p253
    %s256 = sadd.s32 %s255, 1
    %p259 = scmp.eq.s32.totalorder %s14, 1
    %p260 = scmp.ne.s32.totalorder %s255, %s257
    %p261 = scmp.eq.s32.totalorder %s14, 0
    %p262 = por %p260, %p261
    %p263 = scmp.ne.s32.totalorder %s255, %s257
    %p264 = scmp.eq.s32.totalorder %s19, 1
    %p265 = por %p263, %p264
    %p266 = scmp.ne.s32.totalorder %s257, %s258
    %p267 = scmp.eq.s32.totalorder %s19, 0
    %p268 = por %p266, %p267
    %p269 = scmp.ne.s32.totalorder %s257, %s258
    %p270 = scmp.eq.s32.totalorder %s20, 1
    %p271 = por %p269, %p270
    %p273 = scmp.ne.s32.totalorder %s258, %s272
    %p274 = scmp.eq.s32.totalorder %s20, 0
    %p275 = por %p273, %p274
    %s276 = ssub.s32 %s21, %s33
    %s277 = ssub.s32 %s22, %s29
    %s278 = sor.u32 %s276, %s277
    %p279 = scmp.eq.s32.totalorder %s278, 0
    %s281 = sadd.s32 %s280, 1
    %s282 = scalar_select %p279, %s280, %s281
    %p285 = pneg %p279
    %p286 = scmp.eq.s32.totalorder %s14, 1
    %p287 = por %p285, %p286
    %p288 = scmp.ne.s32.totalorder %s280, %s283
    %p289 = scmp.eq.s32.totalorder %s14, 0
    %p290 = por %p288, %p289
    %p291 = scmp.ne.s32.totalorder %s280, %s283
    %p292 = scmp.eq.s32.totalorder %s19, 1
    %p293 = por %p291, %p292
    %p294 = scmp.ne.s32.totalorder %s283, %s284
    %p295 = scmp.eq.s32.totalorder %s19, 0
    %p296 = por %p294, %p295
    %p297 = scmp.ne.s32.totalorder %s283, %s284
    %p298 = scmp.eq.s32.totalorder %s20, 1
    %p299 = por %p297, %p298
    %p301 = scmp.ne.s32.totalorder %s284, %s300
    %p302 = scmp.eq.s32.totalorder %s20, 0
    %p303 = por %p301, %p302
    %p304 = scmp.le.s32.totalorder 1, %s14
    %p305 = scmp.lt.s32.totalorder %s14, 3
    %p306 = pnand %p304, %p305
    %p307 = pneg %p306
    // Predicated region
    $region9: #{tpu_custom_call.1} parent=5 // pred_check
      _
    $region10: #{tpu_custom_call.1} parent=5 // pred_check_branch
      %309 = sbr.rel (%p306) target = $region12
    $region11: #{tpu_custom_call.1} parent=5 // pred_region
      %s310 = ssub.s32 %s14, 1
      // Predicated region
      $region13: #{tpu_custom_call.1} parent=11 // pred_check
        %p311 = pneg %p247
      $region14: #{tpu_custom_call.1} parent=11 // pred_check_branch
        %313 = sbr.rel (%p311) target = $region16
      $region15: #{tpu_custom_call.1} parent=11 // pred_region
        _
      $region16: #{tpu_custom_call.1} parent=11 // pred_fallthru
        _
      // Predicated region
      $region17: #{tpu_custom_call.1} parent=11 // pred_check
        %p314 = pneg %p268
      $region18: #{tpu_custom_call.1} parent=11 // pred_check_branch
        %316 = sbr.rel (%p314) target = $region20
      $region19: #{tpu_custom_call.1} parent=11 // pred_region
        _
      $region20: #{tpu_custom_call.1} parent=11 // pred_fallthru
        _
    $region12: #{tpu_custom_call.1} parent=5 // pred_fallthru
      _
    %p317 = scmp.lt.s32.totalorder %s14, 2
    // Predicated region
    $region21: #{tpu_custom_call.1} parent=5 // pred_check
      %p318 = pneg %p317
    $region22: #{tpu_custom_call.1} parent=5 // pred_check_branch
      %320 = sbr.rel (%p318) target = $region24
    $region23: #{tpu_custom_call.1} parent=5 // pred_region
      // Predicated region
      $region25: #{tpu_custom_call.1} parent=23 // pred_check
        %p321 = pneg %p48
      $region26: #{tpu_custom_call.1} parent=23 // pred_check_branch
        %323 = sbr.rel (%p321) target = $region28
      $region27: #{tpu_custom_call.1} parent=23 // pred_region
        %s324 = smul.u32 32, %s22
        %p325 = scmp.lt.s32.totalorder %s21, 1
        %s326 = scalar_select %p325, %s21, 1
        %p327 = scmp.lt.s32.totalorder %s324, 31
        %s328 = scalar_select %p327, %s324, 31
        %s329 = smul.addr %s326, 32
        %s330 = sadd.s32 %s328, %s329
        %s331 = smul.addr %s330, 8
        %s332 = scalar_lea.vmem %s0, %s331
        %s333 = smul.u32 32, %s22
      $region28: #{tpu_custom_call.1} parent=23 // pred_fallthru
        _
      // Predicated region
      $region29: #{tpu_custom_call.1} parent=23 // pred_check
        %p334 = pneg %p76
      $region30: #{tpu_custom_call.1} parent=23 // pred_check_branch
        %336 = sbr.rel (%p334) target = $region32
      $region31: #{tpu_custom_call.1} parent=23 // pred_region
        %s337 = smul.u32 32, %s22
        %p338 = scmp.lt.s32.totalorder %s21, 1
        %s339 = scalar_select %p338, %s21, 1
        %p340 = scmp.lt.s32.totalorder %s337, 31
        %s341 = scalar_select %p340, %s337, 31
        %s342 = smul.addr %s339, 32
        %s343 = sadd.s32 %s341, %s342
        %s344 = smul.addr %s343, 8
        %s345 = scalar_lea.vmem %s1, %s344
        %s346 = smul.u32 32, %s22
      $region32: #{tpu_custom_call.1} parent=23 // pred_fallthru
        _
      // Predicated region
      $region33: #{tpu_custom_call.1} parent=23 // pred_check
        %p347 = pneg %p112
      $region34: #{tpu_custom_call.1} parent=23 // pred_check_branch
        %349 = sbr.rel (%p347) target = $region36
      $region35: #{tpu_custom_call.1} parent=23 // pred_region
        %s350 = smul.u32 %s22, 16
        %s351 = ssub.s32 %s350, 1
        %p352 = scmp.gt.s32.totalorder %s351, 0
        %s353 = scalar_select %p352, %s351, 0
        %s354 = smul.u32 2, %s353
        %p355 = scmp.lt.s32.totalorder %s21, 1
        %s356 = scalar_select %p355, %s21, 1
        %p357 = scmp.lt.s32.totalorder %s354, 31
        %s358 = scalar_select %p357, %s354, 31
        %s359 = smul.addr %s356, 32
        %s360 = sadd.s32 %s358, %s359
        %s361 = smul.addr %s360, 8
        %s362 = scalar_lea.vmem %s2, %s361
        %s363 = smul.u32 %s22, 16
        %s364 = ssub.s32 %s363, 1
        %p365 = scmp.gt.s32.totalorder %s364, 0
        %s366 = scalar_select %p365, %s364, 0
        %s367 = smul.u32 2, %s366
      $region36: #{tpu_custom_call.1} parent=23 // pred_fallthru
        _
      // Predicated region
      $region37: #{tpu_custom_call.1} parent=23 // pred_check
        %p368 = pneg %p148
      $region38: #{tpu_custom_call.1} parent=23 // pred_check_branch
        %370 = sbr.rel (%p368) target = $region40
      $region39: #{tpu_custom_call.1} parent=23 // pred_region
        %s371 = smul.u32 %s22, 16
        %s372 = ssub.s32 %s371, 1
        %p373 = scmp.gt.s32.totalorder %s372, 0
        %s374 = scalar_select %p373, %s372, 0
        %s375 = smul.u32 2, %s374
        %p376 = scmp.lt.s32.totalorder %s21, 1
        %s377 = scalar_select %p376, %s21, 1
        %p378 = scmp.lt.s32.totalorder %s375, 31
        %s379 = scalar_select %p378, %s375, 31
        %s380 = smul.addr %s377, 32
        %s381 = sadd.s32 %s379, %s380
        %s382 = smul.addr %s381, 8
        %s383 = scalar_lea.vmem %s3, %s382
        %s384 = smul.u32 %s22, 16
        %s385 = ssub.s32 %s384, 1
        %p386 = scmp.gt.s32.totalorder %s385, 0
        %s387 = scalar_select %p386, %s385, 0
        %s388 = smul.u32 2, %s387
      $region40: #{tpu_custom_call.1} parent=23 // pred_fallthru
        _
      // Predicated region
      $region41: #{tpu_custom_call.1} parent=23 // pred_check
        %p389 = pneg %p184
      $region42: #{tpu_custom_call.1} parent=23 // pred_check_branch
        %391 = sbr.rel (%p389) target = $region44
      $region43: #{tpu_custom_call.1} parent=23 // pred_region
        %s392 = sadd.s32 %s22, 1
        %s393 = smul.u32 %s392, 16
        %p394 = scmp.lt.s32.totalorder %s393, 15
        %s395 = scalar_select %p394, %s393, 15
        %s396 = smul.u32 2, %s395
        %p397 = scmp.lt.s32.totalorder %s21, 1
        %s398 = scalar_select %p397, %s21, 1
        %p399 = scmp.lt.s32.totalorder %s396, 31
        %s400 = scalar_select %p399, %s396, 31
        %s401 = smul.addr %s398, 32
        %s402 = sadd.s32 %s400, %s401
        %s403 = smul.addr %s402, 8
        %s404 = scalar_lea.vmem %s4, %s403
        %s405 = sadd.s32 %s22, 1
        %s406 = smul.u32 %s405, 16
        %p407 = scmp.lt.s32.totalorder %s406, 15
        %s408 = scalar_select %p407, %s406, 15
        %s409 = smul.u32 2, %s408
      $region44: #{tpu_custom_call.1} parent=23 // pred_fallthru
        _
      // Predicated region
      $region45: #{tpu_custom_call.1} parent=23 // pred_check
        %p410 = pneg %p220
      $region46: #{tpu_custom_call.1} parent=23 // pred_check_branch
        %412 = sbr.rel (%p410) target = $region48
      $region47: #{tpu_custom_call.1} parent=23 // pred_region
        %s413 = sadd.s32 %s22, 1
        %s414 = smul.u32 %s413, 16
        %p415 = scmp.lt.s32.totalorder %s414, 15
        %s416 = scalar_select %p415, %s414, 15
        %s417 = smul.u32 2, %s416
        %p418 = scmp.lt.s32.totalorder %s21, 1
        %s419 = scalar_select %p418, %s21, 1
        %p420 = scmp.lt.s32.totalorder %s417, 31
        %s421 = scalar_select %p420, %s417, 31
        %s422 = smul.addr %s419, 32
        %s423 = sadd.s32 %s421, %s422
        %s424 = smul.addr %s423, 8
        %s425 = scalar_lea.vmem %s5, %s424
        %s426 = sadd.s32 %s22, 1
        %s427 = smul.u32 %s426, 16
        %p428 = scmp.lt.s32.totalorder %s427, 15
        %s429 = scalar_select %p428, %s427, 15
        %s430 = smul.u32 2, %s429
      $region48: #{tpu_custom_call.1} parent=23 // pred_fallthru
        _
    $region24: #{tpu_custom_call.1} parent=5 // pred_fallthru
      _
    %p431 = scmp.le.s32.totalorder 1, %s14
    %p432 = scmp.lt.s32.totalorder %s14, 3
    %p433 = pnand %p431, %p432
    %p434 = pneg %p433
    // Predicated region
    $region49: #{tpu_custom_call.1} parent=5 // pred_check
      _
    $region50: #{tpu_custom_call.1} parent=5 // pred_check_branch
      %436 = sbr.rel (%p433) target = $region52
    $region51: #{tpu_custom_call.1} parent=5 // pred_region
      %s437 = ssub.s32 %s14, 1
      %s438 = smul.u32 32, %s24
      %p439 = scmp.lt.s32.totalorder %s23, 1
      %s440 = scalar_select %p439, %s23, 1
      %p441 = scmp.lt.s32.totalorder %s438, 31
      %s442 = scalar_select %p441, %s438, 31
      %s443 = smul.addr %s440, 32
      %s444 = sadd.s32 %s442, %s443
      %s445 = smul.addr %s444, 8
      %s446 = scalar_lea.vmem %s0, %s445
      %p447 = pneg %p54
      %p448 = pneg %p51
      %s449 = smul.u32 32, %s24
      %p450 = scmp.lt.s32.totalorder %s23, 1
      %s451 = scalar_select %p450, %s23, 1
      %p452 = scmp.lt.s32.totalorder %s449, 31
      %s453 = scalar_select %p452, %s449, 31
      %s454 = smul.addr %s451, 32
      %s455 = sadd.s32 %s453, %s454
      %s456 = smul.addr %s455, 8
      %s457 = scalar_lea.vmem %s1, %s456
      %p458 = pneg %p82
      %p459 = pneg %p79
      %s460 = smul.u32 %s24, 16
      %s461 = ssub.s32 %s460, 1
      %p462 = scmp.gt.s32.totalorder %s461, 0
      %s463 = scalar_select %p462, %s461, 0
      %s464 = smul.u32 2, %s463
      %p465 = scmp.lt.s32.totalorder %s23, 1
      %s466 = scalar_select %p465, %s23, 1
      %p467 = scmp.lt.s32.totalorder %s464, 31
      %s468 = scalar_select %p467, %s464, 31
      %s469 = smul.addr %s466, 32
      %s470 = sadd.s32 %s468, %s469
      %s471 = smul.addr %s470, 8
      %s472 = scalar_lea.vmem %s2, %s471
      %p473 = pneg %p118
      %p474 = pneg %p115
      %s475 = smul.u32 %s24, 16
      %s476 = ssub.s32 %s475, 1
      %p477 = scmp.gt.s32.totalorder %s476, 0
      %s478 = scalar_select %p477, %s476, 0
      %s479 = smul.u32 2, %s478
      %p480 = scmp.lt.s32.totalorder %s23, 1
      %s481 = scalar_select %p480, %s23, 1
      %p482 = scmp.lt.s32.totalorder %s479, 31
      %s483 = scalar_select %p482, %s479, 31
      %s484 = smul.addr %s481, 32
      %s485 = sadd.s32 %s483, %s484
      %s486 = smul.addr %s485, 8
      %s487 = scalar_lea.vmem %s3, %s486
      %p488 = pneg %p154
      %p489 = pneg %p151
      %s490 = sadd.s32 %s24, 1
      %s491 = smul.u32 %s490, 16
      %p492 = scmp.lt.s32.totalorder %s491, 15
      %s493 = scalar_select %p492, %s491, 15
      %s494 = smul.u32 2, %s493
      %p495 = scmp.lt.s32.totalorder %s23, 1
      %s496 = scalar_select %p495, %s23, 1
      %p497 = scmp.lt.s32.totalorder %s494, 31
      %s498 = scalar_select %p497, %s494, 31
      %s499 = smul.addr %s496, 32
      %s500 = sadd.s32 %s498, %s499
      %s501 = smul.addr %s500, 8
      %s502 = scalar_lea.vmem %s4, %s501
      %p503 = pneg %p190
      %p504 = pneg %p187
      %s505 = sadd.s32 %s24, 1
      %s506 = smul.u32 %s505, 16
      %p507 = scmp.lt.s32.totalorder %s506, 15
      %s508 = scalar_select %p507, %s506, 15
      %s509 = smul.u32 2, %s508
      %p510 = scmp.lt.s32.totalorder %s23, 1
      %s511 = scalar_select %p510, %s23, 1
      %p512 = scmp.lt.s32.totalorder %s509, 31
      %s513 = scalar_select %p512, %s509, 31
      %s514 = smul.addr %s511, 32
      %s515 = sadd.s32 %s513, %s514
      %s516 = smul.addr %s515, 8
      %s517 = scalar_lea.vmem %s5, %s516
      %p518 = pneg %p226
      %p519 = pneg %p223
      %p520 = pneg %p247
      %p521 = pneg %p244
      %p522 = pneg %p268
      %p523 = pneg %p265
      %p524 = pneg %p296
      %p525 = pneg %p293
      %s526 = smul.u32 32, %s24
      %p527 = scmp.lt.s32.totalorder %s23, 1
      %s528 = scalar_select %p527, %s23, 1
      %p529 = scmp.lt.s32.totalorder %s526, 31
      %s530 = scalar_select %p529, %s526, 31
      %s531 = smul.addr %s528, 32
      %s532 = sadd.s32 %s530, %s531
      %s533 = smul.addr %s532, 8
      %s534 = scalar_lea.vmem %s8, %s533
      %s535 = smul.u32 32, %s24
      %p536 = scmp.lt.s32.totalorder %s23, 1
      %s537 = scalar_select %p536, %s23, 1
      %p538 = scmp.lt.s32.totalorder %s535, 31
      %s539 = scalar_select %p538, %s535, 31
      %s540 = smul.addr %s537, 32
      %s541 = sadd.s32 %s539, %s540
      %s542 = smul.addr %s541, 8
      %s543 = scalar_lea.vmem %s0, %s542
      %s544 = smul.u32 32, %s24
      %s545 = smul.u32 32, %s24
      %p546 = scmp.lt.s32.totalorder %s23, 1
      %s547 = scalar_select %p546, %s23, 1
      %p548 = scmp.lt.s32.totalorder %s545, 31
      %s549 = scalar_select %p548, %s545, 31
      %s550 = smul.addr %s547, 32
      %s551 = sadd.s32 %s549, %s550
      %s552 = smul.addr %s551, 8
      %s553 = scalar_lea.vmem %s1, %s552
      %s554 = smul.u32 32, %s24
      %s555 = smul.u32 %s24, 16
      %s556 = ssub.s32 %s555, 1
      %p557 = scmp.gt.s32.totalorder %s556, 0
      %s558 = scalar_select %p557, %s556, 0
      %s559 = smul.u32 2, %s558
      %p560 = scmp.lt.s32.totalorder %s23, 1
      %s561 = scalar_select %p560, %s23, 1
      %p562 = scmp.lt.s32.totalorder %s559, 31
      %s563 = scalar_select %p562, %s559, 31
      %s564 = smul.addr %s561, 32
      %s565 = sadd.s32 %s563, %s564
      %s566 = smul.addr %s565, 8
      %s567 = scalar_lea.vmem %s2, %s566
      %s568 = smul.u32 %s24, 16
      %s569 = ssub.s32 %s568, 1
      %p570 = scmp.gt.s32.totalorder %s569, 0
      %s571 = scalar_select %p570, %s569, 0
      %s572 = smul.u32 2, %s571
      %s573 = smul.u32 %s24, 16
      %s574 = ssub.s32 %s573, 1
      %p575 = scmp.gt.s32.totalorder %s574, 0
      %s576 = scalar_select %p575, %s574, 0
      %s577 = smul.u32 2, %s576
      %p578 = scmp.lt.s32.totalorder %s23, 1
      %s579 = scalar_select %p578, %s23, 1
      %p580 = scmp.lt.s32.totalorder %s577, 31
      %s581 = scalar_select %p580, %s577, 31
      %s582 = smul.addr %s579, 32
      %s583 = sadd.s32 %s581, %s582
      %s584 = smul.addr %s583, 8
      %s585 = scalar_lea.vmem %s3, %s584
      %s586 = smul.u32 %s24, 16
      %s587 = ssub.s32 %s586, 1
      %p588 = scmp.gt.s32.totalorder %s587, 0
      %s589 = scalar_select %p588, %s587, 0
      %s590 = smul.u32 2, %s589
      %s591 = sadd.s32 %s24, 1
      %s592 = smul.u32 %s591, 16
      %p593 = scmp.lt.s32.totalorder %s592, 15
      %s594 = scalar_select %p593, %s592, 15
      %s595 = smul.u32 2, %s594
      %p596 = scmp.lt.s32.totalorder %s23, 1
      %s597 = scalar_select %p596, %s23, 1
      %p598 = scmp.lt.s32.totalorder %s595, 31
      %s599 = scalar_select %p598, %s595, 31
      %s600 = smul.addr %s597, 32
      %s601 = sadd.s32 %s599, %s600
      %s602 = smul.addr %s601, 8
      %s603 = scalar_lea.vmem %s4, %s602
      %s604 = sadd.s32 %s24, 1
      %s605 = smul.u32 %s604, 16
      %p606 = scmp.lt.s32.totalorder %s605, 15
      %s607 = scalar_select %p606, %s605, 15
      %s608 = smul.u32 2, %s607
      %s609 = sadd.s32 %s24, 1
      %s610 = smul.u32 %s609, 16
      %p611 = scmp.lt.s32.totalorder %s610, 15
      %s612 = scalar_select %p611, %s610, 15
      %s613 = smul.u32 2, %s612
      %p614 = scmp.lt.s32.totalorder %s23, 1
      %s615 = scalar_select %p614, %s23, 1
      %p616 = scmp.lt.s32.totalorder %s613, 31
      %s617 = scalar_select %p616, %s613, 31
      %s618 = smul.addr %s615, 32
      %s619 = sadd.s32 %s617, %s618
      %s620 = smul.addr %s619, 8
      %s621 = scalar_lea.vmem %s5, %s620
      %s622 = sadd.s32 %s24, 1
      %s623 = smul.u32 %s622, 16
      %p624 = scmp.lt.s32.totalorder %s623, 15
      %s625 = scalar_select %p624, %s623, 15
      %s626 = smul.u32 2, %s625
      %s627 = smul.u32 32, %s24
      %p628 = scmp.lt.s32.totalorder %s23, 1
      %s629 = scalar_select %p628, %s23, 1
      %p630 = scmp.lt.s32.totalorder %s627, 31
      %s631 = scalar_select %p630, %s627, 31
      %s632 = smul.addr %s629, 32
      %s633 = sadd.s32 %s631, %s632
      %s634 = smul.addr %s633, 8
      %s635 = scalar_lea.vmem %s8, %s634
      %s636 = smul.u32 32, %s24
      %v637 = vld [vmem:[%s543] sm:$0xff]
      %v638 = vld [vmem:[%s543 + $0x8] sm:$0xff]
      %v639 = vld [vmem:[%s543 + $0x10] sm:$0xff]
      %v640 = vld [vmem:[%s543 + $0x18] sm:$0xff]
      %v641 = vld [vmem:[%s543 + $0x20] sm:$0xff]
      %v642 = vld [vmem:[%s543 + $0x28] sm:$0xff]
      %v643 = vld [vmem:[%s543 + $0x30] sm:$0xff]
      %v644 = vld [vmem:[%s543 + $0x38] sm:$0xff]
      %v645 = vld [vmem:[%s543 + $0x40] sm:$0xff]
      %v646 = vld [vmem:[%s543 + $0x48] sm:$0xff]
      %v647 = vld [vmem:[%s543 + $0x50] sm:$0xff]
      %v648 = vld [vmem:[%s543 + $0x58] sm:$0xff]
      %v649 = vld [vmem:[%s543 + $0x60] sm:$0xff]
      %v650 = vld [vmem:[%s543 + $0x68] sm:$0xff]
      %v651 = vld [vmem:[%s543 + $0x70] sm:$0xff]
      %v652 = vld [vmem:[%s543 + $0x78] sm:$0xff]
      %v653 = vld [vmem:[%s543 + $0x80] sm:$0xff]
      %v654 = vld [vmem:[%s543 + $0x88] sm:$0xff]
      %v655 = vld [vmem:[%s543 + $0x90] sm:$0xff]
      %v656 = vld [vmem:[%s543 + $0x98] sm:$0xff]
      %v657 = vld [vmem:[%s543 + $0xa0] sm:$0xff]
      %v658 = vld [vmem:[%s543 + $0xa8] sm:$0xff]
      %v659 = vld [vmem:[%s543 + $0xb0] sm:$0xff]
      %v660 = vld [vmem:[%s543 + $0xb8] sm:$0xff]
      %v661 = vld [vmem:[%s543 + $0xc0] sm:$0xff]
      %v662 = vld [vmem:[%s543 + $0xc8] sm:$0xff]
      %v663 = vld [vmem:[%s543 + $0xd0] sm:$0xff]
      %v664 = vld [vmem:[%s543 + $0xd8] sm:$0xff]
      %v665 = vld [vmem:[%s543 + $0xe0] sm:$0xff]
      %v666 = vld [vmem:[%s543 + $0xe8] sm:$0xff]
      %v667 = vld [vmem:[%s543 + $0xf0] sm:$0xff]
      %v668 = vld [vmem:[%s543 + $0xf8] sm:$0xff]
      %v669 = vld [vmem:[%s553] sm:$0xff]
      %v670 = vld [vmem:[%s553 + $0x8] sm:$0xff]
      %v671 = vld [vmem:[%s553 + $0x10] sm:$0xff]
      %v672 = vld [vmem:[%s553 + $0x18] sm:$0xff]
      %v673 = vld [vmem:[%s553 + $0x20] sm:$0xff]
      %v674 = vld [vmem:[%s553 + $0x28] sm:$0xff]
      %v675 = vld [vmem:[%s553 + $0x30] sm:$0xff]
      %v676 = vld [vmem:[%s553 + $0x38] sm:$0xff]
      %v677 = vld [vmem:[%s553 + $0x40] sm:$0xff]
      %v678 = vld [vmem:[%s553 + $0x48] sm:$0xff]
      %v679 = vld [vmem:[%s553 + $0x50] sm:$0xff]
      %v680 = vld [vmem:[%s553 + $0x58] sm:$0xff]
      %v681 = vld [vmem:[%s553 + $0x60] sm:$0xff]
      %v682 = vld [vmem:[%s553 + $0x68] sm:$0xff]
      %v683 = vld [vmem:[%s553 + $0x70] sm:$0xff]
      %v684 = vld [vmem:[%s553 + $0x78] sm:$0xff]
      %v685 = vld [vmem:[%s553 + $0x80] sm:$0xff]
      %v686 = vld [vmem:[%s553 + $0x88] sm:$0xff]
      %v687 = vld [vmem:[%s553 + $0x90] sm:$0xff]
      %v688 = vld [vmem:[%s553 + $0x98] sm:$0xff]
      %v689 = vld [vmem:[%s553 + $0xa0] sm:$0xff]
      %v690 = vld [vmem:[%s553 + $0xa8] sm:$0xff]
      %v691 = vld [vmem:[%s553 + $0xb0] sm:$0xff]
      %v692 = vld [vmem:[%s553 + $0xb8] sm:$0xff]
      %v693 = vld [vmem:[%s553 + $0xc0] sm:$0xff]
      %v694 = vld [vmem:[%s553 + $0xc8] sm:$0xff]
      %v695 = vld [vmem:[%s553 + $0xd0] sm:$0xff]
      %v696 = vld [vmem:[%s553 + $0xd8] sm:$0xff]
      %v697 = vld [vmem:[%s553 + $0xe0] sm:$0xff]
      %v698 = vld [vmem:[%s553 + $0xe8] sm:$0xff]
      %v699 = vld [vmem:[%s553 + $0xf0] sm:$0xff]
      %v700 = vld [vmem:[%s553 + $0xf8] sm:$0xff]
      %v701 = vmul.f32 %v637, %v669
      %v702 = vmul.f32 %v638, %v670
      %v703 = vmul.f32 %v639, %v671
      %v704 = vmul.f32 %v640, %v672
      %v705 = vmul.f32 %v641, %v673
      %v706 = vmul.f32 %v642, %v674
      %v707 = vmul.f32 %v643, %v675
      %v708 = vmul.f32 %v644, %v676
      %v709 = vmul.f32 %v645, %v677
      %v710 = vmul.f32 %v646, %v678
      %v711 = vmul.f32 %v647, %v679
      %v712 = vmul.f32 %v648, %v680
      %v713 = vmul.f32 %v649, %v681
      %v714 = vmul.f32 %v650, %v682
      %v715 = vmul.f32 %v651, %v683
      %v716 = vmul.f32 %v652, %v684
      %v717 = vmul.f32 %v653, %v685
      %v718 = vmul.f32 %v654, %v686
      %v719 = vmul.f32 %v655, %v687
      %v720 = vmul.f32 %v656, %v688
      %v721 = vmul.f32 %v657, %v689
      %v722 = vmul.f32 %v658, %v690
      %v723 = vmul.f32 %v659, %v691
      %v724 = vmul.f32 %v660, %v692
      %v725 = vmul.f32 %v661, %v693
      %v726 = vmul.f32 %v662, %v694
      %v727 = vmul.f32 %v663, %v695
      %v728 = vmul.f32 %v664, %v696
      %v729 = vmul.f32 %v665, %v697
      %v730 = vmul.f32 %v666, %v698
      %v731 = vmul.f32 %v667, %v699
      %v732 = vmul.f32 %v668, %v700
      %p733 = scmp.gt.s32.totalorder %s24, 0
      %v734 = vld [vmem:[%s567] sm:$0xff]
      %v735 = vld [vmem:[%s567 + $0x8] sm:$0xff]
      %v736 = vld [vmem:[%s585] sm:$0xff]
      %v737 = vld [vmem:[%s585 + $0x8] sm:$0xff]
      %v738 = vmul.f32 %v734, %v736
      %v739 = vmul.f32 %v735, %v737
      %s740 = scalar_select %p733, 1, 0
      %v741 = vstv %s740
      %vm742 = vcmp.eq.s32.totalorder %v741, 1
      %v743 = vsel %vm742, %v738, 0.0
      %v744 = vsel %vm742, %v739, 0.0
      %p745 = scmp.lt.s32.totalorder %s24, 0
      %v746 = vld [vmem:[%s603] sm:$0xff]
      %v747 = vld [vmem:[%s603 + $0x8] sm:$0xff]
      %v748 = vld [vmem:[%s621] sm:$0xff]
      %v749 = vld [vmem:[%s621 + $0x8] sm:$0xff]
      %v750 = vmul.f32 %v746, %v748
      %v751 = vmul.f32 %v747, %v749
      %s752 = scalar_select %p745, 1, 0
      %v753 = vstv %s752
      %vm754 = vcmp.eq.s32.totalorder %v753, 1
      %v755 = vsel %vm754, %v750, 0.0
      %v756 = vsel %vm754, %v751, 0.0
      %vm757 = vcmask 253952
      %758 = vst.msk [vmem:[#allocation2] sm:$0x1] %vm757, 0.0
      %vm759 = vcmask 261120
      %760 = vst.msk [vmem:[#allocation2 + $0x1] sm:$0xff] %vm759, %v743
      %761 = vst.msk [vmem:[#allocation2 + $0x9] sm:$0xff] %vm759, %v744
      %762 = vst.msk [vmem:[#allocation2 + $0x11] sm:$0xff] %vm759, %v701
      %763 = vst.msk [vmem:[#allocation2 + $0x19] sm:$0xff] %vm759, %v702
      %764 = vst.msk [vmem:[#allocation2 + $0x21] sm:$0xff] %vm759, %v703
      %765 = vst.msk [vmem:[#allocation2 + $0x29] sm:$0xff] %vm759, %v704
      %766 = vst.msk [vmem:[#allocation2 + $0x31] sm:$0xff] %vm759, %v705
      %767 = vst.msk [vmem:[#allocation2 + $0x39] sm:$0xff] %vm759, %v706
      %768 = vst.msk [vmem:[#allocation2 + $0x41] sm:$0xff] %vm759, %v707
      %769 = vst.msk [vmem:[#allocation2 + $0x49] sm:$0xff] %vm759, %v708
      %770 = vst.msk [vmem:[#allocation2 + $0x51] sm:$0xff] %vm759, %v709
      %771 = vst.msk [vmem:[#allocation2 + $0x59] sm:$0xff] %vm759, %v710
      %772 = vst.msk [vmem:[#allocation2 + $0x61] sm:$0xff] %vm759, %v711
      %773 = vst.msk [vmem:[#allocation2 + $0x69] sm:$0xff] %vm759, %v712
      %774 = vst.msk [vmem:[#allocation2 + $0x71] sm:$0xff] %vm759, %v713
      %775 = vst.msk [vmem:[#allocation2 + $0x79] sm:$0xff] %vm759, %v714
      %776 = vst.msk [vmem:[#allocation2 + $0x81] sm:$0xff] %vm759, %v715
      %777 = vst.msk [vmem:[#allocation2 + $0x89] sm:$0xff] %vm759, %v716
      %778 = vst.msk [vmem:[#allocation2 + $0x91] sm:$0xff] %vm759, %v717
      %779 = vst.msk [vmem:[#allocation2 + $0x99] sm:$0xff] %vm759, %v718
      %780 = vst.msk [vmem:[#allocation2 + $0xa1] sm:$0xff] %vm759, %v719
      %781 = vst.msk [vmem:[#allocation2 + $0xa9] sm:$0xff] %vm759, %v720
      %782 = vst.msk [vmem:[#allocation2 + $0xb1] sm:$0xff] %vm759, %v721
      %783 = vst.msk [vmem:[#allocation2 + $0xb9] sm:$0xff] %vm759, %v722
      %784 = vst.msk [vmem:[#allocation2 + $0xc1] sm:$0xff] %vm759, %v723
      %785 = vst.msk [vmem:[#allocation2 + $0xc9] sm:$0xff] %vm759, %v724
      %786 = vst.msk [vmem:[#allocation2 + $0xd1] sm:$0xff] %vm759, %v725
      %787 = vst.msk [vmem:[#allocation2 + $0xd9] sm:$0xff] %vm759, %v726
      %788 = vst.msk [vmem:[#allocation2 + $0xe1] sm:$0xff] %vm759, %v727
      %789 = vst.msk [vmem:[#allocation2 + $0xe9] sm:$0xff] %vm759, %v728
      %790 = vst.msk [vmem:[#allocation2 + $0xf1] sm:$0xff] %vm759, %v729
      %791 = vst.msk [vmem:[#allocation2 + $0xf9] sm:$0xff] %vm759, %v730
      %792 = vst.msk [vmem:[#allocation2 + $0x101] sm:$0xff] %vm759, %v731
      %793 = vst.msk [vmem:[#allocation2 + $0x109] sm:$0xff] %vm759, %v732
      %794 = vst.msk [vmem:[#allocation2 + $0x111] sm:$0xff] %vm759, %v755
      %795 = vst.msk [vmem:[#allocation2 + $0x119] sm:$0xff] %vm759, %v756
      %796 = vst.msk [vmem:[#allocation2 + $0x121] sm:$0x1] %vm757, 0.0
      %v797 = vlaneseq
      %v798 = vshrl.u32 %v797, 7
      %v799 = vadd.s32 %v798, 8
      %v800 = vadd.s32 %v798, 16
      %v801 = vadd.s32 %v798, 24
      %v802 = vadd.s32 %v798, 32
      %v803 = vadd.s32 %v798, 40
      %v804 = vadd.s32 %v798, 48
      %v805 = vadd.s32 %v798, 56
      %v806 = vadd.s32 %v798, 64
      %v807 = vadd.s32 %v798, 72
      %v808 = vadd.s32 %v798, 80
      %v809 = vadd.s32 %v798, 88
      %v810 = vadd.s32 %v798, 96
      %v811 = vadd.s32 %v798, 104
      %v812 = vadd.s32 %v798, 112
      %v813 = vadd.s32 %v798, 120
      %v814 = vadd.s32 %v798, 128
      %v815 = vadd.s32 %v798, 136
      %v816 = vadd.s32 %v798, 144
      %v817 = vadd.s32 %v798, 152
      %v818 = vadd.s32 %v798, 160
      %v819 = vadd.s32 %v798, 168
      %v820 = vadd.s32 %v798, 176
      %v821 = vadd.s32 %v798, 184
      %v822 = vadd.s32 %v798, 192
      %v823 = vadd.s32 %v798, 200
      %v824 = vadd.s32 %v798, 208
      %v825 = vadd.s32 %v798, 216
      %v826 = vadd.s32 %v798, 224
      %v827 = vadd.s32 %v798, 232
      %v828 = vadd.s32 %v798, 240
      %v829 = vadd.s32 %v798, 248
      %vm830 = vcmp.lt.s32.totalorder %v798, 0
      %v831 = vsub.s32 0, %v798
      %v832 = vsel %vm830, %v831, %v798
      %v833 = vshrl.u32 %v832, 4
      %v834 = vand.u32 %v832, 15
      %v835 = vsub.s32 0, %v834
      %v836 = vsel %vm830, %v835, %v834
      %vm837 = vcmp.lt.s32.totalorder %v799, 0
      %v838 = vsub.s32 0, %v799
      %v839 = vsel %vm837, %v838, %v799
      %v840 = vshrl.u32 %v839, 4
      %v841 = vand.u32 %v839, 15
      %v842 = vsub.s32 0, %v841
      %v843 = vsel %vm837, %v842, %v841
      %vm844 = vcmp.lt.s32.totalorder %v800, 0
      %v845 = vsub.s32 0, %v800
      %v846 = vsel %vm844, %v845, %v800
      %v847 = vshrl.u32 %v846, 4
      %v848 = vand.u32 %v846, 15
      %v849 = vsub.s32 0, %v848
      %v850 = vsel %vm844, %v849, %v848
      %vm851 = vcmp.lt.s32.totalorder %v801, 0
      %v852 = vsub.s32 0, %v801
      %v853 = vsel %vm851, %v852, %v801
      %v854 = vshrl.u32 %v853, 4
      %v855 = vand.u32 %v853, 15
      %v856 = vsub.s32 0, %v855
      %v857 = vsel %vm851, %v856, %v855
      %vm858 = vcmp.lt.s32.totalorder %v802, 0
      %v859 = vsub.s32 0, %v802
      %v860 = vsel %vm858, %v859, %v802
      %v861 = vshrl.u32 %v860, 4
      %v862 = vand.u32 %v860, 15
      %v863 = vsub.s32 0, %v862
      %v864 = vsel %vm858, %v863, %v862
      %vm865 = vcmp.lt.s32.totalorder %v803, 0
      %v866 = vsub.s32 0, %v803
      %v867 = vsel %vm865, %v866, %v803
      %v868 = vshrl.u32 %v867, 4
      %v869 = vand.u32 %v867, 15
      %v870 = vsub.s32 0, %v869
      %v871 = vsel %vm865, %v870, %v869
      %vm872 = vcmp.lt.s32.totalorder %v804, 0
      %v873 = vsub.s32 0, %v804
      %v874 = vsel %vm872, %v873, %v804
      %v875 = vshrl.u32 %v874, 4
      %v876 = vand.u32 %v874, 15
      %v877 = vsub.s32 0, %v876
      %v878 = vsel %vm872, %v877, %v876
      %vm879 = vcmp.lt.s32.totalorder %v805, 0
      %v880 = vsub.s32 0, %v805
      %v881 = vsel %vm879, %v880, %v805
      %v882 = vshrl.u32 %v881, 4
      %v883 = vand.u32 %v881, 15
      %v884 = vsub.s32 0, %v883
      %v885 = vsel %vm879, %v884, %v883
      %vm886 = vcmp.lt.s32.totalorder %v806, 0
      %v887 = vsub.s32 0, %v806
      %v888 = vsel %vm886, %v887, %v806
      %v889 = vshrl.u32 %v888, 4
      %v890 = vand.u32 %v888, 15
      %v891 = vsub.s32 0, %v890
      %v892 = vsel %vm886, %v891, %v890
      %vm893 = vcmp.lt.s32.totalorder %v807, 0
      %v894 = vsub.s32 0, %v807
      %v895 = vsel %vm893, %v894, %v807
      %v896 = vshrl.u32 %v895, 4
      %v897 = vand.u32 %v895, 15
      %v898 = vsub.s32 0, %v897
      %v899 = vsel %vm893, %v898, %v897
      %vm900 = vcmp.lt.s32.totalorder %v808, 0
      %v901 = vsub.s32 0, %v808
      %v902 = vsel %vm900, %v901, %v808
      %v903 = vshrl.u32 %v902, 4
      %v904 = vand.u32 %v902, 15
      %v905 = vsub.s32 0, %v904
      %v906 = vsel %vm900, %v905, %v904
      %vm907 = vcmp.lt.s32.totalorder %v809, 0
      %v908 = vsub.s32 0, %v809
      %v909 = vsel %vm907, %v908, %v809
      %v910 = vshrl.u32 %v909, 4
      %v911 = vand.u32 %v909, 15
      %v912 = vsub.s32 0, %v911
      %v913 = vsel %vm907, %v912, %v911
      %vm914 = vcmp.lt.s32.totalorder %v810, 0
      %v915 = vsub.s32 0, %v810
      %v916 = vsel %vm914, %v915, %v810
      %v917 = vshrl.u32 %v916, 4
      %v918 = vand.u32 %v916, 15
      %v919 = vsub.s32 0, %v918
      %v920 = vsel %vm914, %v919, %v918
      %vm921 = vcmp.lt.s32.totalorder %v811, 0
      %v922 = vsub.s32 0, %v811
      %v923 = vsel %vm921, %v922, %v811
      %v924 = vshrl.u32 %v923, 4
      %v925 = vand.u32 %v923, 15
      %v926 = vsub.s32 0, %v925
      %v927 = vsel %vm921, %v926, %v925
      %vm928 = vcmp.lt.s32.totalorder %v812, 0
      %v929 = vsub.s32 0, %v812
      %v930 = vsel %vm928, %v929, %v812
      %v931 = vshrl.u32 %v930, 4
      %v932 = vand.u32 %v930, 15
      %v933 = vsub.s32 0, %v932
      %v934 = vsel %vm928, %v933, %v932
      %vm935 = vcmp.lt.s32.totalorder %v813, 0
      %v936 = vsub.s32 0, %v813
      %v937 = vsel %vm935, %v936, %v813
      %v938 = vshrl.u32 %v937, 4
      %v939 = vand.u32 %v937, 15
      %v940 = vsub.s32 0, %v939
      %v941 = vsel %vm935, %v940, %v939
      %vm942 = vcmp.lt.s32.totalorder %v814, 0
      %v943 = vsub.s32 0, %v814
      %v944 = vsel %vm942, %v943, %v814
      %v945 = vshrl.u32 %v944, 4
      %v946 = vand.u32 %v944, 15
      %v947 = vsub.s32 0, %v946
      %v948 = vsel %vm942, %v947, %v946
      %vm949 = vcmp.lt.s32.totalorder %v815, 0
      %v950 = vsub.s32 0, %v815
      %v951 = vsel %vm949, %v950, %v815
      %v952 = vshrl.u32 %v951, 4
      %v953 = vand.u32 %v951, 15
      %v954 = vsub.s32 0, %v953
      %v955 = vsel %vm949, %v954, %v953
      %vm956 = vcmp.lt.s32.totalorder %v816, 0
      %v957 = vsub.s32 0, %v816
      %v958 = vsel %vm956, %v957, %v816
      %v959 = vshrl.u32 %v958, 4
      %v960 = vand.u32 %v958, 15
      %v961 = vsub.s32 0, %v960
      %v962 = vsel %vm956, %v961, %v960
      %vm963 = vcmp.lt.s32.totalorder %v817, 0
      %v964 = vsub.s32 0, %v817
      %v965 = vsel %vm963, %v964, %v817
      %v966 = vshrl.u32 %v965, 4
      %v967 = vand.u32 %v965, 15
      %v968 = vsub.s32 0, %v967
      %v969 = vsel %vm963, %v968, %v967
      %vm970 = vcmp.lt.s32.totalorder %v818, 0
      %v971 = vsub.s32 0, %v818
      %v972 = vsel %vm970, %v971, %v818
      %v973 = vshrl.u32 %v972, 4
      %v974 = vand.u32 %v972, 15
      %v975 = vsub.s32 0, %v974
      %v976 = vsel %vm970, %v975, %v974
      %vm977 = vcmp.lt.s32.totalorder %v819, 0
      %v978 = vsub.s32 0, %v819
      %v979 = vsel %vm977, %v978, %v819
      %v980 = vshrl.u32 %v979, 4
      %v981 = vand.u32 %v979, 15
      %v982 = vsub.s32 0, %v981
      %v983 = vsel %vm977, %v982, %v981
      %vm984 = vcmp.lt.s32.totalorder %v820, 0
      %v985 = vsub.s32 0, %v820
      %v986 = vsel %vm984, %v985, %v820
      %v987 = vshrl.u32 %v986, 4
      %v988 = vand.u32 %v986, 15
      %v989 = vsub.s32 0, %v988
      %v990 = vsel %vm984, %v989, %v988
      %vm991 = vcmp.lt.s32.totalorder %v821, 0
      %v992 = vsub.s32 0, %v821
      %v993 = vsel %vm991, %v992, %v821
      %v994 = vshrl.u32 %v993, 4
      %v995 = vand.u32 %v993, 15
      %v996 = vsub.s32 0, %v995
      %v997 = vsel %vm991, %v996, %v995
      %vm998 = vcmp.lt.s32.totalorder %v822, 0
      %v999 = vsub.s32 0, %v822
      %v1000 = vsel %vm998, %v999, %v822
      %v1001 = vshrl.u32 %v1000, 4
      %v1002 = vand.u32 %v1000, 15
      %v1003 = vsub.s32 0, %v1002
      %v1004 = vsel %vm998, %v1003, %v1002
      %vm1005 = vcmp.lt.s32.totalorder %v823, 0
      %v1006 = vsub.s32 0, %v823
      %v1007 = vsel %vm1005, %v1006, %v823
      %v1008 = vshrl.u32 %v1007, 4
      %v1009 = vand.u32 %v1007, 15
      %v1010 = vsub.s32 0, %v1009
      %v1011 = vsel %vm1005, %v1010, %v1009
      %vm1012 = vcmp.lt.s32.totalorder %v824, 0
      %v1013 = vsub.s32 0, %v824
      %v1014 = vsel %vm1012, %v1013, %v824
      %v1015 = vshrl.u32 %v1014, 4
      %v1016 = vand.u32 %v1014, 15
      %v1017 = vsub.s32 0, %v1016
      %v1018 = vsel %vm1012, %v1017, %v1016
      %vm1019 = vcmp.lt.s32.totalorder %v825, 0
      %v1020 = vsub.s32 0, %v825
      %v1021 = vsel %vm1019, %v1020, %v825
      %v1022 = vshrl.u32 %v1021, 4
      %v1023 = vand.u32 %v1021, 15
      %v1024 = vsub.s32 0, %v1023
      %v1025 = vsel %vm1019, %v1024, %v1023
      %vm1026 = vcmp.lt.s32.totalorder %v826, 0
      %v1027 = vsub.s32 0, %v826
      %v1028 = vsel %vm1026, %v1027, %v826
      %v1029 = vshrl.u32 %v1028, 4
      %v1030 = vand.u32 %v1028, 15
      %v1031 = vsub.s32 0, %v1030
      %v1032 = vsel %vm1026, %v1031, %v1030
      %vm1033 = vcmp.lt.s32.totalorder %v827, 0
      %v1034 = vsub.s32 0, %v827
      %v1035 = vsel %vm1033, %v1034, %v827
      %v1036 = vshrl.u32 %v1035, 4
      %v1037 = vand.u32 %v1035, 15
      %v1038 = vsub.s32 0, %v1037
      %v1039 = vsel %vm1033, %v1038, %v1037
      %vm1040 = vcmp.lt.s32.totalorder %v828, 0
      %v1041 = vsub.s32 0, %v828
      %v1042 = vsel %vm1040, %v1041, %v828
      %v1043 = vshrl.u32 %v1042, 4
      %v1044 = vand.u32 %v1042, 15
      %v1045 = vsub.s32 0, %v1044
      %v1046 = vsel %vm1040, %v1045, %v1044
      %vm1047 = vcmp.lt.s32.totalorder %v829, 0
      %v1048 = vsub.s32 0, %v829
      %v1049 = vsel %vm1047, %v1048, %v829
      %v1050 = vshrl.u32 %v1049, 4
      %v1051 = vand.u32 %v1049, 15
      %v1052 = vsub.s32 0, %v1051
      %v1053 = vsel %vm1047, %v1052, %v1051
      %vm1054 = vcmp.ne.s32.totalorder %v836, 0
      %vm1055 = vcmp.ne.s32.totalorder %v843, 0
      %vm1056 = vcmp.ne.s32.totalorder %v850, 0
      %vm1057 = vcmp.ne.s32.totalorder %v857, 0
      %vm1058 = vcmp.ne.s32.totalorder %v864, 0
      %vm1059 = vcmp.ne.s32.totalorder %v871, 0
      %vm1060 = vcmp.ne.s32.totalorder %v878, 0
      %vm1061 = vcmp.ne.s32.totalorder %v885, 0
      %vm1062 = vcmp.ne.s32.totalorder %v892, 0
      %vm1063 = vcmp.ne.s32.totalorder %v899, 0
      %vm1064 = vcmp.ne.s32.totalorder %v906, 0
      %vm1065 = vcmp.ne.s32.totalorder %v913, 0
      %vm1066 = vcmp.ne.s32.totalorder %v920, 0
      %vm1067 = vcmp.ne.s32.totalorder %v927, 0
      %vm1068 = vcmp.ne.s32.totalorder %v934, 0
      %vm1069 = vcmp.ne.s32.totalorder %v941, 0
      %vm1070 = vcmp.ne.s32.totalorder %v948, 0
      %vm1071 = vcmp.ne.s32.totalorder %v955, 0
      %vm1072 = vcmp.ne.s32.totalorder %v962, 0
      %vm1073 = vcmp.ne.s32.totalorder %v969, 0
      %vm1074 = vcmp.ne.s32.totalorder %v976, 0
      %vm1075 = vcmp.ne.s32.totalorder %v983, 0
      %vm1076 = vcmp.ne.s32.totalorder %v990, 0
      %vm1077 = vcmp.ne.s32.totalorder %v997, 0
      %vm1078 = vcmp.ne.s32.totalorder %v1004, 0
      %vm1079 = vcmp.ne.s32.totalorder %v1011, 0
      %vm1080 = vcmp.ne.s32.totalorder %v1018, 0
      %vm1081 = vcmp.ne.s32.totalorder %v1025, 0
      %vm1082 = vcmp.ne.s32.totalorder %v1032, 0
      %vm1083 = vcmp.ne.s32.totalorder %v1039, 0
      %vm1084 = vcmp.ne.s32.totalorder %v1046, 0
      %vm1085 = vcmp.ne.s32.totalorder %v1053, 0
      %vm1086 = vcmp.lt.s32.totalorder %v836, 0
      %vm1087 = vcmp.lt.s32.totalorder %v843, 0
      %vm1088 = vcmp.lt.s32.totalorder %v850, 0
      %vm1089 = vcmp.lt.s32.totalorder %v857, 0
      %vm1090 = vcmp.lt.s32.totalorder %v864, 0
      %vm1091 = vcmp.lt.s32.totalorder %v871, 0
      %vm1092 = vcmp.lt.s32.totalorder %v878, 0
      %vm1093 = vcmp.lt.s32.totalorder %v885, 0
      %vm1094 = vcmp.lt.s32.totalorder %v892, 0
      %vm1095 = vcmp.lt.s32.totalorder %v899, 0
      %vm1096 = vcmp.lt.s32.totalorder %v906, 0
      %vm1097 = vcmp.lt.s32.totalorder %v913, 0
      %vm1098 = vcmp.lt.s32.totalorder %v920, 0
      %vm1099 = vcmp.lt.s32.totalorder %v927, 0
      %vm1100 = vcmp.lt.s32.totalorder %v934, 0
      %vm1101 = vcmp.lt.s32.totalorder %v941, 0
      %vm1102 = vcmp.lt.s32.totalorder %v948, 0
      %vm1103 = vcmp.lt.s32.totalorder %v955, 0
      %vm1104 = vcmp.lt.s32.totalorder %v962, 0
      %vm1105 = vcmp.lt.s32.totalorder %v969, 0
      %vm1106 = vcmp.lt.s32.totalorder %v976, 0
      %vm1107 = vcmp.lt.s32.totalorder %v983, 0
      %vm1108 = vcmp.lt.s32.totalorder %v990, 0
      %vm1109 = vcmp.lt.s32.totalorder %v997, 0
      %vm1110 = vcmp.lt.s32.totalorder %v1004, 0
      %vm1111 = vcmp.lt.s32.totalorder %v1011, 0
      %vm1112 = vcmp.lt.s32.totalorder %v1018, 0
      %vm1113 = vcmp.lt.s32.totalorder %v1025, 0
      %vm1114 = vcmp.lt.s32.totalorder %v1032, 0
      %vm1115 = vcmp.lt.s32.totalorder %v1039, 0
      %vm1116 = vcmp.lt.s32.totalorder %v1046, 0
      %vm1117 = vcmp.lt.s32.totalorder %v1053, 0
      %vm1118 = vmand %vm1086, %vm1054
      %vm1119 = vmand %vm1087, %vm1055
      %vm1120 = vmand %vm1088, %vm1056
      %vm1121 = vmand %vm1089, %vm1057
      %vm1122 = vmand %vm1090, %vm1058
      %vm1123 = vmand %vm1091, %vm1059
      %vm1124 = vmand %vm1092, %vm1060
      %vm1125 = vmand %vm1093, %vm1061
      %vm1126 = vmand %vm1094, %vm1062
      %vm1127 = vmand %vm1095, %vm1063
      %vm1128 = vmand %vm1096, %vm1064
      %vm1129 = vmand %vm1097, %vm1065
      %vm1130 = vmand %vm1098, %vm1066
      %vm1131 = vmand %vm1099, %vm1067
      %vm1132 = vmand %vm1100, %vm1068
      %vm1133 = vmand %vm1101, %vm1069
      %vm1134 = vmand %vm1102, %vm1070
      %vm1135 = vmand %vm1103, %vm1071
      %vm1136 = vmand %vm1104, %vm1072
      %vm1137 = vmand %vm1105, %vm1073
      %vm1138 = vmand %vm1106, %vm1074
      %vm1139 = vmand %vm1107, %vm1075
      %vm1140 = vmand %vm1108, %vm1076
      %vm1141 = vmand %vm1109, %vm1077
      %vm1142 = vmand %vm1110, %vm1078
      %vm1143 = vmand %vm1111, %vm1079
      %vm1144 = vmand %vm1112, %vm1080
      %vm1145 = vmand %vm1113, %vm1081
      %vm1146 = vmand %vm1114, %vm1082
      %vm1147 = vmand %vm1115, %vm1083
      %vm1148 = vmand %vm1116, %vm1084
      %vm1149 = vmand %vm1117, %vm1085
      %v1150 = vadd.s32 %v836, 16
      %v1151 = vadd.s32 %v843, 16
      %v1152 = vadd.s32 %v850, 16
      %v1153 = vadd.s32 %v857, 16
      %v1154 = vadd.s32 %v864, 16
      %v1155 = vadd.s32 %v871, 16
      %v1156 = vadd.s32 %v878, 16
      %v1157 = vadd.s32 %v885, 16
      %v1158 = vadd.s32 %v892, 16
      %v1159 = vadd.s32 %v899, 16
      %v1160 = vadd.s32 %v906, 16
      %v1161 = vadd.s32 %v913, 16
      %v1162 = vadd.s32 %v920, 16
      %v1163 = vadd.s32 %v927, 16
      %v1164 = vadd.s32 %v934, 16
      %v1165 = vadd.s32 %v941, 16
      %v1166 = vadd.s32 %v948, 16
      %v1167 = vadd.s32 %v955, 16
      %v1168 = vadd.s32 %v962, 16
      %v1169 = vadd.s32 %v969, 16
      %v1170 = vadd.s32 %v976, 16
      %v1171 = vadd.s32 %v983, 16
      %v1172 = vadd.s32 %v990, 16
      %v1173 = vadd.s32 %v997, 16
      %v1174 = vadd.s32 %v1004, 16
      %v1175 = vadd.s32 %v1011, 16
      %v1176 = vadd.s32 %v1018, 16
      %v1177 = vadd.s32 %v1025, 16
      %v1178 = vadd.s32 %v1032, 16
      %v1179 = vadd.s32 %v1039, 16
      %v1180 = vadd.s32 %v1046, 16
      %v1181 = vadd.s32 %v1053, 16
      %v1182 = vsel %vm1118, %v1150, %v836
      %v1183 = vsel %vm1119, %v1151, %v843
      %v1184 = vsel %vm1120, %v1152, %v850
      %v1185 = vsel %vm1121, %v1153, %v857
      %v1186 = vsel %vm1122, %v1154, %v864
      %v1187 = vsel %vm1123, %v1155, %v871
      %v1188 = vsel %vm1124, %v1156, %v878
      %v1189 = vsel %vm1125, %v1157, %v885
      %v1190 = vsel %vm1126, %v1158, %v892
      %v1191 = vsel %vm1127, %v1159, %v899
      %v1192 = vsel %vm1128, %v1160, %v906
      %v1193 = vsel %vm1129, %v1161, %v913
      %v1194 = vsel %vm1130, %v1162, %v920
      %v1195 = vsel %vm1131, %v1163, %v927
      %v1196 = vsel %vm1132, %v1164, %v934
      %v1197 = vsel %vm1133, %v1165, %v941
      %v1198 = vsel %vm1134, %v1166, %v948
      %v1199 = vsel %vm1135, %v1167, %v955
      %v1200 = vsel %vm1136, %v1168, %v962
      %v1201 = vsel %vm1137, %v1169, %v969
      %v1202 = vsel %vm1138, %v1170, %v976
      %v1203 = vsel %vm1139, %v1171, %v983
      %v1204 = vsel %vm1140, %v1172, %v990
      %v1205 = vsel %vm1141, %v1173, %v997
      %v1206 = vsel %vm1142, %v1174, %v1004
      %v1207 = vsel %vm1143, %v1175, %v1011
      %v1208 = vsel %vm1144, %v1176, %v1018
      %v1209 = vsel %vm1145, %v1177, %v1025
      %v1210 = vsel %vm1146, %v1178, %v1032
      %v1211 = vsel %vm1147, %v1179, %v1039
      %v1212 = vsel %vm1148, %v1180, %v1046
      %v1213 = vsel %vm1149, %v1181, %v1053
      %vm1214 = vcmp.ge.s32.totalorder %v1182, 1
      %vm1215 = vcmp.ge.s32.totalorder %v1183, 1
      %vm1216 = vcmp.ge.s32.totalorder %v1184, 1
      %vm1217 = vcmp.ge.s32.totalorder %v1185, 1
      %vm1218 = vcmp.ge.s32.totalorder %v1186, 1
      %vm1219 = vcmp.ge.s32.totalorder %v1187, 1
      %vm1220 = vcmp.ge.s32.totalorder %v1188, 1
      %vm1221 = vcmp.ge.s32.totalorder %v1189, 1
      %vm1222 = vcmp.ge.s32.totalorder %v1190, 1
      %vm1223 = vcmp.ge.s32.totalorder %v1191, 1
      %vm1224 = vcmp.ge.s32.totalorder %v1192, 1
      %vm1225 = vcmp.ge.s32.totalorder %v1193, 1
      %vm1226 = vcmp.ge.s32.totalorder %v1194, 1
      %vm1227 = vcmp.ge.s32.totalorder %v1195, 1
      %vm1228 = vcmp.ge.s32.totalorder %v1196, 1
      %vm1229 = vcmp.ge.s32.totalorder %v1197, 1
      %vm1230 = vcmp.ge.s32.totalorder %v1198, 1
      %vm1231 = vcmp.ge.s32.totalorder %v1199, 1
      %vm1232 = vcmp.ge.s32.totalorder %v1200, 1
      %vm1233 = vcmp.ge.s32.totalorder %v1201, 1
      %vm1234 = vcmp.ge.s32.totalorder %v1202, 1
      %vm1235 = vcmp.ge.s32.totalorder %v1203, 1
      %vm1236 = vcmp.ge.s32.totalorder %v1204, 1
      %vm1237 = vcmp.ge.s32.totalorder %v1205, 1
      %vm1238 = vcmp.ge.s32.totalorder %v1206, 1
      %vm1239 = vcmp.ge.s32.totalorder %v1207, 1
      %vm1240 = vcmp.ge.s32.totalorder %v1208, 1
      %vm1241 = vcmp.ge.s32.totalorder %v1209, 1
      %vm1242 = vcmp.ge.s32.totalorder %v1210, 1
      %vm1243 = vcmp.ge.s32.totalorder %v1211, 1
      %vm1244 = vcmp.ge.s32.totalorder %v1212, 1
      %vm1245 = vcmp.ge.s32.totalorder %v1213, 1
      %vm1246 = vcmp.le.s32.totalorder %v1182, 14
      %vm1247 = vcmp.le.s32.totalorder %v1183, 14
      %vm1248 = vcmp.le.s32.totalorder %v1184, 14
      %vm1249 = vcmp.le.s32.totalorder %v1185, 14
      %vm1250 = vcmp.le.s32.totalorder %v1186, 14
      %vm1251 = vcmp.le.s32.totalorder %v1187, 14
      %vm1252 = vcmp.le.s32.totalorder %v1188, 14
      %vm1253 = vcmp.le.s32.totalorder %v1189, 14
      %vm1254 = vcmp.le.s32.totalorder %v1190, 14
      %vm1255 = vcmp.le.s32.totalorder %v1191, 14
      %vm1256 = vcmp.le.s32.totalorder %v1192, 14
      %vm1257 = vcmp.le.s32.totalorder %v1193, 14
      %vm1258 = vcmp.le.s32.totalorder %v1194, 14
      %vm1259 = vcmp.le.s32.totalorder %v1195, 14
      %vm1260 = vcmp.le.s32.totalorder %v1196, 14
      %vm1261 = vcmp.le.s32.totalorder %v1197, 14
      %vm1262 = vcmp.le.s32.totalorder %v1198, 14
      %vm1263 = vcmp.le.s32.totalorder %v1199, 14
      %vm1264 = vcmp.le.s32.totalorder %v1200, 14
      %vm1265 = vcmp.le.s32.totalorder %v1201, 14
      %vm1266 = vcmp.le.s32.totalorder %v1202, 14
      %vm1267 = vcmp.le.s32.totalorder %v1203, 14
      %vm1268 = vcmp.le.s32.totalorder %v1204, 14
      %vm1269 = vcmp.le.s32.totalorder %v1205, 14
      %vm1270 = vcmp.le.s32.totalorder %v1206, 14
      %vm1271 = vcmp.le.s32.totalorder %v1207, 14
      %vm1272 = vcmp.le.s32.totalorder %v1208, 14
      %vm1273 = vcmp.le.s32.totalorder %v1209, 14
      %vm1274 = vcmp.le.s32.totalorder %v1210, 14
      %vm1275 = vcmp.le.s32.totalorder %v1211, 14
      %vm1276 = vcmp.le.s32.totalorder %v1212, 14
      %vm1277 = vcmp.le.s32.totalorder %v1213, 14
      %v1278 = vld [vmem:[#allocation2] sm:$0xff]
      %v1279 = vld [vmem:[#allocation2 + $0x8] sm:$0xff]
      %v1280 = vld [vmem:[#allocation2 + $0x10] sm:$0xff]
      %v1281 = vld [vmem:[#allocation2 + $0x18] sm:$0xff]
      %v1282 = vld [vmem:[#allocation2 + $0x20] sm:$0xff]
      %v1283 = vld [vmem:[#allocation2 + $0x28] sm:$0xff]
      %v1284 = vld [vmem:[#allocation2 + $0x30] sm:$0xff]
      %v1285 = vld [vmem:[#allocation2 + $0x38] sm:$0xff]
      %v1286 = vld [vmem:[#allocation2 + $0x40] sm:$0xff]
      %v1287 = vld [vmem:[#allocation2 + $0x48] sm:$0xff]
      %v1288 = vld [vmem:[#allocation2 + $0x50] sm:$0xff]
      %v1289 = vld [vmem:[#allocation2 + $0x58] sm:$0xff]
      %v1290 = vld [vmem:[#allocation2 + $0x60] sm:$0xff]
      %v1291 = vld [vmem:[#allocation2 + $0x68] sm:$0xff]
      %v1292 = vld [vmem:[#allocation2 + $0x70] sm:$0xff]
      %v1293 = vld [vmem:[#allocation2 + $0x78] sm:$0xff]
      %v1294 = vld [vmem:[#allocation2 + $0x80] sm:$0xff]
      %v1295 = vld [vmem:[#allocation2 + $0x88] sm:$0xff]
      %v1296 = vld [vmem:[#allocation2 + $0x90] sm:$0xff]
      %v1297 = vld [vmem:[#allocation2 + $0x98] sm:$0xff]
      %v1298 = vld [vmem:[#allocation2 + $0xa0] sm:$0xff]
      %v1299 = vld [vmem:[#allocation2 + $0xa8] sm:$0xff]
      %v1300 = vld [vmem:[#allocation2 + $0xb0] sm:$0xff]
      %v1301 = vld [vmem:[#allocation2 + $0xb8] sm:$0xff]
      %v1302 = vld [vmem:[#allocation2 + $0xc0] sm:$0xff]
      %v1303 = vld [vmem:[#allocation2 + $0xc8] sm:$0xff]
      %v1304 = vld [vmem:[#allocation2 + $0xd0] sm:$0xff]
      %v1305 = vld [vmem:[#allocation2 + $0xd8] sm:$0xff]
      %v1306 = vld [vmem:[#allocation2 + $0xe0] sm:$0xff]
      %v1307 = vld [vmem:[#allocation2 + $0xe8] sm:$0xff]
      %v1308 = vld [vmem:[#allocation2 + $0xf0] sm:$0xff]
      %v1309 = vld [vmem:[#allocation2 + $0xf8] sm:$0xff]
      %v1310 = vsel %vm1214, %v1278, 0.0
      %v1311 = vsel %vm1215, %v1279, 0.0
      %v1312 = vsel %vm1216, %v1280, 0.0
      %v1313 = vsel %vm1217, %v1281, 0.0
      %v1314 = vsel %vm1218, %v1282, 0.0
      %v1315 = vsel %vm1219, %v1283, 0.0
      %v1316 = vsel %vm1220, %v1284, 0.0
      %v1317 = vsel %vm1221, %v1285, 0.0
      %v1318 = vsel %vm1222, %v1286, 0.0
      %v1319 = vsel %vm1223, %v1287, 0.0
      %v1320 = vsel %vm1224, %v1288, 0.0
      %v1321 = vsel %vm1225, %v1289, 0.0
      %v1322 = vsel %vm1226, %v1290, 0.0
      %v1323 = vsel %vm1227, %v1291, 0.0
      %v1324 = vsel %vm1228, %v1292, 0.0
      %v1325 = vsel %vm1229, %v1293, 0.0
      %v1326 = vsel %vm1230, %v1294, 0.0
      %v1327 = vsel %vm1231, %v1295, 0.0
      %v1328 = vsel %vm1232, %v1296, 0.0
      %v1329 = vsel %vm1233, %v1297, 0.0
      %v1330 = vsel %vm1234, %v1298, 0.0
      %v1331 = vsel %vm1235, %v1299, 0.0
      %v1332 = vsel %vm1236, %v1300, 0.0
      %v1333 = vsel %vm1237, %v1301, 0.0
      %v1334 = vsel %vm1238, %v1302, 0.0
      %v1335 = vsel %vm1239, %v1303, 0.0
      %v1336 = vsel %vm1240, %v1304, 0.0
      %v1337 = vsel %vm1241, %v1305, 0.0
      %v1338 = vsel %vm1242, %v1306, 0.0
      %v1339 = vsel %vm1243, %v1307, 0.0
      %v1340 = vsel %vm1244, %v1308, 0.0
      %v1341 = vsel %vm1245, %v1309, 0.0
      %v1342 = vld [vmem:[%s6] sm:$0xff]
      %v1343 = vld [vmem:[%s6 + $0x8] sm:$0xff]
      %v1344 = vld [vmem:[%s6 + $0x10] sm:$0xff]
      %v1345 = vld [vmem:[%s6 + $0x18] sm:$0xff]
      %v1346 = vld [vmem:[#allocation2 + $0x1] sm:$0xff]
      %v1347 = vld [vmem:[#allocation2 + $0x9] sm:$0xff]
      %v1348 = vld [vmem:[#allocation2 + $0x11] sm:$0xff]
      %v1349 = vld [vmem:[#allocation2 + $0x19] sm:$0xff]
      %v1350 = vld [vmem:[#allocation2 + $0x21] sm:$0xff]
      %v1351 = vld [vmem:[#allocation2 + $0x29] sm:$0xff]
      %v1352 = vld [vmem:[#allocation2 + $0x31] sm:$0xff]
      %v1353 = vld [vmem:[#allocation2 + $0x39] sm:$0xff]
      %v1354 = vld [vmem:[#allocation2 + $0x41] sm:$0xff]
      %v1355 = vld [vmem:[#allocation2 + $0x49] sm:$0xff]
      %v1356 = vld [vmem:[#allocation2 + $0x51] sm:$0xff]
      %v1357 = vld [vmem:[#allocation2 + $0x59] sm:$0xff]
      %v1358 = vld [vmem:[#allocation2 + $0x61] sm:$0xff]
      %v1359 = vld [vmem:[#allocation2 + $0x69] sm:$0xff]
      %v1360 = vld [vmem:[#allocation2 + $0x71] sm:$0xff]
      %v1361 = vld [vmem:[#allocation2 + $0x79] sm:$0xff]
      %v1362 = vld [vmem:[#allocation2 + $0x81] sm:$0xff]
      %v1363 = vld [vmem:[#allocation2 + $0x89] sm:$0xff]
      %v1364 = vld [vmem:[#allocation2 + $0x91] sm:$0xff]
      %v1365 = vld [vmem:[#allocation2 + $0x99] sm:$0xff]
      %v1366 = vld [vmem:[#allocation2 + $0xa1] sm:$0xff]
      %v1367 = vld [vmem:[#allocation2 + $0xa9] sm:$0xff]
      %v1368 = vld [vmem:[#allocation2 + $0xb1] sm:$0xff]
      %v1369 = vld [vmem:[#allocation2 + $0xb9] sm:$0xff]
      %v1370 = vld [vmem:[#allocation2 + $0xc1] sm:$0xff]
      %v1371 = vld [vmem:[#allocation2 + $0xc9] sm:$0xff]
      %v1372 = vld [vmem:[#allocation2 + $0xd1] sm:$0xff]
      %v1373 = vld [vmem:[#allocation2 + $0xd9] sm:$0xff]
      %v1374 = vld [vmem:[#allocation2 + $0xe1] sm:$0xff]
      %v1375 = vld [vmem:[#allocation2 + $0xe9] sm:$0xff]
      %v1376 = vld [vmem:[#allocation2 + $0xf1] sm:$0xff]
      %v1377 = vld [vmem:[#allocation2 + $0xf9] sm:$0xff]
      %s1378 = scalar_lea.vmem %s6, 32
      %v1379 = vld [vmem:[%s1378] sm:$0xff]
      %v1380 = vld [vmem:[%s1378 + $0x8] sm:$0xff]
      %v1381 = vld [vmem:[%s1378 + $0x10] sm:$0xff]
      %v1382 = vld [vmem:[%s1378 + $0x18] sm:$0xff]
      %v1384 = vsel %vm759, %v1346, 0
      %v1387 = vsel %vm759, %v1347, 0
      %v1390 = vsel %vm759, %v1348, 0
      %v1393 = vsel %vm759, %v1349, 0
      %v1396 = vsel %vm759, %v1350, 0
      %v1399 = vsel %vm759, %v1351, 0
      %v1402 = vsel %vm759, %v1352, 0
      %v1405 = vsel %vm759, %v1353, 0
      %v1408 = vsel %vm759, %v1354, 0
      %v1411 = vsel %vm759, %v1355, 0
      %v1414 = vsel %vm759, %v1356, 0
      %v1417 = vsel %vm759, %v1357, 0
      %v1420 = vsel %vm759, %v1358, 0
      %v1423 = vsel %vm759, %v1359, 0
      %v1426 = vsel %vm759, %v1360, 0
      %v1429 = vsel %vm759, %v1361, 0
      %v1432 = vsel %vm759, %v1362, 0
      %v1435 = vsel %vm759, %v1363, 0
      %v1438 = vsel %vm759, %v1364, 0
      %v1441 = vsel %vm759, %v1365, 0
      %v1444 = vsel %vm759, %v1366, 0
      %v1447 = vsel %vm759, %v1367, 0
      %v1450 = vsel %vm759, %v1368, 0
      %v1453 = vsel %vm759, %v1369, 0
      %v1456 = vsel %vm759, %v1370, 0
      %v1459 = vsel %vm759, %v1371, 0
      %v1462 = vsel %vm759, %v1372, 0
      %v1465 = vsel %vm759, %v1373, 0
      %v1468 = vsel %vm759, %v1374, 0
      %v1471 = vsel %vm759, %v1375, 0
      %v1474 = vsel %vm759, %v1376, 0
      %v1477 = vsel %vm759, %v1377, 0
      %1479 = vmatprep.subr.mxu0 0.0
      %1480 = vmatpush1.msra.mxu0 %v1379
      %1481 = vmatprep.subr.mxu0 0.0
      %1482 = vmatpush1.msra.mxu0 %v1380
      %1483 = vmatprep.subr.mxu0 0.0
      %1484 = vmatpush1.msra.mxu0 %v1381
      %1485 = vmatprep.subr.mxu0 0.0
      %1486 = vmatpush1.msra.mxu0 %v1382
      %1487 = vmatprep.subr.mxu0 0.0
      %1488 = vmatpush1.msra.mxu0 0.0
      %1489 = vmatprep.subr.mxu0 0.0
      %1490 = vmatpush1.msra.mxu0 0.0
      %1491 = vmatprep.subr.mxu0 0.0
      %1492 = vmatpush1.msra.mxu0 0.0
      %1493 = vmatprep.subr.mxu0 0.0
      %1494 = vmatpush1.msra.mxu0 0.0
      %1495 = vmatprep.subr.mxu0 0.0
      %1496 = vmatpush1.msra.mxu0 0.0
      %1497 = vmatprep.subr.mxu0 0.0
      %1498 = vmatpush1.msra.mxu0 0.0
      %1499 = vmatprep.subr.mxu0 0.0
      %1500 = vmatpush1.msra.mxu0 0.0
      %1501 = vmatprep.subr.mxu0 0.0
      %1502 = vmatpush1.msra.mxu0 0.0
      %1503 = vmatprep.subr.mxu0 0.0
      %1504 = vmatpush1.msra.mxu0 0.0
      %1505 = vmatprep.subr.mxu0 0.0
      %1506 = vmatpush1.msra.mxu0 0.0
      %1507 = vmatprep.subr.mxu0 0.0
      %1508 = vmatpush1.msra.mxu0 0.0
      %1509 = vmatprep.subr.mxu0 0.0
      %1510 = vmatpush1.msra.mxu0 0.0
      %1511 = vmatprep.subr.mxu0 0.0
      %1512 = vmatpush1.msra.mxu0 0.0
      %1513 = vmatprep.subr.mxu0 0.0
      %1514 = vmatpush1.msra.mxu0 0.0
      %1515 = vmatprep.subr.mxu0 0.0
      %1516 = vmatpush1.msra.mxu0 0.0
      %1517 = vmatprep.subr.mxu0 0.0
      %1518 = vmatpush1.msra.mxu0 0.0
      %1519 = vmatprep.subr.mxu0 0.0
      %1520 = vmatpush1.msra.mxu0 0.0
      %1521 = vmatprep.subr.mxu0 0.0
      %1522 = vmatpush1.msra.mxu0 0.0
      %1523 = vmatprep.subr.mxu0 0.0
      %1524 = vmatpush1.msra.mxu0 0.0
      %1525 = vmatprep.subr.mxu0 0.0
      %1526 = vmatpush1.msra.mxu0 0.0
      %1527 = vmatprep.subr.mxu0 0.0
      %1528 = vmatpush1.msra.mxu0 0.0
      %1529 = vmatprep.subr.mxu0 0.0
      %1530 = vmatpush1.msra.mxu0 0.0
      %1531 = vmatprep.subr.mxu0 0.0
      %1532 = vmatpush1.msra.mxu0 0.0
      %1533 = vmatprep.subr.mxu0 0.0
      %1534 = vmatpush1.msra.mxu0 0.0
      %1535 = vmatprep.subr.mxu0 0.0
      %1536 = vmatpush1.msra.mxu0 0.0
      %1537 = vmatprep.subr.mxu0 0.0
      %1538 = vmatpush1.msra.mxu0 0.0
      %1539 = vmatprep.subr.mxu0 0.0
      %1540 = vmatpush1.msra.mxu0 0.0
      %1541 = vmatprep.subr.mxu0 0.0
      %1542 = vmatpush1.msra.mxu0 0.0
      %1543 = vmatprep.mubr.f32.mxu0 0.0
      %1544 = vmatmul.mubr.f32.gmra.mrb[0].mxu0 %v1384
      %v1545 = vpop.f32.mrb[0].mxu0
      %v1546 = vadd.f32 0.0, %v1545
      %v1547 = vpop.f32.mrb[0].mxu0
      %1548 = vmatprep.mubr.f32.mxu0 0.0
      %1549 = vmatmul.mubr.f32.gmra.mrb[0].mxu0 %v1387
      %v1550 = vpop.f32.mrb[0].mxu0
      %v1551 = vadd.f32 0.0, %v1550
      %v1552 = vpop.f32.mrb[0].mxu0
      %1553 = vmatprep.mubr.f32.mxu0 0.0
      %1554 = vmatmul.mubr.f32.gmra.mrb[0].mxu0 %v1390
      %v1555 = vpop.f32.mrb[0].mxu0
      %v1556 = vadd.f32 0.0, %v1555
      %v1557 = vpop.f32.mrb[0].mxu0
      %1558 = vmatprep.mubr.f32.mxu0 0.0
      %1559 = vmatmul.mubr.f32.gmra.mrb[0].mxu0 %v1393
      %v1560 = vpop.f32.mrb[0].mxu0
      %v1561 = vadd.f32 0.0, %v1560
      %v1562 = vpop.f32.mrb[0].mxu0
      %1563 = vmatprep.mubr.f32.mxu0 0.0
      %1564 = vmatmul.mubr.f32.gmra.mrb[0].mxu0 %v1396
      %v1565 = vpop.f32.mrb[0].mxu0
      %v1566 = vadd.f32 0.0, %v1565
      %v1567 = vpop.f32.mrb[0].mxu0
      %1568 = vmatprep.mubr.f32.mxu0 0.0
      %1569 = vmatmul.mubr.f32.gmra.mrb[0].mxu0 %v1399
      %v1570 = vpop.f32.mrb[0].mxu0
      %v1571 = vadd.f32 0.0, %v1570
      %v1572 = vpop.f32.mrb[0].mxu0
      %1573 = vmatprep.mubr.f32.mxu0 0.0
      %1574 = vmatmul.mubr.f32.gmra.mrb[0].mxu0 %v1402
      %v1575 = vpop.f32.mrb[0].mxu0
      %v1576 = vadd.f32 0.0, %v1575
      %v1577 = vpop.f32.mrb[0].mxu0
      %1578 = vmatprep.mubr.f32.mxu0 0.0
      %1579 = vmatmul.mubr.f32.gmra.mrb[0].mxu0 %v1405
      %v1580 = vpop.f32.mrb[0].mxu0
      %v1581 = vadd.f32 0.0, %v1580
      %v1582 = vpop.f32.mrb[0].mxu0
      %1583 = vmatprep.mubr.f32.mxu0 0.0
      %1584 = vmatmul.mubr.f32.gmra.mrb[0].mxu0 %v1408
      %v1585 = vpop.f32.mrb[0].mxu0
      %v1586 = vadd.f32 0.0, %v1585
      %v1587 = vpop.f32.mrb[0].mxu0
      %1588 = vmatprep.mubr.f32.mxu0 0.0
      %1589 = vmatmul.mubr.f32.gmra.mrb[0].mxu0 %v1411
      %v1590 = vpop.f32.mrb[0].mxu0
      %v1591 = vadd.f32 0.0, %v1590
      %v1592 = vpop.f32.mrb[0].mxu0
      %1593 = vmatprep.mubr.f32.mxu0 0.0
      %1594 = vmatmul.mubr.f32.gmra.mrb[0].mxu0 %v1414
      %v1595 = vpop.f32.mrb[0].mxu0
      %v1596 = vadd.f32 0.0, %v1595
      %v1597 = vpop.f32.mrb[0].mxu0
      %1598 = vmatprep.mubr.f32.mxu0 0.0
      %1599 = vmatmul.mubr.f32.gmra.mrb[0].mxu0 %v1417
      %v1600 = vpop.f32.mrb[0].mxu0
      %v1601 = vadd.f32 0.0, %v1600
      %v1602 = vpop.f32.mrb[0].mxu0
      %1603 = vmatprep.mubr.f32.mxu0 0.0
      %1604 = vmatmul.mubr.f32.gmra.mrb[0].mxu0 %v1420
      %v1605 = vpop.f32.mrb[0].mxu0
      %v1606 = vadd.f32 0.0, %v1605
      %v1607 = vpop.f32.mrb[0].mxu0
      %1608 = vmatprep.mubr.f32.mxu0 0.0
      %1609 = vmatmul.mubr.f32.gmra.mrb[0].mxu0 %v1423
      %v1610 = vpop.f32.mrb[0].mxu0
      %v1611 = vadd.f32 0.0, %v1610
      %v1612 = vpop.f32.mrb[0].mxu0
      %1613 = vmatprep.mubr.f32.mxu0 0.0
      %1614 = vmatmul.mubr.f32.gmra.mrb[0].mxu0 %v1426
      %v1615 = vpop.f32.mrb[0].mxu0
      %v1616 = vadd.f32 0.0, %v1615
      %v1617 = vpop.f32.mrb[0].mxu0
      %1618 = vmatprep.mubr.f32.mxu0 0.0
      %1619 = vmatmul.mubr.f32.gmra.mrb[0].mxu0 %v1429
      %v1620 = vpop.f32.mrb[0].mxu0
      %v1621 = vadd.f32 0.0, %v1620
      %v1622 = vpop.f32.mrb[0].mxu0
      %1623 = vmatprep.mubr.f32.mxu0 0.0
      %1624 = vmatmul.mubr.f32.gmra.mrb[0].mxu0 %v1432
      %v1625 = vpop.f32.mrb[0].mxu0
      %v1626 = vadd.f32 0.0, %v1625
      %v1627 = vpop.f32.mrb[0].mxu0
      %1628 = vmatprep.mubr.f32.mxu0 0.0
      %1629 = vmatmul.mubr.f32.gmra.mrb[0].mxu0 %v1435
      %v1630 = vpop.f32.mrb[0].mxu0
      %v1631 = vadd.f32 0.0, %v1630
      %v1632 = vpop.f32.mrb[0].mxu0
      %1633 = vmatprep.mubr.f32.mxu0 0.0
      %1634 = vmatmul.mubr.f32.gmra.mrb[0].mxu0 %v1438
      %v1635 = vpop.f32.mrb[0].mxu0
      %v1636 = vadd.f32 0.0, %v1635
      %v1637 = vpop.f32.mrb[0].mxu0
      %1638 = vmatprep.mubr.f32.mxu0 0.0
      %1639 = vmatmul.mubr.f32.gmra.mrb[0].mxu0 %v1441
      %v1640 = vpop.f32.mrb[0].mxu0
      %v1641 = vadd.f32 0.0, %v1640
      %v1642 = vpop.f32.mrb[0].mxu0
      %1643 = vmatprep.mubr.f32.mxu0 0.0
      %1644 = vmatmul.mubr.f32.gmra.mrb[0].mxu0 %v1444
      %v1645 = vpop.f32.mrb[0].mxu0
      %v1646 = vadd.f32 0.0, %v1645
      %v1647 = vpop.f32.mrb[0].mxu0
      %1648 = vmatprep.mubr.f32.mxu0 0.0
      %1649 = vmatmul.mubr.f32.gmra.mrb[0].mxu0 %v1447
      %v1650 = vpop.f32.mrb[0].mxu0
      %v1651 = vadd.f32 0.0, %v1650
      %v1652 = vpop.f32.mrb[0].mxu0
      %1653 = vmatprep.mubr.f32.mxu0 0.0
      %1654 = vmatmul.mubr.f32.gmra.mrb[0].mxu0 %v1450
      %v1655 = vpop.f32.mrb[0].mxu0
      %v1656 = vadd.f32 0.0, %v1655
      %v1657 = vpop.f32.mrb[0].mxu0
      %1658 = vmatprep.mubr.f32.mxu0 0.0
      %1659 = vmatmul.mubr.f32.gmra.mrb[0].mxu0 %v1453
      %v1660 = vpop.f32.mrb[0].mxu0
      %v1661 = vadd.f32 0.0, %v1660
      %v1662 = vpop.f32.mrb[0].mxu0
      %1663 = vmatprep.mubr.f32.mxu0 0.0
      %1664 = vmatmul.mubr.f32.gmra.mrb[0].mxu0 %v1456
      %v1665 = vpop.f32.mrb[0].mxu0
      %v1666 = vadd.f32 0.0, %v1665
      %v1667 = vpop.f32.mrb[0].mxu0
      %1668 = vmatprep.mubr.f32.mxu0 0.0
      %1669 = vmatmul.mubr.f32.gmra.mrb[0].mxu0 %v1459
      %v1670 = vpop.f32.mrb[0].mxu0
      %v1671 = vadd.f32 0.0, %v1670
      %v1672 = vpop.f32.mrb[0].mxu0
      %1673 = vmatprep.mubr.f32.mxu0 0.0
      %1674 = vmatmul.mubr.f32.gmra.mrb[0].mxu0 %v1462
      %v1675 = vpop.f32.mrb[0].mxu0
      %v1676 = vadd.f32 0.0, %v1675
      %v1677 = vpop.f32.mrb[0].mxu0
      %1678 = vmatprep.mubr.f32.mxu0 0.0
      %1679 = vmatmul.mubr.f32.gmra.mrb[0].mxu0 %v1465
      %v1680 = vpop.f32.mrb[0].mxu0
      %v1681 = vadd.f32 0.0, %v1680
      %v1682 = vpop.f32.mrb[0].mxu0
      %1683 = vmatprep.mubr.f32.mxu0 0.0
      %1684 = vmatmul.mubr.f32.gmra.mrb[0].mxu0 %v1468
      %v1685 = vpop.f32.mrb[0].mxu0
      %v1686 = vadd.f32 0.0, %v1685
      %v1687 = vpop.f32.mrb[0].mxu0
      %1688 = vmatprep.mubr.f32.mxu0 0.0
      %1689 = vmatmul.mubr.f32.gmra.mrb[0].mxu0 %v1471
      %v1690 = vpop.f32.mrb[0].mxu0
      %v1691 = vadd.f32 0.0, %v1690
      %v1692 = vpop.f32.mrb[0].mxu0
      %1693 = vmatprep.mubr.f32.mxu0 0.0
      %1694 = vmatmul.mubr.f32.gmra.mrb[0].mxu0 %v1474
      %v1695 = vpop.f32.mrb[0].mxu0
      %v1696 = vadd.f32 0.0, %v1695
      %v1697 = vpop.f32.mrb[0].mxu0
      %1698 = vmatprep.mubr.f32.mxu0 0.0
      %1699 = vmatmul.mubr.f32.gmra.mrb[0].mxu0 %v1477
      %v1700 = vpop.f32.mrb[0].mxu0
      %v1701 = vadd.f32 0.0, %v1700
      %v1702 = vpop.f32.mrb[0].mxu0
      %1703 = vdwg.mxu0
      %v1705 = vsel %vm759, %v1310, 0
      %v1708 = vsel %vm759, %v1311, 0
      %v1711 = vsel %vm759, %v1312, 0
      %v1714 = vsel %vm759, %v1313, 0
      %v1717 = vsel %vm759, %v1314, 0
      %v1720 = vsel %vm759, %v1315, 0
      %v1723 = vsel %vm759, %v1316, 0
      %v1726 = vsel %vm759, %v1317, 0
      %v1729 = vsel %vm759, %v1318, 0
      %v1732 = vsel %vm759, %v1319, 0
      %v1735 = vsel %vm759, %v1320, 0
      %v1738 = vsel %vm759, %v1321, 0
      %v1741 = vsel %vm759, %v1322, 0
      %v1744 = vsel %vm759, %v1323, 0
      %v1747 = vsel %vm759, %v1324, 0
      %v1750 = vsel %vm759, %v1325, 0
      %v1753 = vsel %vm759, %v1326, 0
      %v1756 = vsel %vm759, %v1327, 0
      %v1759 = vsel %vm759, %v1328, 0
      %v1762 = vsel %vm759, %v1329, 0
      %v1765 = vsel %vm759, %v1330, 0
      %v1768 = vsel %vm759, %v1331, 0
      %v1771 = vsel %vm759, %v1332, 0
      %v1774 = vsel %vm759, %v1333, 0
      %v1777 = vsel %vm759, %v1334, 0
      %v1780 = vsel %vm759, %v1335, 0
      %v1783 = vsel %vm759, %v1336, 0
      %v1786 = vsel %vm759, %v1337, 0
      %v1789 = vsel %vm759, %v1338, 0
      %v1792 = vsel %vm759, %v1339, 0
      %v1795 = vsel %vm759, %v1340, 0
      %v1798 = vsel %vm759, %v1341, 0
      %1800 = vmatprep.subr.mxu0 0.0
      %1801 = vmatpush1.msra.mxu0 %v1342
      %1802 = vmatprep.subr.mxu0 0.0
      %1803 = vmatpush1.msra.mxu0 %v1343
      %1804 = vmatprep.subr.mxu0 0.0
      %1805 = vmatpush1.msra.mxu0 %v1344
      %1806 = vmatprep.subr.mxu0 0.0
      %1807 = vmatpush1.msra.mxu0 %v1345
      %1808 = vmatprep.subr.mxu0 0.0
      %1809 = vmatpush1.msra.mxu0 0.0
      %1810 = vmatprep.subr.mxu0 0.0
      %1811 = vmatpush1.msra.mxu0 0.0
      %1812 = vmatprep.subr.mxu0 0.0
      %1813 = vmatpush1.msra.mxu0 0.0
      %1814 = vmatprep.subr.mxu0 0.0
      %1815 = vmatpush1.msra.mxu0 0.0
      %1816 = vmatprep.subr.mxu0 0.0
      %1817 = vmatpush1.msra.mxu0 0.0
      %1818 = vmatprep.subr.mxu0 0.0
      %1819 = vmatpush1.msra.mxu0 0.0
      %1820 = vmatprep.subr.mxu0 0.0
      %1821 = vmatpush1.msra.mxu0 0.0
      %1822 = vmatprep.subr.mxu0 0.0
      %1823 = vmatpush1.msra.mxu0 0.0
      %1824 = vmatprep.subr.mxu0 0.0
      %1825 = vmatpush1.msra.mxu0 0.0
      %1826 = vmatprep.subr.mxu0 0.0
      %1827 = vmatpush1.msra.mxu0 0.0
      %1828 = vmatprep.subr.mxu0 0.0
      %1829 = vmatpush1.msra.mxu0 0.0
      %1830 = vmatprep.subr.mxu0 0.0
      %1831 = vmatpush1.msra.mxu0 0.0
      %1832 = vmatprep.subr.mxu0 0.0
      %1833 = vmatpush1.msra.mxu0 0.0
      %1834 = vmatprep.subr.mxu0 0.0
      %1835 = vmatpush1.msra.mxu0 0.0
      %1836 = vmatprep.subr.mxu0 0.0
      %1837 = vmatpush1.msra.mxu0 0.0
      %1838 = vmatprep.subr.mxu0 0.0
      %1839 = vmatpush1.msra.mxu0 0.0
      %1840 = vmatprep.subr.mxu0 0.0
      %1841 = vmatpush1.msra.mxu0 0.0
      %1842 = vmatprep.subr.mxu0 0.0
      %1843 = vmatpush1.msra.mxu0 0.0
      %1844 = vmatprep.subr.mxu0 0.0
      %1845 = vmatpush1.msra.mxu0 0.0
      %1846 = vmatprep.subr.mxu0 0.0
      %1847 = vmatpush1.msra.mxu0 0.0
      %1848 = vmatprep.subr.mxu0 0.0
      %1849 = vmatpush1.msra.mxu0 0.0
      %1850 = vmatprep.subr.mxu0 0.0
      %1851 = vmatpush1.msra.mxu0 0.0
      %1852 = vmatprep.subr.mxu0 0.0
      %1853 = vmatpush1.msra.mxu0 0.0
      %1854 = vmatprep.subr.mxu0 0.0
      %1855 = vmatpush1.msra.mxu0 0.0
      %1856 = vmatprep.subr.mxu0 0.0
      %1857 = vmatpush1.msra.mxu0 0.0
      %1858 = vmatprep.subr.mxu0 0.0
      %1859 = vmatpush1.msra.mxu0 0.0
      %1860 = vmatprep.subr.mxu0 0.0
      %1861 = vmatpush1.msra.mxu0 0.0
      %1862 = vmatprep.subr.mxu0 0.0
      %1863 = vmatpush1.msra.mxu0 0.0
      %1864 = vmatprep.mubr.f32.mxu0 0.0
      %1865 = vmatmul.mubr.f32.gmra.mrb[0].mxu0 %v1705
      %v1866 = vpop.f32.mrb[0].mxu0
      %v1867 = vadd.f32 %v1546, %v1866
      %v1868 = vpop.f32.mrb[0].mxu0
      %1869 = vmatprep.mubr.f32.mxu0 0.0
      %1870 = vmatmul.mubr.f32.gmra.mrb[0].mxu0 %v1708
      %v1871 = vpop.f32.mrb[0].mxu0
      %v1872 = vadd.f32 %v1551, %v1871
      %v1873 = vpop.f32.mrb[0].mxu0
      %1874 = vmatprep.mubr.f32.mxu0 0.0
      %1875 = vmatmul.mubr.f32.gmra.mrb[0].mxu0 %v1711
      %v1876 = vpop.f32.mrb[0].mxu0
      %v1877 = vadd.f32 %v1556, %v1876
      %v1878 = vpop.f32.mrb[0].mxu0
      %1879 = vmatprep.mubr.f32.mxu0 0.0
      %1880 = vmatmul.mubr.f32.gmra.mrb[0].mxu0 %v1714
      %v1881 = vpop.f32.mrb[0].mxu0
      %v1882 = vadd.f32 %v1561, %v1881
      %v1883 = vpop.f32.mrb[0].mxu0
      %1884 = vmatprep.mubr.f32.mxu0 0.0
      %1885 = vmatmul.mubr.f32.gmra.mrb[0].mxu0 %v1717
      %v1886 = vpop.f32.mrb[0].mxu0
      %v1887 = vadd.f32 %v1566, %v1886
      %v1888 = vpop.f32.mrb[0].mxu0
      %1889 = vmatprep.mubr.f32.mxu0 0.0
      %1890 = vmatmul.mubr.f32.gmra.mrb[0].mxu0 %v1720
      %v1891 = vpop.f32.mrb[0].mxu0
      %v1892 = vadd.f32 %v1571, %v1891
      %v1893 = vpop.f32.mrb[0].mxu0
      %1894 = vmatprep.mubr.f32.mxu0 0.0
      %1895 = vmatmul.mubr.f32.gmra.mrb[0].mxu0 %v1723
      %v1896 = vpop.f32.mrb[0].mxu0
      %v1897 = vadd.f32 %v1576, %v1896
      %v1898 = vpop.f32.mrb[0].mxu0
      %1899 = vmatprep.mubr.f32.mxu0 0.0
      %1900 = vmatmul.mubr.f32.gmra.mrb[0].mxu0 %v1726
      %v1901 = vpop.f32.mrb[0].mxu0
      %v1902 = vadd.f32 %v1581, %v1901
      %v1903 = vpop.f32.mrb[0].mxu0
      %1904 = vmatprep.mubr.f32.mxu0 0.0
      %1905 = vmatmul.mubr.f32.gmra.mrb[0].mxu0 %v1729
      %v1906 = vpop.f32.mrb[0].mxu0
      %v1907 = vadd.f32 %v1586, %v1906
      %v1908 = vpop.f32.mrb[0].mxu0
      %1909 = vmatprep.mubr.f32.mxu0 0.0
      %1910 = vmatmul.mubr.f32.gmra.mrb[0].mxu0 %v1732
      %v1911 = vpop.f32.mrb[0].mxu0
      %v1912 = vadd.f32 %v1591, %v1911
      %v1913 = vpop.f32.mrb[0].mxu0
      %1914 = vmatprep.mubr.f32.mxu0 0.0
      %1915 = vmatmul.mubr.f32.gmra.mrb[0].mxu0 %v1735
      %v1916 = vpop.f32.mrb[0].mxu0
      %v1917 = vadd.f32 %v1596, %v1916
      %v1918 = vpop.f32.mrb[0].mxu0
      %1919 = vmatprep.mubr.f32.mxu0 0.0
      %1920 = vmatmul.mubr.f32.gmra.mrb[0].mxu0 %v1738
      %v1921 = vpop.f32.mrb[0].mxu0
      %v1922 = vadd.f32 %v1601, %v1921
      %v1923 = vpop.f32.mrb[0].mxu0
      %1924 = vmatprep.mubr.f32.mxu0 0.0
      %1925 = vmatmul.mubr.f32.gmra.mrb[0].mxu0 %v1741
      %v1926 = vpop.f32.mrb[0].mxu0
      %v1927 = vadd.f32 %v1606, %v1926
      %v1928 = vpop.f32.mrb[0].mxu0
      %1929 = vmatprep.mubr.f32.mxu0 0.0
      %1930 = vmatmul.mubr.f32.gmra.mrb[0].mxu0 %v1744
      %v1931 = vpop.f32.mrb[0].mxu0
      %v1932 = vadd.f32 %v1611, %v1931
      %v1933 = vpop.f32.mrb[0].mxu0
      %1934 = vmatprep.mubr.f32.mxu0 0.0
      %1935 = vmatmul.mubr.f32.gmra.mrb[0].mxu0 %v1747
      %v1936 = vpop.f32.mrb[0].mxu0
      %v1937 = vadd.f32 %v1616, %v1936
      %v1938 = vpop.f32.mrb[0].mxu0
      %1939 = vmatprep.mubr.f32.mxu0 0.0
      %1940 = vmatmul.mubr.f32.gmra.mrb[0].mxu0 %v1750
      %v1941 = vpop.f32.mrb[0].mxu0
      %v1942 = vadd.f32 %v1621, %v1941
      %v1943 = vpop.f32.mrb[0].mxu0
      %1944 = vmatprep.mubr.f32.mxu0 0.0
      %1945 = vmatmul.mubr.f32.gmra.mrb[0].mxu0 %v1753
      %v1946 = vpop.f32.mrb[0].mxu0
      %v1947 = vadd.f32 %v1626, %v1946
      %v1948 = vpop.f32.mrb[0].mxu0
      %1949 = vmatprep.mubr.f32.mxu0 0.0
      %1950 = vmatmul.mubr.f32.gmra.mrb[0].mxu0 %v1756
      %v1951 = vpop.f32.mrb[0].mxu0
      %v1952 = vadd.f32 %v1631, %v1951
      %v1953 = vpop.f32.mrb[0].mxu0
      %1954 = vmatprep.mubr.f32.mxu0 0.0
      %1955 = vmatmul.mubr.f32.gmra.mrb[0].mxu0 %v1759
      %v1956 = vpop.f32.mrb[0].mxu0
      %v1957 = vadd.f32 %v1636, %v1956
      %v1958 = vpop.f32.mrb[0].mxu0
      %1959 = vmatprep.mubr.f32.mxu0 0.0
      %1960 = vmatmul.mubr.f32.gmra.mrb[0].mxu0 %v1762
      %v1961 = vpop.f32.mrb[0].mxu0
      %v1962 = vadd.f32 %v1641, %v1961
      %v1963 = vpop.f32.mrb[0].mxu0
      %1964 = vmatprep.mubr.f32.mxu0 0.0
      %1965 = vmatmul.mubr.f32.gmra.mrb[0].mxu0 %v1765
      %v1966 = vpop.f32.mrb[0].mxu0
      %v1967 = vadd.f32 %v1646, %v1966
      %v1968 = vpop.f32.mrb[0].mxu0
      %1969 = vmatprep.mubr.f32.mxu0 0.0
      %1970 = vmatmul.mubr.f32.gmra.mrb[0].mxu0 %v1768
      %v1971 = vpop.f32.mrb[0].mxu0
      %v1972 = vadd.f32 %v1651, %v1971
      %v1973 = vpop.f32.mrb[0].mxu0
      %1974 = vmatprep.mubr.f32.mxu0 0.0
      %1975 = vmatmul.mubr.f32.gmra.mrb[0].mxu0 %v1771
      %v1976 = vpop.f32.mrb[0].mxu0
      %v1977 = vadd.f32 %v1656, %v1976
      %v1978 = vpop.f32.mrb[0].mxu0
      %1979 = vmatprep.mubr.f32.mxu0 0.0
      %1980 = vmatmul.mubr.f32.gmra.mrb[0].mxu0 %v1774
      %v1981 = vpop.f32.mrb[0].mxu0
      %v1982 = vadd.f32 %v1661, %v1981
      %v1983 = vpop.f32.mrb[0].mxu0
      %1984 = vmatprep.mubr.f32.mxu0 0.0
      %1985 = vmatmul.mubr.f32.gmra.mrb[0].mxu0 %v1777
      %v1986 = vpop.f32.mrb[0].mxu0
      %v1987 = vadd.f32 %v1666, %v1986
      %v1988 = vpop.f32.mrb[0].mxu0
      %1989 = vmatprep.mubr.f32.mxu0 0.0
      %1990 = vmatmul.mubr.f32.gmra.mrb[0].mxu0 %v1780
      %v1991 = vpop.f32.mrb[0].mxu0
      %v1992 = vadd.f32 %v1671, %v1991
      %v1993 = vpop.f32.mrb[0].mxu0
      %1994 = vmatprep.mubr.f32.mxu0 0.0
      %1995 = vmatmul.mubr.f32.gmra.mrb[0].mxu0 %v1783
      %v1996 = vpop.f32.mrb[0].mxu0
      %v1997 = vadd.f32 %v1676, %v1996
      %v1998 = vpop.f32.mrb[0].mxu0
      %1999 = vmatprep.mubr.f32.mxu0 0.0
      %2000 = vmatmul.mubr.f32.gmra.mrb[0].mxu0 %v1786
      %v2001 = vpop.f32.mrb[0].mxu0
      %v2002 = vadd.f32 %v1681, %v2001
      %v2003 = vpop.f32.mrb[0].mxu0
      %2004 = vmatprep.mubr.f32.mxu0 0.0
      %2005 = vmatmul.mubr.f32.gmra.mrb[0].mxu0 %v1789
      %v2006 = vpop.f32.mrb[0].mxu0
      %v2007 = vadd.f32 %v1686, %v2006
      %v2008 = vpop.f32.mrb[0].mxu0
      %2009 = vmatprep.mubr.f32.mxu0 0.0
      %2010 = vmatmul.mubr.f32.gmra.mrb[0].mxu0 %v1792
      %v2011 = vpop.f32.mrb[0].mxu0
      %v2012 = vadd.f32 %v1691, %v2011
      %v2013 = vpop.f32.mrb[0].mxu0
      %2014 = vmatprep.mubr.f32.mxu0 0.0
      %2015 = vmatmul.mubr.f32.gmra.mrb[0].mxu0 %v1795
      %v2016 = vpop.f32.mrb[0].mxu0
      %v2017 = vadd.f32 %v1696, %v2016
      %v2018 = vpop.f32.mrb[0].mxu0
      %2019 = vmatprep.mubr.f32.mxu0 0.0
      %2020 = vmatmul.mubr.f32.gmra.mrb[0].mxu0 %v1798
      %v2021 = vpop.f32.mrb[0].mxu0
      %v2022 = vadd.f32 %v1701, %v2021
      %v2023 = vpop.f32.mrb[0].mxu0
      %2024 = vdwg.mxu0
      %v2025 = vld [vmem:[#allocation2 + $0x2] sm:$0xff]
      %v2026 = vld [vmem:[#allocation2 + $0xa] sm:$0xff]
      %v2027 = vld [vmem:[#allocation2 + $0x12] sm:$0xff]
      %v2028 = vld [vmem:[#allocation2 + $0x1a] sm:$0xff]
      %v2029 = vld [vmem:[#allocation2 + $0x22] sm:$0xff]
      %v2030 = vld [vmem:[#allocation2 + $0x2a] sm:$0xff]
      %v2031 = vld [vmem:[#allocation2 + $0x32] sm:$0xff]
      %v2032 = vld [vmem:[#allocation2 + $0x3a] sm:$0xff]
      %v2033 = vld [vmem:[#allocation2 + $0x42] sm:$0xff]
      %v2034 = vld [vmem:[#allocation2 + $0x4a] sm:$0xff]
      %v2035 = vld [vmem:[#allocation2 + $0x52] sm:$0xff]
      %v2036 = vld [vmem:[#allocation2 + $0x5a] sm:$0xff]
      %v2037 = vld [vmem:[#allocation2 + $0x62] sm:$0xff]
      %v2038 = vld [vmem:[#allocation2 + $0x6a] sm:$0xff]
      %v2039 = vld [vmem:[#allocation2 + $0x72] sm:$0xff]
      %v2040 = vld [vmem:[#allocation2 + $0x7a] sm:$0xff]
      %v2041 = vld [vmem:[#allocation2 + $0x82] sm:$0xff]
      %v2042 = vld [vmem:[#allocation2 + $0x8a] sm:$0xff]
      %v2043 = vld [vmem:[#allocation2 + $0x92] sm:$0xff]
      %v2044 = vld [vmem:[#allocation2 + $0x9a] sm:$0xff]
      %v2045 = vld [vmem:[#allocation2 + $0xa2] sm:$0xff]
      %v2046 = vld [vmem:[#allocation2 + $0xaa] sm:$0xff]
      %v2047 = vld [vmem:[#allocation2 + $0xb2] sm:$0xff]
      %v2048 = vld [vmem:[#allocation2 + $0xba] sm:$0xff]
      %v2049 = vld [vmem:[#allocation2 + $0xc2] sm:$0xff]
      %v2050 = vld [vmem:[#allocation2 + $0xca] sm:$0xff]
      %v2051 = vld [vmem:[#allocation2 + $0xd2] sm:$0xff]
      %v2052 = vld [vmem:[#allocation2 + $0xda] sm:$0xff]
      %v2053 = vld [vmem:[#allocation2 + $0xe2] sm:$0xff]
      %v2054 = vld [vmem:[#allocation2 + $0xea] sm:$0xff]
      %v2055 = vld [vmem:[#allocation2 + $0xf2] sm:$0xff]
      %v2056 = vld [vmem:[#allocation2 + $0xfa] sm:$0xff]
      %v2057 = vsel %vm1246, %v2025, 0.0
      %v2058 = vsel %vm1247, %v2026, 0.0
      %v2059 = vsel %vm1248, %v2027, 0.0
      %v2060 = vsel %vm1249, %v2028, 0.0
      %v2061 = vsel %vm1250, %v2029, 0.0
      %v2062 = vsel %vm1251, %v2030, 0.0
      %v2063 = vsel %vm1252, %v2031, 0.0
      %v2064 = vsel %vm1253, %v2032, 0.0
      %v2065 = vsel %vm1254, %v2033, 0.0
      %v2066 = vsel %vm1255, %v2034, 0.0
      %v2067 = vsel %vm1256, %v2035, 0.0
      %v2068 = vsel %vm1257, %v2036, 0.0
      %v2069 = vsel %vm1258, %v2037, 0.0
      %v2070 = vsel %vm1259, %v2038, 0.0
      %v2071 = vsel %vm1260, %v2039, 0.0
      %v2072 = vsel %vm1261, %v2040, 0.0
      %v2073 = vsel %vm1262, %v2041, 0.0
      %v2074 = vsel %vm1263, %v2042, 0.0
      %v2075 = vsel %vm1264, %v2043, 0.0
      %v2076 = vsel %vm1265, %v2044, 0.0
      %v2077 = vsel %vm1266, %v2045, 0.0
      %v2078 = vsel %vm1267, %v2046, 0.0
      %v2079 = vsel %vm1268, %v2047, 0.0
      %v2080 = vsel %vm1269, %v2048, 0.0
      %v2081 = vsel %vm1270, %v2049, 0.0
      %v2082 = vsel %vm1271, %v2050, 0.0
      %v2083 = vsel %vm1272, %v2051, 0.0
      %v2084 = vsel %vm1273, %v2052, 0.0
      %v2085 = vsel %vm1274, %v2053, 0.0
      %v2086 = vsel %vm1275, %v2054, 0.0
      %v2087 = vsel %vm1276, %v2055, 0.0
      %v2088 = vsel %vm1277, %v2056, 0.0
      %s2089 = scalar_lea.vmem %s6, 64
      %v2090 = vld [vmem:[%s2089] sm:$0xff]
      %v2091 = vld [vmem:[%s2089 + $0x8] sm:$0xff]
      %v2092 = vld [vmem:[%s2089 + $0x10] sm:$0xff]
      %v2093 = vld [vmem:[%s2089 + $0x18] sm:$0xff]
      %v2095 = vsel %vm759, %v2057, 0
      %v2098 = vsel %vm759, %v2058, 0
      %v2101 = vsel %vm759, %v2059, 0
      %v2104 = vsel %vm759, %v2060, 0
      %v2107 = vsel %vm759, %v2061, 0
      %v2110 = vsel %vm759, %v2062, 0
      %v2113 = vsel %vm759, %v2063, 0
      %v2116 = vsel %vm759, %v2064, 0
      %v2119 = vsel %vm759, %v2065, 0
      %v2122 = vsel %vm759, %v2066, 0
      %v2125 = vsel %vm759, %v2067, 0
      %v2128 = vsel %vm759, %v2068, 0
      %v2131 = vsel %vm759, %v2069, 0
      %v2134 = vsel %vm759, %v2070, 0
      %v2137 = vsel %vm759, %v2071, 0
      %v2140 = vsel %vm759, %v2072, 0
      %v2143 = vsel %vm759, %v2073, 0
      %v2146 = vsel %vm759, %v2074, 0
      %v2149 = vsel %vm759, %v2075, 0
      %v2152 = vsel %vm759, %v2076, 0
      %v2155 = vsel %vm759, %v2077, 0
      %v2158 = vsel %vm759, %v2078, 0
      %v2161 = vsel %vm759, %v2079, 0
      %v2164 = vsel %vm759, %v2080, 0
      %v2167 = vsel %vm759, %v2081, 0
      %v2170 = vsel %vm759, %v2082, 0
      %v2173 = vsel %vm759, %v2083, 0
      %v2176 = vsel %vm759, %v2084, 0
      %v2179 = vsel %vm759, %v2085, 0
      %v2182 = vsel %vm759, %v2086, 0
      %v2185 = vsel %vm759, %v2087, 0
      %v2188 = vsel %vm759, %v2088, 0
      %2190 = vmatprep.subr.mxu0 0.0
      %2191 = vmatpush1.msra.mxu0 %v2090
      %2192 = vmatprep.subr.mxu0 0.0
      %2193 = vmatpush1.msra.mxu0 %v2091
      %2194 = vmatprep.subr.mxu0 0.0
      %2195 = vmatpush1.msra.mxu0 %v2092
      %2196 = vmatprep.subr.mxu0 0.0
      %2197 = vmatpush1.msra.mxu0 %v2093
      %2198 = vmatprep.subr.mxu0 0.0
      %2199 = vmatpush1.msra.mxu0 0.0
      %2200 = vmatprep.subr.mxu0 0.0
      %2201 = vmatpush1.msra.mxu0 0.0
      %2202 = vmatprep.subr.mxu0 0.0
      %2203 = vmatpush1.msra.mxu0 0.0
      %2204 = vmatprep.subr.mxu0 0.0
      %2205 = vmatpush1.msra.mxu0 0.0
      %2206 = vmatprep.subr.mxu0 0.0
      %2207 = vmatpush1.msra.mxu0 0.0
      %2208 = vmatprep.subr.mxu0 0.0
      %2209 = vmatpush1.msra.mxu0 0.0
      %2210 = vmatprep.subr.mxu0 0.0
      %2211 = vmatpush1.msra.mxu0 0.0
      %2212 = vmatprep.subr.mxu0 0.0
      %2213 = vmatpush1.msra.mxu0 0.0
      %2214 = vmatprep.subr.mxu0 0.0
      %2215 = vmatpush1.msra.mxu0 0.0
      %2216 = vmatprep.subr.mxu0 0.0
      %2217 = vmatpush1.msra.mxu0 0.0
      %2218 = vmatprep.subr.mxu0 0.0
      %2219 = vmatpush1.msra.mxu0 0.0
      %2220 = vmatprep.subr.mxu0 0.0
      %2221 = vmatpush1.msra.mxu0 0.0
      %2222 = vmatprep.subr.mxu0 0.0
      %2223 = vmatpush1.msra.mxu0 0.0
      %2224 = vmatprep.subr.mxu0 0.0
      %2225 = vmatpush1.msra.mxu0 0.0
      %2226 = vmatprep.subr.mxu0 0.0
      %2227 = vmatpush1.msra.mxu0 0.0
      %2228 = vmatprep.subr.mxu0 0.0
      %2229 = vmatpush1.msra.mxu0 0.0
      %2230 = vmatprep.subr.mxu0 0.0
      %2231 = vmatpush1.msra.mxu0 0.0
      %2232 = vmatprep.subr.mxu0 0.0
      %2233 = vmatpush1.msra.mxu0 0.0
      %2234 = vmatprep.subr.mxu0 0.0
      %2235 = vmatpush1.msra.mxu0 0.0
      %2236 = vmatprep.subr.mxu0 0.0
      %2237 = vmatpush1.msra.mxu0 0.0
      %2238 = vmatprep.subr.mxu0 0.0
      %2239 = vmatpush1.msra.mxu0 0.0
      %2240 = vmatprep.subr.mxu0 0.0
      %2241 = vmatpush1.msra.mxu0 0.0
      %2242 = vmatprep.subr.mxu0 0.0
      %2243 = vmatpush1.msra.mxu0 0.0
      %2244 = vmatprep.subr.mxu0 0.0
      %2245 = vmatpush1.msra.mxu0 0.0
      %2246 = vmatprep.subr.mxu0 0.0
      %2247 = vmatpush1.msra.mxu0 0.0
      %2248 = vmatprep.subr.mxu0 0.0
      %2249 = vmatpush1.msra.mxu0 0.0
      %2250 = vmatprep.subr.mxu0 0.0
      %2251 = vmatpush1.msra.mxu0 0.0
      %2252 = vmatprep.subr.mxu0 0.0
      %2253 = vmatpush1.msra.mxu0 0.0
      %2254 = vmatprep.mubr.f32.mxu0 0.0
      %2255 = vmatmul.mubr.f32.gmra.mrb[0].mxu0 %v2095
      %v2256 = vpop.f32.mrb[0].mxu0
      %v2257 = vadd.f32 0.0, %v2256
      %v2258 = vpop.f32.mrb[0].mxu0
      %2259 = vmatprep.mubr.f32.mxu0 0.0
      %2260 = vmatmul.mubr.f32.gmra.mrb[0].mxu0 %v2098
      %v2261 = vpop.f32.mrb[0].mxu0
      %v2262 = vadd.f32 0.0, %v2261
      %v2263 = vpop.f32.mrb[0].mxu0
      %2264 = vmatprep.mubr.f32.mxu0 0.0
      %2265 = vmatmul.mubr.f32.gmra.mrb[0].mxu0 %v2101
      %v2266 = vpop.f32.mrb[0].mxu0
      %v2267 = vadd.f32 0.0, %v2266
      %v2268 = vpop.f32.mrb[0].mxu0
      %2269 = vmatprep.mubr.f32.mxu0 0.0
      %2270 = vmatmul.mubr.f32.gmra.mrb[0].mxu0 %v2104
      %v2271 = vpop.f32.mrb[0].mxu0
      %v2272 = vadd.f32 0.0, %v2271
      %v2273 = vpop.f32.mrb[0].mxu0
      %2274 = vmatprep.mubr.f32.mxu0 0.0
      %2275 = vmatmul.mubr.f32.gmra.mrb[0].mxu0 %v2107
      %v2276 = vpop.f32.mrb[0].mxu0
      %v2277 = vadd.f32 0.0, %v2276
      %v2278 = vpop.f32.mrb[0].mxu0
      %2279 = vmatprep.mubr.f32.mxu0 0.0
      %2280 = vmatmul.mubr.f32.gmra.mrb[0].mxu0 %v2110
      %v2281 = vpop.f32.mrb[0].mxu0
      %v2282 = vadd.f32 0.0, %v2281
      %v2283 = vpop.f32.mrb[0].mxu0
      %2284 = vmatprep.mubr.f32.mxu0 0.0
      %2285 = vmatmul.mubr.f32.gmra.mrb[0].mxu0 %v2113
      %v2286 = vpop.f32.mrb[0].mxu0
      %v2287 = vadd.f32 0.0, %v2286
      %v2288 = vpop.f32.mrb[0].mxu0
      %2289 = vmatprep.mubr.f32.mxu0 0.0
      %2290 = vmatmul.mubr.f32.gmra.mrb[0].mxu0 %v2116
      %v2291 = vpop.f32.mrb[0].mxu0
      %v2292 = vadd.f32 0.0, %v2291
      %v2293 = vpop.f32.mrb[0].mxu0
      %2294 = vmatprep.mubr.f32.mxu0 0.0
      %2295 = vmatmul.mubr.f32.gmra.mrb[0].mxu0 %v2119
      %v2296 = vpop.f32.mrb[0].mxu0
      %v2297 = vadd.f32 0.0, %v2296
      %v2298 = vpop.f32.mrb[0].mxu0
      %2299 = vmatprep.mubr.f32.mxu0 0.0
      %2300 = vmatmul.mubr.f32.gmra.mrb[0].mxu0 %v2122
      %v2301 = vpop.f32.mrb[0].mxu0
      %v2302 = vadd.f32 0.0, %v2301
      %v2303 = vpop.f32.mrb[0].mxu0
      %2304 = vmatprep.mubr.f32.mxu0 0.0
      %2305 = vmatmul.mubr.f32.gmra.mrb[0].mxu0 %v2125
      %v2306 = vpop.f32.mrb[0].mxu0
      %v2307 = vadd.f32 0.0, %v2306
      %v2308 = vpop.f32.mrb[0].mxu0
      %2309 = vmatprep.mubr.f32.mxu0 0.0
      %2310 = vmatmul.mubr.f32.gmra.mrb[0].mxu0 %v2128
      %v2311 = vpop.f32.mrb[0].mxu0
      %v2312 = vadd.f32 0.0, %v2311
      %v2313 = vpop.f32.mrb[0].mxu0
      %2314 = vmatprep.mubr.f32.mxu0 0.0
      %2315 = vmatmul.mubr.f32.gmra.mrb[0].mxu0 %v2131
      %v2316 = vpop.f32.mrb[0].mxu0
      %v2317 = vadd.f32 0.0, %v2316
      %v2318 = vpop.f32.mrb[0].mxu0
      %2319 = vmatprep.mubr.f32.mxu0 0.0
      %2320 = vmatmul.mubr.f32.gmra.mrb[0].mxu0 %v2134
      %v2321 = vpop.f32.mrb[0].mxu0
      %v2322 = vadd.f32 0.0, %v2321
      %v2323 = vpop.f32.mrb[0].mxu0
      %2324 = vmatprep.mubr.f32.mxu0 0.0
      %2325 = vmatmul.mubr.f32.gmra.mrb[0].mxu0 %v2137
      %v2326 = vpop.f32.mrb[0].mxu0
      %v2327 = vadd.f32 0.0, %v2326
      %v2328 = vpop.f32.mrb[0].mxu0
      %2329 = vmatprep.mubr.f32.mxu0 0.0
      %2330 = vmatmul.mubr.f32.gmra.mrb[0].mxu0 %v2140
      %v2331 = vpop.f32.mrb[0].mxu0
      %v2332 = vadd.f32 0.0, %v2331
      %v2333 = vpop.f32.mrb[0].mxu0
      %2334 = vmatprep.mubr.f32.mxu0 0.0
      %2335 = vmatmul.mubr.f32.gmra.mrb[0].mxu0 %v2143
      %v2336 = vpop.f32.mrb[0].mxu0
      %v2337 = vadd.f32 0.0, %v2336
      %v2338 = vpop.f32.mrb[0].mxu0
      %2339 = vmatprep.mubr.f32.mxu0 0.0
      %2340 = vmatmul.mubr.f32.gmra.mrb[0].mxu0 %v2146
      %v2341 = vpop.f32.mrb[0].mxu0
      %v2342 = vadd.f32 0.0, %v2341
      %v2343 = vpop.f32.mrb[0].mxu0
      %2344 = vmatprep.mubr.f32.mxu0 0.0
      %2345 = vmatmul.mubr.f32.gmra.mrb[0].mxu0 %v2149
      %v2346 = vpop.f32.mrb[0].mxu0
      %v2347 = vadd.f32 0.0, %v2346
      %v2348 = vpop.f32.mrb[0].mxu0
      %2349 = vmatprep.mubr.f32.mxu0 0.0
      %2350 = vmatmul.mubr.f32.gmra.mrb[0].mxu0 %v2152
      %v2351 = vpop.f32.mrb[0].mxu0
      %v2352 = vadd.f32 0.0, %v2351
      %v2353 = vpop.f32.mrb[0].mxu0
      %2354 = vmatprep.mubr.f32.mxu0 0.0
      %2355 = vmatmul.mubr.f32.gmra.mrb[0].mxu0 %v2155
      %v2356 = vpop.f32.mrb[0].mxu0
      %v2357 = vadd.f32 0.0, %v2356
      %v2358 = vpop.f32.mrb[0].mxu0
      %2359 = vmatprep.mubr.f32.mxu0 0.0
      %2360 = vmatmul.mubr.f32.gmra.mrb[0].mxu0 %v2158
      %v2361 = vpop.f32.mrb[0].mxu0
      %v2362 = vadd.f32 0.0, %v2361
      %v2363 = vpop.f32.mrb[0].mxu0
      %2364 = vmatprep.mubr.f32.mxu0 0.0
      %2365 = vmatmul.mubr.f32.gmra.mrb[0].mxu0 %v2161
      %v2366 = vpop.f32.mrb[0].mxu0
      %v2367 = vadd.f32 0.0, %v2366
      %v2368 = vpop.f32.mrb[0].mxu0
      %2369 = vmatprep.mubr.f32.mxu0 0.0
      %2370 = vmatmul.mubr.f32.gmra.mrb[0].mxu0 %v2164
      %v2371 = vpop.f32.mrb[0].mxu0
      %v2372 = vadd.f32 0.0, %v2371
      %v2373 = vpop.f32.mrb[0].mxu0
      %2374 = vmatprep.mubr.f32.mxu0 0.0
      %2375 = vmatmul.mubr.f32.gmra.mrb[0].mxu0 %v2167
      %v2376 = vpop.f32.mrb[0].mxu0
      %v2377 = vadd.f32 0.0, %v2376
      %v2378 = vpop.f32.mrb[0].mxu0
      %2379 = vmatprep.mubr.f32.mxu0 0.0
      %2380 = vmatmul.mubr.f32.gmra.mrb[0].mxu0 %v2170
      %v2381 = vpop.f32.mrb[0].mxu0
      %v2382 = vadd.f32 0.0, %v2381
      %v2383 = vpop.f32.mrb[0].mxu0
      %2384 = vmatprep.mubr.f32.mxu0 0.0
      %2385 = vmatmul.mubr.f32.gmra.mrb[0].mxu0 %v2173
      %v2386 = vpop.f32.mrb[0].mxu0
      %v2387 = vadd.f32 0.0, %v2386
      %v2388 = vpop.f32.mrb[0].mxu0
      %2389 = vmatprep.mubr.f32.mxu0 0.0
      %2390 = vmatmul.mubr.f32.gmra.mrb[0].mxu0 %v2176
      %v2391 = vpop.f32.mrb[0].mxu0
      %v2392 = vadd.f32 0.0, %v2391
      %v2393 = vpop.f32.mrb[0].mxu0
      %2394 = vmatprep.mubr.f32.mxu0 0.0
      %2395 = vmatmul.mubr.f32.gmra.mrb[0].mxu0 %v2179
      %v2396 = vpop.f32.mrb[0].mxu0
      %v2397 = vadd.f32 0.0, %v2396
      %v2398 = vpop.f32.mrb[0].mxu0
      %2399 = vmatprep.mubr.f32.mxu0 0.0
      %2400 = vmatmul.mubr.f32.gmra.mrb[0].mxu0 %v2182
      %v2401 = vpop.f32.mrb[0].mxu0
      %v2402 = vadd.f32 0.0, %v2401
      %v2403 = vpop.f32.mrb[0].mxu0
      %2404 = vmatprep.mubr.f32.mxu0 0.0
      %2405 = vmatmul.mubr.f32.gmra.mrb[0].mxu0 %v2185
      %v2406 = vpop.f32.mrb[0].mxu0
      %v2407 = vadd.f32 0.0, %v2406
      %v2408 = vpop.f32.mrb[0].mxu0
      %2409 = vmatprep.mubr.f32.mxu0 0.0
      %2410 = vmatmul.mubr.f32.gmra.mrb[0].mxu0 %v2188
      %v2411 = vpop.f32.mrb[0].mxu0
      %v2412 = vadd.f32 0.0, %v2411
      %v2413 = vpop.f32.mrb[0].mxu0
      %2414 = vdwg.mxu0
      %v2415 = vadd.f32 %v1867, %v2257
      %v2416 = vadd.f32 %v1872, %v2262
      %v2417 = vadd.f32 %v1877, %v2267
      %v2418 = vadd.f32 %v1882, %v2272
      %v2419 = vadd.f32 %v1887, %v2277
      %v2420 = vadd.f32 %v1892, %v2282
      %v2421 = vadd.f32 %v1897, %v2287
      %v2422 = vadd.f32 %v1902, %v2292
      %v2423 = vadd.f32 %v1907, %v2297
      %v2424 = vadd.f32 %v1912, %v2302
      %v2425 = vadd.f32 %v1917, %v2307
      %v2426 = vadd.f32 %v1922, %v2312
      %v2427 = vadd.f32 %v1927, %v2317
      %v2428 = vadd.f32 %v1932, %v2322
      %v2429 = vadd.f32 %v1937, %v2327
      %v2430 = vadd.f32 %v1942, %v2332
      %v2431 = vadd.f32 %v1947, %v2337
      %v2432 = vadd.f32 %v1952, %v2342
      %v2433 = vadd.f32 %v1957, %v2347
      %v2434 = vadd.f32 %v1962, %v2352
      %v2435 = vadd.f32 %v1967, %v2357
      %v2436 = vadd.f32 %v1972, %v2362
      %v2437 = vadd.f32 %v1977, %v2367
      %v2438 = vadd.f32 %v1982, %v2372
      %v2439 = vadd.f32 %v1987, %v2377
      %v2440 = vadd.f32 %v1992, %v2382
      %v2441 = vadd.f32 %v1997, %v2387
      %v2442 = vadd.f32 %v2002, %v2392
      %v2443 = vadd.f32 %v2007, %v2397
      %v2444 = vadd.f32 %v2012, %v2402
      %v2445 = vadd.f32 %v2017, %v2407
      %v2446 = vadd.f32 %v2022, %v2412
      %v2447 = vld [vmem:[#allocation2 + $0x10] sm:$0xff]
      %v2448 = vld [vmem:[#allocation2 + $0x18] sm:$0xff]
      %v2449 = vld [vmem:[#allocation2 + $0x20] sm:$0xff]
      %v2450 = vld [vmem:[#allocation2 + $0x28] sm:$0xff]
      %v2451 = vld [vmem:[#allocation2 + $0x30] sm:$0xff]
      %v2452 = vld [vmem:[#allocation2 + $0x38] sm:$0xff]
      %v2453 = vld [vmem:[#allocation2 + $0x40] sm:$0xff]
      %v2454 = vld [vmem:[#allocation2 + $0x48] sm:$0xff]
      %v2455 = vld [vmem:[#allocation2 + $0x50] sm:$0xff]
      %v2456 = vld [vmem:[#allocation2 + $0x58] sm:$0xff]
      %v2457 = vld [vmem:[#allocation2 + $0x60] sm:$0xff]
      %v2458 = vld [vmem:[#allocation2 + $0x68] sm:$0xff]
      %v2459 = vld [vmem:[#allocation2 + $0x70] sm:$0xff]
      %v2460 = vld [vmem:[#allocation2 + $0x78] sm:$0xff]
      %v2461 = vld [vmem:[#allocation2 + $0x80] sm:$0xff]
      %v2462 = vld [vmem:[#allocation2 + $0x88] sm:$0xff]
      %v2463 = vld [vmem:[#allocation2 + $0x90] sm:$0xff]
      %v2464 = vld [vmem:[#allocation2 + $0x98] sm:$0xff]
      %v2465 = vld [vmem:[#allocation2 + $0xa0] sm:$0xff]
      %v2466 = vld [vmem:[#allocation2 + $0xa8] sm:$0xff]
      %v2467 = vld [vmem:[#allocation2 + $0xb0] sm:$0xff]
      %v2468 = vld [vmem:[#allocation2 + $0xb8] sm:$0xff]
      %v2469 = vld [vmem:[#allocation2 + $0xc0] sm:$0xff]
      %v2470 = vld [vmem:[#allocation2 + $0xc8] sm:$0xff]
      %v2471 = vld [vmem:[#allocation2 + $0xd0] sm:$0xff]
      %v2472 = vld [vmem:[#allocation2 + $0xd8] sm:$0xff]
      %v2473 = vld [vmem:[#allocation2 + $0xe0] sm:$0xff]
      %v2474 = vld [vmem:[#allocation2 + $0xe8] sm:$0xff]
      %v2475 = vld [vmem:[#allocation2 + $0xf0] sm:$0xff]
      %v2476 = vld [vmem:[#allocation2 + $0xf8] sm:$0xff]
      %v2477 = vld [vmem:[#allocation2 + $0x100] sm:$0xff]
      %v2478 = vld [vmem:[#allocation2 + $0x108] sm:$0xff]
      %v2479 = vsel %vm1214, %v2447, 0.0
      %v2480 = vsel %vm1215, %v2448, 0.0
      %v2481 = vsel %vm1216, %v2449, 0.0
      %v2482 = vsel %vm1217, %v2450, 0.0
      %v2483 = vsel %vm1218, %v2451, 0.0
      %v2484 = vsel %vm1219, %v2452, 0.0
      %v2485 = vsel %vm1220, %v2453, 0.0
      %v2486 = vsel %vm1221, %v2454, 0.0
      %v2487 = vsel %vm1222, %v2455, 0.0
      %v2488 = vsel %vm1223, %v2456, 0.0
      %v2489 = vsel %vm1224, %v2457, 0.0
      %v2490 = vsel %vm1225, %v2458, 0.0
      %v2491 = vsel %vm1226, %v2459, 0.0
      %v2492 = vsel %vm1227, %v2460, 0.0
      %v2493 = vsel %vm1228, %v2461, 0.0
      %v2494 = vsel %vm1229, %v2462, 0.0
      %v2495 = vsel %vm1230, %v2463, 0.0
      %v2496 = vsel %vm1231, %v2464, 0.0
      %v2497 = vsel %vm1232, %v2465, 0.0
      %v2498 = vsel %vm1233, %v2466, 0.0
      %v2499 = vsel %vm1234, %v2467, 0.0
      %v2500 = vsel %vm1235, %v2468, 0.0
      %v2501 = vsel %vm1236, %v2469, 0.0
      %v2502 = vsel %vm1237, %v2470, 0.0
      %v2503 = vsel %vm1238, %v2471, 0.0
      %v2504 = vsel %vm1239, %v2472, 0.0
      %v2505 = vsel %vm1240, %v2473, 0.0
      %v2506 = vsel %vm1241, %v2474, 0.0
      %v2507 = vsel %vm1242, %v2475, 0.0
      %v2508 = vsel %vm1243, %v2476, 0.0
      %v2509 = vsel %vm1244, %v2477, 0.0
      %v2510 = vsel %vm1245, %v2478, 0.0
      %s2511 = scalar_lea.vmem %s6, 96
      %v2512 = vld [vmem:[%s2511] sm:$0xff]
      %v2513 = vld [vmem:[%s2511 + $0x8] sm:$0xff]
      %v2514 = vld [vmem:[%s2511 + $0x10] sm:$0xff]
      %v2515 = vld [vmem:[%s2511 + $0x18] sm:$0xff]
      %v2517 = vsel %vm759, %v2479, 0
      %v2520 = vsel %vm759, %v2480, 0
      %v2523 = vsel %vm759, %v2481, 0
      %v2526 = vsel %vm759, %v2482, 0
      %v2529 = vsel %vm759, %v2483, 0
      %v2532 = vsel %vm759, %v2484, 0
      %v2535 = vsel %vm759, %v2485, 0
      %v2538 = vsel %vm759, %v2486, 0
      %v2541 = vsel %vm759, %v2487, 0
      %v2544 = vsel %vm759, %v2488, 0
      %v2547 = vsel %vm759, %v2489, 0
      %v2550 = vsel %vm759, %v2490, 0
      %v2553 = vsel %vm759, %v2491, 0
      %v2556 = vsel %vm759, %v2492, 0
      %v2559 = vsel %vm759, %v2493, 0
      %v2562 = vsel %vm759, %v2494, 0
      %v2565 = vsel %vm759, %v2495, 0
      %v2568 = vsel %vm759, %v2496, 0
      %v2571 = vsel %vm759, %v2497, 0
      %v2574 = vsel %vm759, %v2498, 0
      %v2577 = vsel %vm759, %v2499, 0
      %v2580 = vsel %vm759, %v2500, 0
      %v2583 = vsel %vm759, %v2501, 0
      %v2586 = vsel %vm759, %v2502, 0
      %v2589 = vsel %vm759, %v2503, 0
      %v2592 = vsel %vm759, %v2504, 0
      %v2595 = vsel %vm759, %v2505, 0
      %v2598 = vsel %vm759, %v2506, 0
      %v2601 = vsel %vm759, %v2507, 0
      %v2604 = vsel %vm759, %v2508, 0
      %v2607 = vsel %vm759, %v2509, 0
      %v2610 = vsel %vm759, %v2510, 0
      %2612 = vmatprep.subr.mxu0 0.0
      %2613 = vmatpush1.msra.mxu0 %v2512
      %2614 = vmatprep.subr.mxu0 0.0
      %2615 = vmatpush1.msra.mxu0 %v2513
      %2616 = vmatprep.subr.mxu0 0.0
      %2617 = vmatpush1.msra.mxu0 %v2514
      %2618 = vmatprep.subr.mxu0 0.0
      %2619 = vmatpush1.msra.mxu0 %v2515
      %2620 = vmatprep.subr.mxu0 0.0
      %2621 = vmatpush1.msra.mxu0 0.0
      %2622 = vmatprep.subr.mxu0 0.0
      %2623 = vmatpush1.msra.mxu0 0.0
      %2624 = vmatprep.subr.mxu0 0.0
      %2625 = vmatpush1.msra.mxu0 0.0
      %2626 = vmatprep.subr.mxu0 0.0
      %2627 = vmatpush1.msra.mxu0 0.0
      %2628 = vmatprep.subr.mxu0 0.0
      %2629 = vmatpush1.msra.mxu0 0.0
      %2630 = vmatprep.subr.mxu0 0.0
      %2631 = vmatpush1.msra.mxu0 0.0
      %2632 = vmatprep.subr.mxu0 0.0
      %2633 = vmatpush1.msra.mxu0 0.0
      %2634 = vmatprep.subr.mxu0 0.0
      %2635 = vmatpush1.msra.mxu0 0.0
      %2636 = vmatprep.subr.mxu0 0.0
      %2637 = vmatpush1.msra.mxu0 0.0
      %2638 = vmatprep.subr.mxu0 0.0
      %2639 = vmatpush1.msra.mxu0 0.0
      %2640 = vmatprep.subr.mxu0 0.0
      %2641 = vmatpush1.msra.mxu0 0.0
      %2642 = vmatprep.subr.mxu0 0.0
      %2643 = vmatpush1.msra.mxu0 0.0
      %2644 = vmatprep.subr.mxu0 0.0
      %2645 = vmatpush1.msra.mxu0 0.0
      %2646 = vmatprep.subr.mxu0 0.0
      %2647 = vmatpush1.msra.mxu0 0.0
      %2648 = vmatprep.subr.mxu0 0.0
      %2649 = vmatpush1.msra.mxu0 0.0
      %2650 = vmatprep.subr.mxu0 0.0
      %2651 = vmatpush1.msra.mxu0 0.0
      %2652 = vmatprep.subr.mxu0 0.0
      %2653 = vmatpush1.msra.mxu0 0.0
      %2654 = vmatprep.subr.mxu0 0.0
      %2655 = vmatpush1.msra.mxu0 0.0
      %2656 = vmatprep.subr.mxu0 0.0
      %2657 = vmatpush1.msra.mxu0 0.0
      %2658 = vmatprep.subr.mxu0 0.0
      %2659 = vmatpush1.msra.mxu0 0.0
      %2660 = vmatprep.subr.mxu0 0.0
      %2661 = vmatpush1.msra.mxu0 0.0
      %2662 = vmatprep.subr.mxu0 0.0
      %2663 = vmatpush1.msra.mxu0 0.0
      %2664 = vmatprep.subr.mxu0 0.0
      %2665 = vmatpush1.msra.mxu0 0.0
      %2666 = vmatprep.subr.mxu0 0.0
      %2667 = vmatpush1.msra.mxu0 0.0
      %2668 = vmatprep.subr.mxu0 0.0
      %2669 = vmatpush1.msra.mxu0 0.0
      %2670 = vmatprep.subr.mxu0 0.0
      %2671 = vmatpush1.msra.mxu0 0.0
      %2672 = vmatprep.subr.mxu0 0.0
      %2673 = vmatpush1.msra.mxu0 0.0
      %2674 = vmatprep.subr.mxu0 0.0
      %2675 = vmatpush1.msra.mxu0 0.0
      %2676 = vmatprep.mubr.f32.mxu0 0.0
      %2677 = vmatmul.mubr.f32.gmra.mrb[0].mxu0 %v2517
      %v2678 = vpop.f32.mrb[0].mxu0
      %v2679 = vadd.f32 0.0, %v2678
      %v2680 = vpop.f32.mrb[0].mxu0
      %2681 = vmatprep.mubr.f32.mxu0 0.0
      %2682 = vmatmul.mubr.f32.gmra.mrb[0].mxu0 %v2520
      %v2683 = vpop.f32.mrb[0].mxu0
      %v2684 = vadd.f32 0.0, %v2683
      %v2685 = vpop.f32.mrb[0].mxu0
      %2686 = vmatprep.mubr.f32.mxu0 0.0
      %2687 = vmatmul.mubr.f32.gmra.mrb[0].mxu0 %v2523
      %v2688 = vpop.f32.mrb[0].mxu0
      %v2689 = vadd.f32 0.0, %v2688
      %v2690 = vpop.f32.mrb[0].mxu0
      %2691 = vmatprep.mubr.f32.mxu0 0.0
      %2692 = vmatmul.mubr.f32.gmra.mrb[0].mxu0 %v2526
      %v2693 = vpop.f32.mrb[0].mxu0
      %v2694 = vadd.f32 0.0, %v2693
      %v2695 = vpop.f32.mrb[0].mxu0
      %2696 = vmatprep.mubr.f32.mxu0 0.0
      %2697 = vmatmul.mubr.f32.gmra.mrb[0].mxu0 %v2529
      %v2698 = vpop.f32.mrb[0].mxu0
      %v2699 = vadd.f32 0.0, %v2698
      %v2700 = vpop.f32.mrb[0].mxu0
      %2701 = vmatprep.mubr.f32.mxu0 0.0
      %2702 = vmatmul.mubr.f32.gmra.mrb[0].mxu0 %v2532
      %v2703 = vpop.f32.mrb[0].mxu0
      %v2704 = vadd.f32 0.0, %v2703
      %v2705 = vpop.f32.mrb[0].mxu0
      %2706 = vmatprep.mubr.f32.mxu0 0.0
      %2707 = vmatmul.mubr.f32.gmra.mrb[0].mxu0 %v2535
      %v2708 = vpop.f32.mrb[0].mxu0
      %v2709 = vadd.f32 0.0, %v2708
      %v2710 = vpop.f32.mrb[0].mxu0
      %2711 = vmatprep.mubr.f32.mxu0 0.0
      %2712 = vmatmul.mubr.f32.gmra.mrb[0].mxu0 %v2538
      %v2713 = vpop.f32.mrb[0].mxu0
      %v2714 = vadd.f32 0.0, %v2713
      %v2715 = vpop.f32.mrb[0].mxu0
      %2716 = vmatprep.mubr.f32.mxu0 0.0
      %2717 = vmatmul.mubr.f32.gmra.mrb[0].mxu0 %v2541
      %v2718 = vpop.f32.mrb[0].mxu0
      %v2719 = vadd.f32 0.0, %v2718
      %v2720 = vpop.f32.mrb[0].mxu0
      %2721 = vmatprep.mubr.f32.mxu0 0.0
      %2722 = vmatmul.mubr.f32.gmra.mrb[0].mxu0 %v2544
      %v2723 = vpop.f32.mrb[0].mxu0
      %v2724 = vadd.f32 0.0, %v2723
      %v2725 = vpop.f32.mrb[0].mxu0
      %2726 = vmatprep.mubr.f32.mxu0 0.0
      %2727 = vmatmul.mubr.f32.gmra.mrb[0].mxu0 %v2547
      %v2728 = vpop.f32.mrb[0].mxu0
      %v2729 = vadd.f32 0.0, %v2728
      %v2730 = vpop.f32.mrb[0].mxu0
      %2731 = vmatprep.mubr.f32.mxu0 0.0
      %2732 = vmatmul.mubr.f32.gmra.mrb[0].mxu0 %v2550
      %v2733 = vpop.f32.mrb[0].mxu0
      %v2734 = vadd.f32 0.0, %v2733
      %v2735 = vpop.f32.mrb[0].mxu0
      %2736 = vmatprep.mubr.f32.mxu0 0.0
      %2737 = vmatmul.mubr.f32.gmra.mrb[0].mxu0 %v2553
      %v2738 = vpop.f32.mrb[0].mxu0
      %v2739 = vadd.f32 0.0, %v2738
      %v2740 = vpop.f32.mrb[0].mxu0
      %2741 = vmatprep.mubr.f32.mxu0 0.0
      %2742 = vmatmul.mubr.f32.gmra.mrb[0].mxu0 %v2556
      %v2743 = vpop.f32.mrb[0].mxu0
      %v2744 = vadd.f32 0.0, %v2743
      %v2745 = vpop.f32.mrb[0].mxu0
      %2746 = vmatprep.mubr.f32.mxu0 0.0
      %2747 = vmatmul.mubr.f32.gmra.mrb[0].mxu0 %v2559
      %v2748 = vpop.f32.mrb[0].mxu0
      %v2749 = vadd.f32 0.0, %v2748
      %v2750 = vpop.f32.mrb[0].mxu0
      %2751 = vmatprep.mubr.f32.mxu0 0.0
      %2752 = vmatmul.mubr.f32.gmra.mrb[0].mxu0 %v2562
      %v2753 = vpop.f32.mrb[0].mxu0
      %v2754 = vadd.f32 0.0, %v2753
      %v2755 = vpop.f32.mrb[0].mxu0
      %2756 = vmatprep.mubr.f32.mxu0 0.0
      %2757 = vmatmul.mubr.f32.gmra.mrb[0].mxu0 %v2565
      %v2758 = vpop.f32.mrb[0].mxu0
      %v2759 = vadd.f32 0.0, %v2758
      %v2760 = vpop.f32.mrb[0].mxu0
      %2761 = vmatprep.mubr.f32.mxu0 0.0
      %2762 = vmatmul.mubr.f32.gmra.mrb[0].mxu0 %v2568
      %v2763 = vpop.f32.mrb[0].mxu0
      %v2764 = vadd.f32 0.0, %v2763
      %v2765 = vpop.f32.mrb[0].mxu0
      %2766 = vmatprep.mubr.f32.mxu0 0.0
      %2767 = vmatmul.mubr.f32.gmra.mrb[0].mxu0 %v2571
      %v2768 = vpop.f32.mrb[0].mxu0
      %v2769 = vadd.f32 0.0, %v2768
      %v2770 = vpop.f32.mrb[0].mxu0
      %2771 = vmatprep.mubr.f32.mxu0 0.0
      %2772 = vmatmul.mubr.f32.gmra.mrb[0].mxu0 %v2574
      %v2773 = vpop.f32.mrb[0].mxu0
      %v2774 = vadd.f32 0.0, %v2773
      %v2775 = vpop.f32.mrb[0].mxu0
      %2776 = vmatprep.mubr.f32.mxu0 0.0
      %2777 = vmatmul.mubr.f32.gmra.mrb[0].mxu0 %v2577
      %v2778 = vpop.f32.mrb[0].mxu0
      %v2779 = vadd.f32 0.0, %v2778
      %v2780 = vpop.f32.mrb[0].mxu0
      %2781 = vmatprep.mubr.f32.mxu0 0.0
      %2782 = vmatmul.mubr.f32.gmra.mrb[0].mxu0 %v2580
      %v2783 = vpop.f32.mrb[0].mxu0
      %v2784 = vadd.f32 0.0, %v2783
      %v2785 = vpop.f32.mrb[0].mxu0
      %2786 = vmatprep.mubr.f32.mxu0 0.0
      %2787 = vmatmul.mubr.f32.gmra.mrb[0].mxu0 %v2583
      %v2788 = vpop.f32.mrb[0].mxu0
      %v2789 = vadd.f32 0.0, %v2788
      %v2790 = vpop.f32.mrb[0].mxu0
      %2791 = vmatprep.mubr.f32.mxu0 0.0
      %2792 = vmatmul.mubr.f32.gmra.mrb[0].mxu0 %v2586
      %v2793 = vpop.f32.mrb[0].mxu0
      %v2794 = vadd.f32 0.0, %v2793
      %v2795 = vpop.f32.mrb[0].mxu0
      %2796 = vmatprep.mubr.f32.mxu0 0.0
      %2797 = vmatmul.mubr.f32.gmra.mrb[0].mxu0 %v2589
      %v2798 = vpop.f32.mrb[0].mxu0
      %v2799 = vadd.f32 0.0, %v2798
      %v2800 = vpop.f32.mrb[0].mxu0
      %2801 = vmatprep.mubr.f32.mxu0 0.0
      %2802 = vmatmul.mubr.f32.gmra.mrb[0].mxu0 %v2592
      %v2803 = vpop.f32.mrb[0].mxu0
      %v2804 = vadd.f32 0.0, %v2803
      %v2805 = vpop.f32.mrb[0].mxu0
      %2806 = vmatprep.mubr.f32.mxu0 0.0
      %2807 = vmatmul.mubr.f32.gmra.mrb[0].mxu0 %v2595
      %v2808 = vpop.f32.mrb[0].mxu0
      %v2809 = vadd.f32 0.0, %v2808
      %v2810 = vpop.f32.mrb[0].mxu0
      %2811 = vmatprep.mubr.f32.mxu0 0.0
      %2812 = vmatmul.mubr.f32.gmra.mrb[0].mxu0 %v2598
      %v2813 = vpop.f32.mrb[0].mxu0
      %v2814 = vadd.f32 0.0, %v2813
      %v2815 = vpop.f32.mrb[0].mxu0
      %2816 = vmatprep.mubr.f32.mxu0 0.0
      %2817 = vmatmul.mubr.f32.gmra.mrb[0].mxu0 %v2601
      %v2818 = vpop.f32.mrb[0].mxu0
      %v2819 = vadd.f32 0.0, %v2818
      %v2820 = vpop.f32.mrb[0].mxu0
      %2821 = vmatprep.mubr.f32.mxu0 0.0
      %2822 = vmatmul.mubr.f32.gmra.mrb[0].mxu0 %v2604
      %v2823 = vpop.f32.mrb[0].mxu0
      %v2824 = vadd.f32 0.0, %v2823
      %v2825 = vpop.f32.mrb[0].mxu0
      %2826 = vmatprep.mubr.f32.mxu0 0.0
      %2827 = vmatmul.mubr.f32.gmra.mrb[0].mxu0 %v2607
      %v2828 = vpop.f32.mrb[0].mxu0
      %v2829 = vadd.f32 0.0, %v2828
      %v2830 = vpop.f32.mrb[0].mxu0
      %2831 = vmatprep.mubr.f32.mxu0 0.0
      %2832 = vmatmul.mubr.f32.gmra.mrb[0].mxu0 %v2610
      %v2833 = vpop.f32.mrb[0].mxu0
      %v2834 = vadd.f32 0.0, %v2833
      %v2835 = vpop.f32.mrb[0].mxu0
      %2836 = vdwg.mxu0
      %v2837 = vadd.f32 %v2415, %v2679
      %v2838 = vadd.f32 %v2416, %v2684
      %v2839 = vadd.f32 %v2417, %v2689
      %v2840 = vadd.f32 %v2418, %v2694
      %v2841 = vadd.f32 %v2419, %v2699
      %v2842 = vadd.f32 %v2420, %v2704
      %v2843 = vadd.f32 %v2421, %v2709
      %v2844 = vadd.f32 %v2422, %v2714
      %v2845 = vadd.f32 %v2423, %v2719
      %v2846 = vadd.f32 %v2424, %v2724
      %v2847 = vadd.f32 %v2425, %v2729
      %v2848 = vadd.f32 %v2426, %v2734
      %v2849 = vadd.f32 %v2427, %v2739
      %v2850 = vadd.f32 %v2428, %v2744
      %v2851 = vadd.f32 %v2429, %v2749
      %v2852 = vadd.f32 %v2430, %v2754
      %v2853 = vadd.f32 %v2431, %v2759
      %v2854 = vadd.f32 %v2432, %v2764
      %v2855 = vadd.f32 %v2433, %v2769
      %v2856 = vadd.f32 %v2434, %v2774
      %v2857 = vadd.f32 %v2435, %v2779
      %v2858 = vadd.f32 %v2436, %v2784
      %v2859 = vadd.f32 %v2437, %v2789
      %v2860 = vadd.f32 %v2438, %v2794
      %v2861 = vadd.f32 %v2439, %v2799
      %v2862 = vadd.f32 %v2440, %v2804
      %v2863 = vadd.f32 %v2441, %v2809
      %v2864 = vadd.f32 %v2442, %v2814
      %v2865 = vadd.f32 %v2443, %v2819
      %v2866 = vadd.f32 %v2444, %v2824
      %v2867 = vadd.f32 %v2445, %v2829
      %v2868 = vadd.f32 %v2446, %v2834
      %v2869 = vld [vmem:[#allocation2 + $0x11] sm:$0xff]
      %v2870 = vld [vmem:[#allocation2 + $0x19] sm:$0xff]
      %v2871 = vld [vmem:[#allocation2 + $0x21] sm:$0xff]
      %v2872 = vld [vmem:[#allocation2 + $0x29] sm:$0xff]
      %v2873 = vld [vmem:[#allocation2 + $0x31] sm:$0xff]
      %v2874 = vld [vmem:[#allocation2 + $0x39] sm:$0xff]
      %v2875 = vld [vmem:[#allocation2 + $0x41] sm:$0xff]
      %v2876 = vld [vmem:[#allocation2 + $0x49] sm:$0xff]
      %v2877 = vld [vmem:[#allocation2 + $0x51] sm:$0xff]
      %v2878 = vld [vmem:[#allocation2 + $0x59] sm:$0xff]
      %v2879 = vld [vmem:[#allocation2 + $0x61] sm:$0xff]
      %v2880 = vld [vmem:[#allocation2 + $0x69] sm:$0xff]
      %v2881 = vld [vmem:[#allocation2 + $0x71] sm:$0xff]
      %v2882 = vld [vmem:[#allocation2 + $0x79] sm:$0xff]
      %v2883 = vld [vmem:[#allocation2 + $0x81] sm:$0xff]
      %v2884 = vld [vmem:[#allocation2 + $0x89] sm:$0xff]
      %v2885 = vld [vmem:[#allocation2 + $0x91] sm:$0xff]
      %v2886 = vld [vmem:[#allocation2 + $0x99] sm:$0xff]
      %v2887 = vld [vmem:[#allocation2 + $0xa1] sm:$0xff]
      %v2888 = vld [vmem:[#allocation2 + $0xa9] sm:$0xff]
      %v2889 = vld [vmem:[#allocation2 + $0xb1] sm:$0xff]
      %v2890 = vld [vmem:[#allocation2 + $0xb9] sm:$0xff]
      %v2891 = vld [vmem:[#allocation2 + $0xc1] sm:$0xff]
      %v2892 = vld [vmem:[#allocation2 + $0xc9] sm:$0xff]
      %v2893 = vld [vmem:[#allocation2 + $0xd1] sm:$0xff]
      %v2894 = vld [vmem:[#allocation2 + $0xd9] sm:$0xff]
      %v2895 = vld [vmem:[#allocation2 + $0xe1] sm:$0xff]
      %v2896 = vld [vmem:[#allocation2 + $0xe9] sm:$0xff]
      %v2897 = vld [vmem:[#allocation2 + $0xf1] sm:$0xff]
      %v2898 = vld [vmem:[#allocation2 + $0xf9] sm:$0xff]
      %v2899 = vld [vmem:[#allocation2 + $0x101] sm:$0xff]
      %v2900 = vld [vmem:[#allocation2 + $0x109] sm:$0xff]
      %s2901 = scalar_lea.vmem %s6, 128
      %v2902 = vld [vmem:[%s2901] sm:$0xff]
      %v2903 = vld [vmem:[%s2901 + $0x8] sm:$0xff]
      %v2904 = vld [vmem:[%s2901 + $0x10] sm:$0xff]
      %v2905 = vld [vmem:[%s2901 + $0x18] sm:$0xff]
      %v2907 = vsel %vm759, %v2869, 0
      %v2910 = vsel %vm759, %v2870, 0
      %v2913 = vsel %vm759, %v2871, 0
      %v2916 = vsel %vm759, %v2872, 0
      %v2919 = vsel %vm759, %v2873, 0
      %v2922 = vsel %vm759, %v2874, 0
      %v2925 = vsel %vm759, %v2875, 0
      %v2928 = vsel %vm759, %v2876, 0
      %v2931 = vsel %vm759, %v2877, 0
      %v2934 = vsel %vm759, %v2878, 0
      %v2937 = vsel %vm759, %v2879, 0
      %v2940 = vsel %vm759, %v2880, 0
      %v2943 = vsel %vm759, %v2881, 0
      %v2946 = vsel %vm759, %v2882, 0
      %v2949 = vsel %vm759, %v2883, 0
      %v2952 = vsel %vm759, %v2884, 0
      %v2955 = vsel %vm759, %v2885, 0
      %v2958 = vsel %vm759, %v2886, 0
      %v2961 = vsel %vm759, %v2887, 0
      %v2964 = vsel %vm759, %v2888, 0
      %v2967 = vsel %vm759, %v2889, 0
      %v2970 = vsel %vm759, %v2890, 0
      %v2973 = vsel %vm759, %v2891, 0
      %v2976 = vsel %vm759, %v2892, 0
      %v2979 = vsel %vm759, %v2893, 0
      %v2982 = vsel %vm759, %v2894, 0
      %v2985 = vsel %vm759, %v2895, 0
      %v2988 = vsel %vm759, %v2896, 0
      %v2991 = vsel %vm759, %v2897, 0
      %v2994 = vsel %vm759, %v2898, 0
      %v2997 = vsel %vm759, %v2899, 0
      %v3000 = vsel %vm759, %v2900, 0
      %3002 = vmatprep.subr.mxu0 0.0
      %3003 = vmatpush1.msra.mxu0 %v2902
      %3004 = vmatprep.subr.mxu0 0.0
      %3005 = vmatpush1.msra.mxu0 %v2903
      %3006 = vmatprep.subr.mxu0 0.0
      %3007 = vmatpush1.msra.mxu0 %v2904
      %3008 = vmatprep.subr.mxu0 0.0
      %3009 = vmatpush1.msra.mxu0 %v2905
      %3010 = vmatprep.subr.mxu0 0.0
      %3011 = vmatpush1.msra.mxu0 0.0
      %3012 = vmatprep.subr.mxu0 0.0
      %3013 = vmatpush1.msra.mxu0 0.0
      %3014 = vmatprep.subr.mxu0 0.0
      %3015 = vmatpush1.msra.mxu0 0.0
      %3016 = vmatprep.subr.mxu0 0.0
      %3017 = vmatpush1.msra.mxu0 0.0
      %3018 = vmatprep.subr.mxu0 0.0
      %3019 = vmatpush1.msra.mxu0 0.0
      %3020 = vmatprep.subr.mxu0 0.0
      %3021 = vmatpush1.msra.mxu0 0.0
      %3022 = vmatprep.subr.mxu0 0.0
      %3023 = vmatpush1.msra.mxu0 0.0
      %3024 = vmatprep.subr.mxu0 0.0
      %3025 = vmatpush1.msra.mxu0 0.0
      %3026 = vmatprep.subr.mxu0 0.0
      %3027 = vmatpush1.msra.mxu0 0.0
      %3028 = vmatprep.subr.mxu0 0.0
      %3029 = vmatpush1.msra.mxu0 0.0
      %3030 = vmatprep.subr.mxu0 0.0
      %3031 = vmatpush1.msra.mxu0 0.0
      %3032 = vmatprep.subr.mxu0 0.0
      %3033 = vmatpush1.msra.mxu0 0.0
      %3034 = vmatprep.subr.mxu0 0.0
      %3035 = vmatpush1.msra.mxu0 0.0
      %3036 = vmatprep.subr.mxu0 0.0
      %3037 = vmatpush1.msra.mxu0 0.0
      %3038 = vmatprep.subr.mxu0 0.0
      %3039 = vmatpush1.msra.mxu0 0.0
      %3040 = vmatprep.subr.mxu0 0.0
      %3041 = vmatpush1.msra.mxu0 0.0
      %3042 = vmatprep.subr.mxu0 0.0
      %3043 = vmatpush1.msra.mxu0 0.0
      %3044 = vmatprep.subr.mxu0 0.0
      %3045 = vmatpush1.msra.mxu0 0.0
      %3046 = vmatprep.subr.mxu0 0.0
      %3047 = vmatpush1.msra.mxu0 0.0
      %3048 = vmatprep.subr.mxu0 0.0
      %3049 = vmatpush1.msra.mxu0 0.0
      %3050 = vmatprep.subr.mxu0 0.0
      %3051 = vmatpush1.msra.mxu0 0.0
      %3052 = vmatprep.subr.mxu0 0.0
      %3053 = vmatpush1.msra.mxu0 0.0
      %3054 = vmatprep.subr.mxu0 0.0
      %3055 = vmatpush1.msra.mxu0 0.0
      %3056 = vmatprep.subr.mxu0 0.0
      %3057 = vmatpush1.msra.mxu0 0.0
      %3058 = vmatprep.subr.mxu0 0.0
      %3059 = vmatpush1.msra.mxu0 0.0
      %3060 = vmatprep.subr.mxu0 0.0
      %3061 = vmatpush1.msra.mxu0 0.0
      %3062 = vmatprep.subr.mxu0 0.0
      %3063 = vmatpush1.msra.mxu0 0.0
      %3064 = vmatprep.subr.mxu0 0.0
      %3065 = vmatpush1.msra.mxu0 0.0
      %3066 = vmatprep.mubr.f32.mxu0 0.0
      %3067 = vmatmul.mubr.f32.gmra.mrb[0].mxu0 %v2907
      %v3068 = vpop.f32.mrb[0].mxu0
      %v3069 = vadd.f32 0.0, %v3068
      %v3070 = vpop.f32.mrb[0].mxu0
      %3071 = vmatprep.mubr.f32.mxu0 0.0
      %3072 = vmatmul.mubr.f32.gmra.mrb[0].mxu0 %v2910
      %v3073 = vpop.f32.mrb[0].mxu0
      %v3074 = vadd.f32 0.0, %v3073
      %v3075 = vpop.f32.mrb[0].mxu0
      %3076 = vmatprep.mubr.f32.mxu0 0.0
      %3077 = vmatmul.mubr.f32.gmra.mrb[0].mxu0 %v2913
      %v3078 = vpop.f32.mrb[0].mxu0
      %v3079 = vadd.f32 0.0, %v3078
      %v3080 = vpop.f32.mrb[0].mxu0
      %3081 = vmatprep.mubr.f32.mxu0 0.0
      %3082 = vmatmul.mubr.f32.gmra.mrb[0].mxu0 %v2916
      %v3083 = vpop.f32.mrb[0].mxu0
      %v3084 = vadd.f32 0.0, %v3083
      %v3085 = vpop.f32.mrb[0].mxu0
      %3086 = vmatprep.mubr.f32.mxu0 0.0
      %3087 = vmatmul.mubr.f32.gmra.mrb[0].mxu0 %v2919
      %v3088 = vpop.f32.mrb[0].mxu0
      %v3089 = vadd.f32 0.0, %v3088
      %v3090 = vpop.f32.mrb[0].mxu0
      %3091 = vmatprep.mubr.f32.mxu0 0.0
      %3092 = vmatmul.mubr.f32.gmra.mrb[0].mxu0 %v2922
      %v3093 = vpop.f32.mrb[0].mxu0
      %v3094 = vadd.f32 0.0, %v3093
      %v3095 = vpop.f32.mrb[0].mxu0
      %3096 = vmatprep.mubr.f32.mxu0 0.0
      %3097 = vmatmul.mubr.f32.gmra.mrb[0].mxu0 %v2925
      %v3098 = vpop.f32.mrb[0].mxu0
      %v3099 = vadd.f32 0.0, %v3098
      %v3100 = vpop.f32.mrb[0].mxu0
      %3101 = vmatprep.mubr.f32.mxu0 0.0
      %3102 = vmatmul.mubr.f32.gmra.mrb[0].mxu0 %v2928
      %v3103 = vpop.f32.mrb[0].mxu0
      %v3104 = vadd.f32 0.0, %v3103
      %v3105 = vpop.f32.mrb[0].mxu0
      %3106 = vmatprep.mubr.f32.mxu0 0.0
      %3107 = vmatmul.mubr.f32.gmra.mrb[0].mxu0 %v2931
      %v3108 = vpop.f32.mrb[0].mxu0
      %v3109 = vadd.f32 0.0, %v3108
      %v3110 = vpop.f32.mrb[0].mxu0
      %3111 = vmatprep.mubr.f32.mxu0 0.0
      %3112 = vmatmul.mubr.f32.gmra.mrb[0].mxu0 %v2934
      %v3113 = vpop.f32.mrb[0].mxu0
      %v3114 = vadd.f32 0.0, %v3113
      %v3115 = vpop.f32.mrb[0].mxu0
      %3116 = vmatprep.mubr.f32.mxu0 0.0
      %3117 = vmatmul.mubr.f32.gmra.mrb[0].mxu0 %v2937
      %v3118 = vpop.f32.mrb[0].mxu0
      %v3119 = vadd.f32 0.0, %v3118
      %v3120 = vpop.f32.mrb[0].mxu0
      %3121 = vmatprep.mubr.f32.mxu0 0.0
      %3122 = vmatmul.mubr.f32.gmra.mrb[0].mxu0 %v2940
      %v3123 = vpop.f32.mrb[0].mxu0
      %v3124 = vadd.f32 0.0, %v3123
      %v3125 = vpop.f32.mrb[0].mxu0
      %3126 = vmatprep.mubr.f32.mxu0 0.0
      %3127 = vmatmul.mubr.f32.gmra.mrb[0].mxu0 %v2943
      %v3128 = vpop.f32.mrb[0].mxu0
      %v3129 = vadd.f32 0.0, %v3128
      %v3130 = vpop.f32.mrb[0].mxu0
      %3131 = vmatprep.mubr.f32.mxu0 0.0
      %3132 = vmatmul.mubr.f32.gmra.mrb[0].mxu0 %v2946
      %v3133 = vpop.f32.mrb[0].mxu0
      %v3134 = vadd.f32 0.0, %v3133
      %v3135 = vpop.f32.mrb[0].mxu0
      %3136 = vmatprep.mubr.f32.mxu0 0.0
      %3137 = vmatmul.mubr.f32.gmra.mrb[0].mxu0 %v2949
      %v3138 = vpop.f32.mrb[0].mxu0
      %v3139 = vadd.f32 0.0, %v3138
      %v3140 = vpop.f32.mrb[0].mxu0
      %3141 = vmatprep.mubr.f32.mxu0 0.0
      %3142 = vmatmul.mubr.f32.gmra.mrb[0].mxu0 %v2952
      %v3143 = vpop.f32.mrb[0].mxu0
      %v3144 = vadd.f32 0.0, %v3143
      %v3145 = vpop.f32.mrb[0].mxu0
      %3146 = vmatprep.mubr.f32.mxu0 0.0
      %3147 = vmatmul.mubr.f32.gmra.mrb[0].mxu0 %v2955
      %v3148 = vpop.f32.mrb[0].mxu0
      %v3149 = vadd.f32 0.0, %v3148
      %v3150 = vpop.f32.mrb[0].mxu0
      %3151 = vmatprep.mubr.f32.mxu0 0.0
      %3152 = vmatmul.mubr.f32.gmra.mrb[0].mxu0 %v2958
      %v3153 = vpop.f32.mrb[0].mxu0
      %v3154 = vadd.f32 0.0, %v3153
      %v3155 = vpop.f32.mrb[0].mxu0
      %3156 = vmatprep.mubr.f32.mxu0 0.0
      %3157 = vmatmul.mubr.f32.gmra.mrb[0].mxu0 %v2961
      %v3158 = vpop.f32.mrb[0].mxu0
      %v3159 = vadd.f32 0.0, %v3158
      %v3160 = vpop.f32.mrb[0].mxu0
      %3161 = vmatprep.mubr.f32.mxu0 0.0
      %3162 = vmatmul.mubr.f32.gmra.mrb[0].mxu0 %v2964
      %v3163 = vpop.f32.mrb[0].mxu0
      %v3164 = vadd.f32 0.0, %v3163
      %v3165 = vpop.f32.mrb[0].mxu0
      %3166 = vmatprep.mubr.f32.mxu0 0.0
      %3167 = vmatmul.mubr.f32.gmra.mrb[0].mxu0 %v2967
      %v3168 = vpop.f32.mrb[0].mxu0
      %v3169 = vadd.f32 0.0, %v3168
      %v3170 = vpop.f32.mrb[0].mxu0
      %3171 = vmatprep.mubr.f32.mxu0 0.0
      %3172 = vmatmul.mubr.f32.gmra.mrb[0].mxu0 %v2970
      %v3173 = vpop.f32.mrb[0].mxu0
      %v3174 = vadd.f32 0.0, %v3173
      %v3175 = vpop.f32.mrb[0].mxu0
      %3176 = vmatprep.mubr.f32.mxu0 0.0
      %3177 = vmatmul.mubr.f32.gmra.mrb[0].mxu0 %v2973
      %v3178 = vpop.f32.mrb[0].mxu0
      %v3179 = vadd.f32 0.0, %v3178
      %v3180 = vpop.f32.mrb[0].mxu0
      %3181 = vmatprep.mubr.f32.mxu0 0.0
      %3182 = vmatmul.mubr.f32.gmra.mrb[0].mxu0 %v2976
      %v3183 = vpop.f32.mrb[0].mxu0
      %v3184 = vadd.f32 0.0, %v3183
      %v3185 = vpop.f32.mrb[0].mxu0
      %3186 = vmatprep.mubr.f32.mxu0 0.0
      %3187 = vmatmul.mubr.f32.gmra.mrb[0].mxu0 %v2979
      %v3188 = vpop.f32.mrb[0].mxu0
      %v3189 = vadd.f32 0.0, %v3188
      %v3190 = vpop.f32.mrb[0].mxu0
      %3191 = vmatprep.mubr.f32.mxu0 0.0
      %3192 = vmatmul.mubr.f32.gmra.mrb[0].mxu0 %v2982
      %v3193 = vpop.f32.mrb[0].mxu0
      %v3194 = vadd.f32 0.0, %v3193
      %v3195 = vpop.f32.mrb[0].mxu0
      %3196 = vmatprep.mubr.f32.mxu0 0.0
      %3197 = vmatmul.mubr.f32.gmra.mrb[0].mxu0 %v2985
      %v3198 = vpop.f32.mrb[0].mxu0
      %v3199 = vadd.f32 0.0, %v3198
      %v3200 = vpop.f32.mrb[0].mxu0
      %3201 = vmatprep.mubr.f32.mxu0 0.0
      %3202 = vmatmul.mubr.f32.gmra.mrb[0].mxu0 %v2988
      %v3203 = vpop.f32.mrb[0].mxu0
      %v3204 = vadd.f32 0.0, %v3203
      %v3205 = vpop.f32.mrb[0].mxu0
      %3206 = vmatprep.mubr.f32.mxu0 0.0
      %3207 = vmatmul.mubr.f32.gmra.mrb[0].mxu0 %v2991
      %v3208 = vpop.f32.mrb[0].mxu0
      %v3209 = vadd.f32 0.0, %v3208
      %v3210 = vpop.f32.mrb[0].mxu0
      %3211 = vmatprep.mubr.f32.mxu0 0.0
      %3212 = vmatmul.mubr.f32.gmra.mrb[0].mxu0 %v2994
      %v3213 = vpop.f32.mrb[0].mxu0
      %v3214 = vadd.f32 0.0, %v3213
      %v3215 = vpop.f32.mrb[0].mxu0
      %3216 = vmatprep.mubr.f32.mxu0 0.0
      %3217 = vmatmul.mubr.f32.gmra.mrb[0].mxu0 %v2997
      %v3218 = vpop.f32.mrb[0].mxu0
      %v3219 = vadd.f32 0.0, %v3218
      %v3220 = vpop.f32.mrb[0].mxu0
      %3221 = vmatprep.mubr.f32.mxu0 0.0
      %3222 = vmatmul.mubr.f32.gmra.mrb[0].mxu0 %v3000
      %v3223 = vpop.f32.mrb[0].mxu0
      %v3224 = vadd.f32 0.0, %v3223
      %v3225 = vpop.f32.mrb[0].mxu0
      %3226 = vdwg.mxu0
      %v3227 = vadd.f32 %v2837, %v3069
      %v3228 = vadd.f32 %v2838, %v3074
      %v3229 = vadd.f32 %v2839, %v3079
      %v3230 = vadd.f32 %v2840, %v3084
      %v3231 = vadd.f32 %v2841, %v3089
      %v3232 = vadd.f32 %v2842, %v3094
      %v3233 = vadd.f32 %v2843, %v3099
      %v3234 = vadd.f32 %v2844, %v3104
      %v3235 = vadd.f32 %v2845, %v3109
      %v3236 = vadd.f32 %v2846, %v3114
      %v3237 = vadd.f32 %v2847, %v3119
      %v3238 = vadd.f32 %v2848, %v3124
      %v3239 = vadd.f32 %v2849, %v3129
      %v3240 = vadd.f32 %v2850, %v3134
      %v3241 = vadd.f32 %v2851, %v3139
      %v3242 = vadd.f32 %v2852, %v3144
      %v3243 = vadd.f32 %v2853, %v3149
      %v3244 = vadd.f32 %v2854, %v3154
      %v3245 = vadd.f32 %v2855, %v3159
      %v3246 = vadd.f32 %v2856, %v3164
      %v3247 = vadd.f32 %v2857, %v3169
      %v3248 = vadd.f32 %v2858, %v3174
      %v3249 = vadd.f32 %v2859, %v3179
      %v3250 = vadd.f32 %v2860, %v3184
      %v3251 = vadd.f32 %v2861, %v3189
      %v3252 = vadd.f32 %v2862, %v3194
      %v3253 = vadd.f32 %v2863, %v3199
      %v3254 = vadd.f32 %v2864, %v3204
      %v3255 = vadd.f32 %v2865, %v3209
      %v3256 = vadd.f32 %v2866, %v3214
      %v3257 = vadd.f32 %v2867, %v3219
      %v3258 = vadd.f32 %v2868, %v3224
      %v3259 = vld [vmem:[#allocation2 + $0x12] sm:$0xff]
      %v3260 = vld [vmem:[#allocation2 + $0x1a] sm:$0xff]
      %v3261 = vld [vmem:[#allocation2 + $0x22] sm:$0xff]
      %v3262 = vld [vmem:[#allocation2 + $0x2a] sm:$0xff]
      %v3263 = vld [vmem:[#allocation2 + $0x32] sm:$0xff]
      %v3264 = vld [vmem:[#allocation2 + $0x3a] sm:$0xff]
      %v3265 = vld [vmem:[#allocation2 + $0x42] sm:$0xff]
      %v3266 = vld [vmem:[#allocation2 + $0x4a] sm:$0xff]
      %v3267 = vld [vmem:[#allocation2 + $0x52] sm:$0xff]
      %v3268 = vld [vmem:[#allocation2 + $0x5a] sm:$0xff]
      %v3269 = vld [vmem:[#allocation2 + $0x62] sm:$0xff]
      %v3270 = vld [vmem:[#allocation2 + $0x6a] sm:$0xff]
      %v3271 = vld [vmem:[#allocation2 + $0x72] sm:$0xff]
      %v3272 = vld [vmem:[#allocation2 + $0x7a] sm:$0xff]
      %v3273 = vld [vmem:[#allocation2 + $0x82] sm:$0xff]
      %v3274 = vld [vmem:[#allocation2 + $0x8a] sm:$0xff]
      %v3275 = vld [vmem:[#allocation2 + $0x92] sm:$0xff]
      %v3276 = vld [vmem:[#allocation2 + $0x9a] sm:$0xff]
      %v3277 = vld [vmem:[#allocation2 + $0xa2] sm:$0xff]
      %v3278 = vld [vmem:[#allocation2 + $0xaa] sm:$0xff]
      %v3279 = vld [vmem:[#allocation2 + $0xb2] sm:$0xff]
      %v3280 = vld [vmem:[#allocation2 + $0xba] sm:$0xff]
      %v3281 = vld [vmem:[#allocation2 + $0xc2] sm:$0xff]
      %v3282 = vld [vmem:[#allocation2 + $0xca] sm:$0xff]
      %v3283 = vld [vmem:[#allocation2 + $0xd2] sm:$0xff]
      %v3284 = vld [vmem:[#allocation2 + $0xda] sm:$0xff]
      %v3285 = vld [vmem:[#allocation2 + $0xe2] sm:$0xff]
      %v3286 = vld [vmem:[#allocation2 + $0xea] sm:$0xff]
      %v3287 = vld [vmem:[#allocation2 + $0xf2] sm:$0xff]
      %v3288 = vld [vmem:[#allocation2 + $0xfa] sm:$0xff]
      %v3289 = vld [vmem:[#allocation2 + $0x102] sm:$0xff]
      %v3290 = vld [vmem:[#allocation2 + $0x10a] sm:$0xff]
      %v3291 = vsel %vm1246, %v3259, 0.0
      %v3292 = vsel %vm1247, %v3260, 0.0
      %v3293 = vsel %vm1248, %v3261, 0.0
      %v3294 = vsel %vm1249, %v3262, 0.0
      %v3295 = vsel %vm1250, %v3263, 0.0
      %v3296 = vsel %vm1251, %v3264, 0.0
      %v3297 = vsel %vm1252, %v3265, 0.0
      %v3298 = vsel %vm1253, %v3266, 0.0
      %v3299 = vsel %vm1254, %v3267, 0.0
      %v3300 = vsel %vm1255, %v3268, 0.0
      %v3301 = vsel %vm1256, %v3269, 0.0
      %v3302 = vsel %vm1257, %v3270, 0.0
      %v3303 = vsel %vm1258, %v3271, 0.0
      %v3304 = vsel %vm1259, %v3272, 0.0
      %v3305 = vsel %vm1260, %v3273, 0.0
      %v3306 = vsel %vm1261, %v3274, 0.0
      %v3307 = vsel %vm1262, %v3275, 0.0
      %v3308 = vsel %vm1263, %v3276, 0.0
      %v3309 = vsel %vm1264, %v3277, 0.0
      %v3310 = vsel %vm1265, %v3278, 0.0
      %v3311 = vsel %vm1266, %v3279, 0.0
      %v3312 = vsel %vm1267, %v3280, 0.0
      %v3313 = vsel %vm1268, %v3281, 0.0
      %v3314 = vsel %vm1269, %v3282, 0.0
      %v3315 = vsel %vm1270, %v3283, 0.0
      %v3316 = vsel %vm1271, %v3284, 0.0
      %v3317 = vsel %vm1272, %v3285, 0.0
      %v3318 = vsel %vm1273, %v3286, 0.0
      %v3319 = vsel %vm1274, %v3287, 0.0
      %v3320 = vsel %vm1275, %v3288, 0.0
      %v3321 = vsel %vm1276, %v3289, 0.0
      %v3322 = vsel %vm1277, %v3290, 0.0
      %s3323 = scalar_lea.vmem %s6, 160
      %v3324 = vld [vmem:[%s3323] sm:$0xff]
      %v3325 = vld [vmem:[%s3323 + $0x8] sm:$0xff]
      %v3326 = vld [vmem:[%s3323 + $0x10] sm:$0xff]
      %v3327 = vld [vmem:[%s3323 + $0x18] sm:$0xff]
      %v3329 = vsel %vm759, %v3291, 0
      %v3332 = vsel %vm759, %v3292, 0
      %v3335 = vsel %vm759, %v3293, 0
      %v3338 = vsel %vm759, %v3294, 0
      %v3341 = vsel %vm759, %v3295, 0
      %v3344 = vsel %vm759, %v3296, 0
      %v3347 = vsel %vm759, %v3297, 0
      %v3350 = vsel %vm759, %v3298, 0
      %v3353 = vsel %vm759, %v3299, 0
      %v3356 = vsel %vm759, %v3300, 0
      %v3359 = vsel %vm759, %v3301, 0
      %v3362 = vsel %vm759, %v3302, 0
      %v3365 = vsel %vm759, %v3303, 0
      %v3368 = vsel %vm759, %v3304, 0
      %v3371 = vsel %vm759, %v3305, 0
      %v3374 = vsel %vm759, %v3306, 0
      %v3377 = vsel %vm759, %v3307, 0
      %v3380 = vsel %vm759, %v3308, 0
      %v3383 = vsel %vm759, %v3309, 0
      %v3386 = vsel %vm759, %v3310, 0
      %v3389 = vsel %vm759, %v3311, 0
      %v3392 = vsel %vm759, %v3312, 0
      %v3395 = vsel %vm759, %v3313, 0
      %v3398 = vsel %vm759, %v3314, 0
      %v3401 = vsel %vm759, %v3315, 0
      %v3404 = vsel %vm759, %v3316, 0
      %v3407 = vsel %vm759, %v3317, 0
      %v3410 = vsel %vm759, %v3318, 0
      %v3413 = vsel %vm759, %v3319, 0
      %v3416 = vsel %vm759, %v3320, 0
      %v3419 = vsel %vm759, %v3321, 0
      %v3422 = vsel %vm759, %v3322, 0
      %3424 = vmatprep.subr.mxu0 0.0
      %3425 = vmatpush1.msra.mxu0 %v3324
      %3426 = vmatprep.subr.mxu0 0.0
      %3427 = vmatpush1.msra.mxu0 %v3325
      %3428 = vmatprep.subr.mxu0 0.0
      %3429 = vmatpush1.msra.mxu0 %v3326
      %3430 = vmatprep.subr.mxu0 0.0
      %3431 = vmatpush1.msra.mxu0 %v3327
      %3432 = vmatprep.subr.mxu0 0.0
      %3433 = vmatpush1.msra.mxu0 0.0
      %3434 = vmatprep.subr.mxu0 0.0
      %3435 = vmatpush1.msra.mxu0 0.0
      %3436 = vmatprep.subr.mxu0 0.0
      %3437 = vmatpush1.msra.mxu0 0.0
      %3438 = vmatprep.subr.mxu0 0.0
      %3439 = vmatpush1.msra.mxu0 0.0
      %3440 = vmatprep.subr.mxu0 0.0
      %3441 = vmatpush1.msra.mxu0 0.0
      %3442 = vmatprep.subr.mxu0 0.0
      %3443 = vmatpush1.msra.mxu0 0.0
      %3444 = vmatprep.subr.mxu0 0.0
      %3445 = vmatpush1.msra.mxu0 0.0
      %3446 = vmatprep.subr.mxu0 0.0
      %3447 = vmatpush1.msra.mxu0 0.0
      %3448 = vmatprep.subr.mxu0 0.0
      %3449 = vmatpush1.msra.mxu0 0.0
      %3450 = vmatprep.subr.mxu0 0.0
      %3451 = vmatpush1.msra.mxu0 0.0
      %3452 = vmatprep.subr.mxu0 0.0
      %3453 = vmatpush1.msra.mxu0 0.0
      %3454 = vmatprep.subr.mxu0 0.0
      %3455 = vmatpush1.msra.mxu0 0.0
      %3456 = vmatprep.subr.mxu0 0.0
      %3457 = vmatpush1.msra.mxu0 0.0
      %3458 = vmatprep.subr.mxu0 0.0
      %3459 = vmatpush1.msra.mxu0 0.0
      %3460 = vmatprep.subr.mxu0 0.0
      %3461 = vmatpush1.msra.mxu0 0.0
      %3462 = vmatprep.subr.mxu0 0.0
      %3463 = vmatpush1.msra.mxu0 0.0
      %3464 = vmatprep.subr.mxu0 0.0
      %3465 = vmatpush1.msra.mxu0 0.0
      %3466 = vmatprep.subr.mxu0 0.0
      %3467 = vmatpush1.msra.mxu0 0.0
      %3468 = vmatprep.subr.mxu0 0.0
      %3469 = vmatpush1.msra.mxu0 0.0
      %3470 = vmatprep.subr.mxu0 0.0
      %3471 = vmatpush1.msra.mxu0 0.0
      %3472 = vmatprep.subr.mxu0 0.0
      %3473 = vmatpush1.msra.mxu0 0.0
      %3474 = vmatprep.subr.mxu0 0.0
      %3475 = vmatpush1.msra.mxu0 0.0
      %3476 = vmatprep.subr.mxu0 0.0
      %3477 = vmatpush1.msra.mxu0 0.0
      %3478 = vmatprep.subr.mxu0 0.0
      %3479 = vmatpush1.msra.mxu0 0.0
      %3480 = vmatprep.subr.mxu0 0.0
      %3481 = vmatpush1.msra.mxu0 0.0
      %3482 = vmatprep.subr.mxu0 0.0
      %3483 = vmatpush1.msra.mxu0 0.0
      %3484 = vmatprep.subr.mxu0 0.0
      %3485 = vmatpush1.msra.mxu0 0.0
      %3486 = vmatprep.subr.mxu0 0.0
      %3487 = vmatpush1.msra.mxu0 0.0
      %3488 = vmatprep.mubr.f32.mxu0 0.0
      %3489 = vmatmul.mubr.f32.gmra.mrb[0].mxu0 %v3329
      %v3490 = vpop.f32.mrb[0].mxu0
      %v3491 = vadd.f32 0.0, %v3490
      %v3492 = vpop.f32.mrb[0].mxu0
      %3493 = vmatprep.mubr.f32.mxu0 0.0
      %3494 = vmatmul.mubr.f32.gmra.mrb[0].mxu0 %v3332
      %v3495 = vpop.f32.mrb[0].mxu0
      %v3496 = vadd.f32 0.0, %v3495
      %v3497 = vpop.f32.mrb[0].mxu0
      %3498 = vmatprep.mubr.f32.mxu0 0.0
      %3499 = vmatmul.mubr.f32.gmra.mrb[0].mxu0 %v3335
      %v3500 = vpop.f32.mrb[0].mxu0
      %v3501 = vadd.f32 0.0, %v3500
      %v3502 = vpop.f32.mrb[0].mxu0
      %3503 = vmatprep.mubr.f32.mxu0 0.0
      %3504 = vmatmul.mubr.f32.gmra.mrb[0].mxu0 %v3338
      %v3505 = vpop.f32.mrb[0].mxu0
      %v3506 = vadd.f32 0.0, %v3505
      %v3507 = vpop.f32.mrb[0].mxu0
      %3508 = vmatprep.mubr.f32.mxu0 0.0
      %3509 = vmatmul.mubr.f32.gmra.mrb[0].mxu0 %v3341
      %v3510 = vpop.f32.mrb[0].mxu0
      %v3511 = vadd.f32 0.0, %v3510
      %v3512 = vpop.f32.mrb[0].mxu0
      %3513 = vmatprep.mubr.f32.mxu0 0.0
      %3514 = vmatmul.mubr.f32.gmra.mrb[0].mxu0 %v3344
      %v3515 = vpop.f32.mrb[0].mxu0
      %v3516 = vadd.f32 0.0, %v3515
      %v3517 = vpop.f32.mrb[0].mxu0
      %3518 = vmatprep.mubr.f32.mxu0 0.0
      %3519 = vmatmul.mubr.f32.gmra.mrb[0].mxu0 %v3347
      %v3520 = vpop.f32.mrb[0].mxu0
      %v3521 = vadd.f32 0.0, %v3520
      %v3522 = vpop.f32.mrb[0].mxu0
      %3523 = vmatprep.mubr.f32.mxu0 0.0
      %3524 = vmatmul.mubr.f32.gmra.mrb[0].mxu0 %v3350
      %v3525 = vpop.f32.mrb[0].mxu0
      %v3526 = vadd.f32 0.0, %v3525
      %v3527 = vpop.f32.mrb[0].mxu0
      %3528 = vmatprep.mubr.f32.mxu0 0.0
      %3529 = vmatmul.mubr.f32.gmra.mrb[0].mxu0 %v3353
      %v3530 = vpop.f32.mrb[0].mxu0
      %v3531 = vadd.f32 0.0, %v3530
      %v3532 = vpop.f32.mrb[0].mxu0
      %3533 = vmatprep.mubr.f32.mxu0 0.0
      %3534 = vmatmul.mubr.f32.gmra.mrb[0].mxu0 %v3356
      %v3535 = vpop.f32.mrb[0].mxu0
      %v3536 = vadd.f32 0.0, %v3535
      %v3537 = vpop.f32.mrb[0].mxu0
      %3538 = vmatprep.mubr.f32.mxu0 0.0
      %3539 = vmatmul.mubr.f32.gmra.mrb[0].mxu0 %v3359
      %v3540 = vpop.f32.mrb[0].mxu0
      %v3541 = vadd.f32 0.0, %v3540
      %v3542 = vpop.f32.mrb[0].mxu0
      %3543 = vmatprep.mubr.f32.mxu0 0.0
      %3544 = vmatmul.mubr.f32.gmra.mrb[0].mxu0 %v3362
      %v3545 = vpop.f32.mrb[0].mxu0
      %v3546 = vadd.f32 0.0, %v3545
      %v3547 = vpop.f32.mrb[0].mxu0
      %3548 = vmatprep.mubr.f32.mxu0 0.0
      %3549 = vmatmul.mubr.f32.gmra.mrb[0].mxu0 %v3365
      %v3550 = vpop.f32.mrb[0].mxu0
      %v3551 = vadd.f32 0.0, %v3550
      %v3552 = vpop.f32.mrb[0].mxu0
      %3553 = vmatprep.mubr.f32.mxu0 0.0
      %3554 = vmatmul.mubr.f32.gmra.mrb[0].mxu0 %v3368
      %v3555 = vpop.f32.mrb[0].mxu0
      %v3556 = vadd.f32 0.0, %v3555
      %v3557 = vpop.f32.mrb[0].mxu0
      %3558 = vmatprep.mubr.f32.mxu0 0.0
      %3559 = vmatmul.mubr.f32.gmra.mrb[0].mxu0 %v3371
      %v3560 = vpop.f32.mrb[0].mxu0
      %v3561 = vadd.f32 0.0, %v3560
      %v3562 = vpop.f32.mrb[0].mxu0
      %3563 = vmatprep.mubr.f32.mxu0 0.0
      %3564 = vmatmul.mubr.f32.gmra.mrb[0].mxu0 %v3374
      %v3565 = vpop.f32.mrb[0].mxu0
      %v3566 = vadd.f32 0.0, %v3565
      %v3567 = vpop.f32.mrb[0].mxu0
      %3568 = vmatprep.mubr.f32.mxu0 0.0
      %3569 = vmatmul.mubr.f32.gmra.mrb[0].mxu0 %v3377
      %v3570 = vpop.f32.mrb[0].mxu0
      %v3571 = vadd.f32 0.0, %v3570
      %v3572 = vpop.f32.mrb[0].mxu0
      %3573 = vmatprep.mubr.f32.mxu0 0.0
      %3574 = vmatmul.mubr.f32.gmra.mrb[0].mxu0 %v3380
      %v3575 = vpop.f32.mrb[0].mxu0
      %v3576 = vadd.f32 0.0, %v3575
      %v3577 = vpop.f32.mrb[0].mxu0
      %3578 = vmatprep.mubr.f32.mxu0 0.0
      %3579 = vmatmul.mubr.f32.gmra.mrb[0].mxu0 %v3383
      %v3580 = vpop.f32.mrb[0].mxu0
      %v3581 = vadd.f32 0.0, %v3580
      %v3582 = vpop.f32.mrb[0].mxu0
      %3583 = vmatprep.mubr.f32.mxu0 0.0
      %3584 = vmatmul.mubr.f32.gmra.mrb[0].mxu0 %v3386
      %v3585 = vpop.f32.mrb[0].mxu0
      %v3586 = vadd.f32 0.0, %v3585
      %v3587 = vpop.f32.mrb[0].mxu0
      %3588 = vmatprep.mubr.f32.mxu0 0.0
      %3589 = vmatmul.mubr.f32.gmra.mrb[0].mxu0 %v3389
      %v3590 = vpop.f32.mrb[0].mxu0
      %v3591 = vadd.f32 0.0, %v3590
      %v3592 = vpop.f32.mrb[0].mxu0
      %3593 = vmatprep.mubr.f32.mxu0 0.0
      %3594 = vmatmul.mubr.f32.gmra.mrb[0].mxu0 %v3392
      %v3595 = vpop.f32.mrb[0].mxu0
      %v3596 = vadd.f32 0.0, %v3595
      %v3597 = vpop.f32.mrb[0].mxu0
      %3598 = vmatprep.mubr.f32.mxu0 0.0
      %3599 = vmatmul.mubr.f32.gmra.mrb[0].mxu0 %v3395
      %v3600 = vpop.f32.mrb[0].mxu0
      %v3601 = vadd.f32 0.0, %v3600
      %v3602 = vpop.f32.mrb[0].mxu0
      %3603 = vmatprep.mubr.f32.mxu0 0.0
      %3604 = vmatmul.mubr.f32.gmra.mrb[0].mxu0 %v3398
      %v3605 = vpop.f32.mrb[0].mxu0
      %v3606 = vadd.f32 0.0, %v3605
      %v3607 = vpop.f32.mrb[0].mxu0
      %3608 = vmatprep.mubr.f32.mxu0 0.0
      %3609 = vmatmul.mubr.f32.gmra.mrb[0].mxu0 %v3401
      %v3610 = vpop.f32.mrb[0].mxu0
      %v3611 = vadd.f32 0.0, %v3610
      %v3612 = vpop.f32.mrb[0].mxu0
      %3613 = vmatprep.mubr.f32.mxu0 0.0
      %3614 = vmatmul.mubr.f32.gmra.mrb[0].mxu0 %v3404
      %v3615 = vpop.f32.mrb[0].mxu0
      %v3616 = vadd.f32 0.0, %v3615
      %v3617 = vpop.f32.mrb[0].mxu0
      %3618 = vmatprep.mubr.f32.mxu0 0.0
      %3619 = vmatmul.mubr.f32.gmra.mrb[0].mxu0 %v3407
      %v3620 = vpop.f32.mrb[0].mxu0
      %v3621 = vadd.f32 0.0, %v3620
      %v3622 = vpop.f32.mrb[0].mxu0
      %3623 = vmatprep.mubr.f32.mxu0 0.0
      %3624 = vmatmul.mubr.f32.gmra.mrb[0].mxu0 %v3410
      %v3625 = vpop.f32.mrb[0].mxu0
      %v3626 = vadd.f32 0.0, %v3625
      %v3627 = vpop.f32.mrb[0].mxu0
      %3628 = vmatprep.mubr.f32.mxu0 0.0
      %3629 = vmatmul.mubr.f32.gmra.mrb[0].mxu0 %v3413
      %v3630 = vpop.f32.mrb[0].mxu0
      %v3631 = vadd.f32 0.0, %v3630
      %v3632 = vpop.f32.mrb[0].mxu0
      %3633 = vmatprep.mubr.f32.mxu0 0.0
      %3634 = vmatmul.mubr.f32.gmra.mrb[0].mxu0 %v3416
      %v3635 = vpop.f32.mrb[0].mxu0
      %v3636 = vadd.f32 0.0, %v3635
      %v3637 = vpop.f32.mrb[0].mxu0
      %3638 = vmatprep.mubr.f32.mxu0 0.0
      %3639 = vmatmul.mubr.f32.gmra.mrb[0].mxu0 %v3419
      %v3640 = vpop.f32.mrb[0].mxu0
      %v3641 = vadd.f32 0.0, %v3640
      %v3642 = vpop.f32.mrb[0].mxu0
      %3643 = vmatprep.mubr.f32.mxu0 0.0
      %3644 = vmatmul.mubr.f32.gmra.mrb[0].mxu0 %v3422
      %v3645 = vpop.f32.mrb[0].mxu0
      %v3646 = vadd.f32 0.0, %v3645
      %v3647 = vpop.f32.mrb[0].mxu0
      %3648 = vdwg.mxu0
      %v3649 = vadd.f32 %v3227, %v3491
      %v3650 = vadd.f32 %v3228, %v3496
      %v3651 = vadd.f32 %v3229, %v3501
      %v3652 = vadd.f32 %v3230, %v3506
      %v3653 = vadd.f32 %v3231, %v3511
      %v3654 = vadd.f32 %v3232, %v3516
      %v3655 = vadd.f32 %v3233, %v3521
      %v3656 = vadd.f32 %v3234, %v3526
      %v3657 = vadd.f32 %v3235, %v3531
      %v3658 = vadd.f32 %v3236, %v3536
      %v3659 = vadd.f32 %v3237, %v3541
      %v3660 = vadd.f32 %v3238, %v3546
      %v3661 = vadd.f32 %v3239, %v3551
      %v3662 = vadd.f32 %v3240, %v3556
      %v3663 = vadd.f32 %v3241, %v3561
      %v3664 = vadd.f32 %v3242, %v3566
      %v3665 = vadd.f32 %v3243, %v3571
      %v3666 = vadd.f32 %v3244, %v3576
      %v3667 = vadd.f32 %v3245, %v3581
      %v3668 = vadd.f32 %v3246, %v3586
      %v3669 = vadd.f32 %v3247, %v3591
      %v3670 = vadd.f32 %v3248, %v3596
      %v3671 = vadd.f32 %v3249, %v3601
      %v3672 = vadd.f32 %v3250, %v3606
      %v3673 = vadd.f32 %v3251, %v3611
      %v3674 = vadd.f32 %v3252, %v3616
      %v3675 = vadd.f32 %v3253, %v3621
      %v3676 = vadd.f32 %v3254, %v3626
      %v3677 = vadd.f32 %v3255, %v3631
      %v3678 = vadd.f32 %v3256, %v3636
      %v3679 = vadd.f32 %v3257, %v3641
      %v3680 = vadd.f32 %v3258, %v3646
      %v3681 = vld [vmem:[#allocation2 + $0x20] sm:$0xff]
      %v3682 = vld [vmem:[#allocation2 + $0x28] sm:$0xff]
      %v3683 = vld [vmem:[#allocation2 + $0x30] sm:$0xff]
      %v3684 = vld [vmem:[#allocation2 + $0x38] sm:$0xff]
      %v3685 = vld [vmem:[#allocation2 + $0x40] sm:$0xff]
      %v3686 = vld [vmem:[#allocation2 + $0x48] sm:$0xff]
      %v3687 = vld [vmem:[#allocation2 + $0x50] sm:$0xff]
      %v3688 = vld [vmem:[#allocation2 + $0x58] sm:$0xff]
      %v3689 = vld [vmem:[#allocation2 + $0x60] sm:$0xff]
      %v3690 = vld [vmem:[#allocation2 + $0x68] sm:$0xff]
      %v3691 = vld [vmem:[#allocation2 + $0x70] sm:$0xff]
      %v3692 = vld [vmem:[#allocation2 + $0x78] sm:$0xff]
      %v3693 = vld [vmem:[#allocation2 + $0x80] sm:$0xff]
      %v3694 = vld [vmem:[#allocation2 + $0x88] sm:$0xff]
      %v3695 = vld [vmem:[#allocation2 + $0x90] sm:$0xff]
      %v3696 = vld [vmem:[#allocation2 + $0x98] sm:$0xff]
      %v3697 = vld [vmem:[#allocation2 + $0xa0] sm:$0xff]
      %v3698 = vld [vmem:[#allocation2 + $0xa8] sm:$0xff]
      %v3699 = vld [vmem:[#allocation2 + $0xb0] sm:$0xff]
      %v3700 = vld [vmem:[#allocation2 + $0xb8] sm:$0xff]
      %v3701 = vld [vmem:[#allocation2 + $0xc0] sm:$0xff]
      %v3702 = vld [vmem:[#allocation2 + $0xc8] sm:$0xff]
      %v3703 = vld [vmem:[#allocation2 + $0xd0] sm:$0xff]
      %v3704 = vld [vmem:[#allocation2 + $0xd8] sm:$0xff]
      %v3705 = vld [vmem:[#allocation2 + $0xe0] sm:$0xff]
      %v3706 = vld [vmem:[#allocation2 + $0xe8] sm:$0xff]
      %v3707 = vld [vmem:[#allocation2 + $0xf0] sm:$0xff]
      %v3708 = vld [vmem:[#allocation2 + $0xf8] sm:$0xff]
      %v3709 = vld [vmem:[#allocation2 + $0x100] sm:$0xff]
      %v3710 = vld [vmem:[#allocation2 + $0x108] sm:$0xff]
      %v3711 = vld [vmem:[#allocation2 + $0x110] sm:$0xff]
      %v3712 = vld [vmem:[#allocation2 + $0x118] sm:$0xff]
      %v3713 = vsel %vm1214, %v3681, 0.0
      %v3714 = vsel %vm1215, %v3682, 0.0
      %v3715 = vsel %vm1216, %v3683, 0.0
      %v3716 = vsel %vm1217, %v3684, 0.0
      %v3717 = vsel %vm1218, %v3685, 0.0
      %v3718 = vsel %vm1219, %v3686, 0.0
      %v3719 = vsel %vm1220, %v3687, 0.0
      %v3720 = vsel %vm1221, %v3688, 0.0
      %v3721 = vsel %vm1222, %v3689, 0.0
      %v3722 = vsel %vm1223, %v3690, 0.0
      %v3723 = vsel %vm1224, %v3691, 0.0
      %v3724 = vsel %vm1225, %v3692, 0.0
      %v3725 = vsel %vm1226, %v3693, 0.0
      %v3726 = vsel %vm1227, %v3694, 0.0
      %v3727 = vsel %vm1228, %v3695, 0.0
      %v3728 = vsel %vm1229, %v3696, 0.0
      %v3729 = vsel %vm1230, %v3697, 0.0
      %v3730 = vsel %vm1231, %v3698, 0.0
      %v3731 = vsel %vm1232, %v3699, 0.0
      %v3732 = vsel %vm1233, %v3700, 0.0
      %v3733 = vsel %vm1234, %v3701, 0.0
      %v3734 = vsel %vm1235, %v3702, 0.0
      %v3735 = vsel %vm1236, %v3703, 0.0
      %v3736 = vsel %vm1237, %v3704, 0.0
      %v3737 = vsel %vm1238, %v3705, 0.0
      %v3738 = vsel %vm1239, %v3706, 0.0
      %v3739 = vsel %vm1240, %v3707, 0.0
      %v3740 = vsel %vm1241, %v3708, 0.0
      %v3741 = vsel %vm1242, %v3709, 0.0
      %v3742 = vsel %vm1243, %v3710, 0.0
      %v3743 = vsel %vm1244, %v3711, 0.0
      %v3744 = vsel %vm1245, %v3712, 0.0
      %s3745 = scalar_lea.vmem %s6, 192
      %v3746 = vld [vmem:[%s3745] sm:$0xff]
      %v3747 = vld [vmem:[%s3745 + $0x8] sm:$0xff]
      %v3748 = vld [vmem:[%s3745 + $0x10] sm:$0xff]
      %v3749 = vld [vmem:[%s3745 + $0x18] sm:$0xff]
      %v3751 = vsel %vm759, %v3713, 0
      %v3754 = vsel %vm759, %v3714, 0
      %v3757 = vsel %vm759, %v3715, 0
      %v3760 = vsel %vm759, %v3716, 0
      %v3763 = vsel %vm759, %v3717, 0
      %v3766 = vsel %vm759, %v3718, 0
      %v3769 = vsel %vm759, %v3719, 0
      %v3772 = vsel %vm759, %v3720, 0
      %v3775 = vsel %vm759, %v3721, 0
      %v3778 = vsel %vm759, %v3722, 0
      %v3781 = vsel %vm759, %v3723, 0
      %v3784 = vsel %vm759, %v3724, 0
      %v3787 = vsel %vm759, %v3725, 0
      %v3790 = vsel %vm759, %v3726, 0
      %v3793 = vsel %vm759, %v3727, 0
      %v3796 = vsel %vm759, %v3728, 0
      %v3799 = vsel %vm759, %v3729, 0
      %v3802 = vsel %vm759, %v3730, 0
      %v3805 = vsel %vm759, %v3731, 0
      %v3808 = vsel %vm759, %v3732, 0
      %v3811 = vsel %vm759, %v3733, 0
      %v3814 = vsel %vm759, %v3734, 0
      %v3817 = vsel %vm759, %v3735, 0
      %v3820 = vsel %vm759, %v3736, 0
      %v3823 = vsel %vm759, %v3737, 0
      %v3826 = vsel %vm759, %v3738, 0
      %v3829 = vsel %vm759, %v3739, 0
      %v3832 = vsel %vm759, %v3740, 0
      %v3835 = vsel %vm759, %v3741, 0
      %v3838 = vsel %vm759, %v3742, 0
      %v3841 = vsel %vm759, %v3743, 0
      %v3844 = vsel %vm759, %v3744, 0
      %3846 = vmatprep.subr.mxu0 0.0
      %3847 = vmatpush1.msra.mxu0 %v3746
      %3848 = vmatprep.subr.mxu0 0.0
      %3849 = vmatpush1.msra.mxu0 %v3747
      %3850 = vmatprep.subr.mxu0 0.0
      %3851 = vmatpush1.msra.mxu0 %v3748
      %3852 = vmatprep.subr.mxu0 0.0
      %3853 = vmatpush1.msra.mxu0 %v3749
      %3854 = vmatprep.subr.mxu0 0.0
      %3855 = vmatpush1.msra.mxu0 0.0
      %3856 = vmatprep.subr.mxu0 0.0
      %3857 = vmatpush1.msra.mxu0 0.0
      %3858 = vmatprep.subr.mxu0 0.0
      %3859 = vmatpush1.msra.mxu0 0.0
      %3860 = vmatprep.subr.mxu0 0.0
      %3861 = vmatpush1.msra.mxu0 0.0
      %3862 = vmatprep.subr.mxu0 0.0
      %3863 = vmatpush1.msra.mxu0 0.0
      %3864 = vmatprep.subr.mxu0 0.0
      %3865 = vmatpush1.msra.mxu0 0.0
      %3866 = vmatprep.subr.mxu0 0.0
      %3867 = vmatpush1.msra.mxu0 0.0
      %3868 = vmatprep.subr.mxu0 0.0
      %3869 = vmatpush1.msra.mxu0 0.0
      %3870 = vmatprep.subr.mxu0 0.0
      %3871 = vmatpush1.msra.mxu0 0.0
      %3872 = vmatprep.subr.mxu0 0.0
      %3873 = vmatpush1.msra.mxu0 0.0
      %3874 = vmatprep.subr.mxu0 0.0
      %3875 = vmatpush1.msra.mxu0 0.0
      %3876 = vmatprep.subr.mxu0 0.0
      %3877 = vmatpush1.msra.mxu0 0.0
      %3878 = vmatprep.subr.mxu0 0.0
      %3879 = vmatpush1.msra.mxu0 0.0
      %3880 = vmatprep.subr.mxu0 0.0
      %3881 = vmatpush1.msra.mxu0 0.0
      %3882 = vmatprep.subr.mxu0 0.0
      %3883 = vmatpush1.msra.mxu0 0.0
      %3884 = vmatprep.subr.mxu0 0.0
      %3885 = vmatpush1.msra.mxu0 0.0
      %3886 = vmatprep.subr.mxu0 0.0
      %3887 = vmatpush1.msra.mxu0 0.0
      %3888 = vmatprep.subr.mxu0 0.0
      %3889 = vmatpush1.msra.mxu0 0.0
      %3890 = vmatprep.subr.mxu0 0.0
      %3891 = vmatpush1.msra.mxu0 0.0
      %3892 = vmatprep.subr.mxu0 0.0
      %3893 = vmatpush1.msra.mxu0 0.0
      %3894 = vmatprep.subr.mxu0 0.0
      %3895 = vmatpush1.msra.mxu0 0.0
      %3896 = vmatprep.subr.mxu0 0.0
      %3897 = vmatpush1.msra.mxu0 0.0
      %3898 = vmatprep.subr.mxu0 0.0
      %3899 = vmatpush1.msra.mxu0 0.0
      %3900 = vmatprep.subr.mxu0 0.0
      %3901 = vmatpush1.msra.mxu0 0.0
      %3902 = vmatprep.subr.mxu0 0.0
      %3903 = vmatpush1.msra.mxu0 0.0
      %3904 = vmatprep.subr.mxu0 0.0
      %3905 = vmatpush1.msra.mxu0 0.0
      %3906 = vmatprep.subr.mxu0 0.0
      %3907 = vmatpush1.msra.mxu0 0.0
      %3908 = vmatprep.subr.mxu0 0.0
      %3909 = vmatpush1.msra.mxu0 0.0
      %3910 = vmatprep.mubr.f32.mxu0 0.0
      %3911 = vmatmul.mubr.f32.gmra.mrb[0].mxu0 %v3751
      %v3912 = vpop.f32.mrb[0].mxu0
      %v3913 = vadd.f32 0.0, %v3912
      %v3914 = vpop.f32.mrb[0].mxu0
      %3915 = vmatprep.mubr.f32.mxu0 0.0
      %3916 = vmatmul.mubr.f32.gmra.mrb[0].mxu0 %v3754
      %v3917 = vpop.f32.mrb[0].mxu0
      %v3918 = vadd.f32 0.0, %v3917
      %v3919 = vpop.f32.mrb[0].mxu0
      %3920 = vmatprep.mubr.f32.mxu0 0.0
      %3921 = vmatmul.mubr.f32.gmra.mrb[0].mxu0 %v3757
      %v3922 = vpop.f32.mrb[0].mxu0
      %v3923 = vadd.f32 0.0, %v3922
      %v3924 = vpop.f32.mrb[0].mxu0
      %3925 = vmatprep.mubr.f32.mxu0 0.0
      %3926 = vmatmul.mubr.f32.gmra.mrb[0].mxu0 %v3760
      %v3927 = vpop.f32.mrb[0].mxu0
      %v3928 = vadd.f32 0.0, %v3927
      %v3929 = vpop.f32.mrb[0].mxu0
      %3930 = vmatprep.mubr.f32.mxu0 0.0
      %3931 = vmatmul.mubr.f32.gmra.mrb[0].mxu0 %v3763
      %v3932 = vpop.f32.mrb[0].mxu0
      %v3933 = vadd.f32 0.0, %v3932
      %v3934 = vpop.f32.mrb[0].mxu0
      %3935 = vmatprep.mubr.f32.mxu0 0.0
      %3936 = vmatmul.mubr.f32.gmra.mrb[0].mxu0 %v3766
      %v3937 = vpop.f32.mrb[0].mxu0
      %v3938 = vadd.f32 0.0, %v3937
      %v3939 = vpop.f32.mrb[0].mxu0
      %3940 = vmatprep.mubr.f32.mxu0 0.0
      %3941 = vmatmul.mubr.f32.gmra.mrb[0].mxu0 %v3769
      %v3942 = vpop.f32.mrb[0].mxu0
      %v3943 = vadd.f32 0.0, %v3942
      %v3944 = vpop.f32.mrb[0].mxu0
      %3945 = vmatprep.mubr.f32.mxu0 0.0
      %3946 = vmatmul.mubr.f32.gmra.mrb[0].mxu0 %v3772
      %v3947 = vpop.f32.mrb[0].mxu0
      %v3948 = vadd.f32 0.0, %v3947
      %v3949 = vpop.f32.mrb[0].mxu0
      %3950 = vmatprep.mubr.f32.mxu0 0.0
      %3951 = vmatmul.mubr.f32.gmra.mrb[0].mxu0 %v3775
      %v3952 = vpop.f32.mrb[0].mxu0
      %v3953 = vadd.f32 0.0, %v3952
      %v3954 = vpop.f32.mrb[0].mxu0
      %3955 = vmatprep.mubr.f32.mxu0 0.0
      %3956 = vmatmul.mubr.f32.gmra.mrb[0].mxu0 %v3778
      %v3957 = vpop.f32.mrb[0].mxu0
      %v3958 = vadd.f32 0.0, %v3957
      %v3959 = vpop.f32.mrb[0].mxu0
      %3960 = vmatprep.mubr.f32.mxu0 0.0
      %3961 = vmatmul.mubr.f32.gmra.mrb[0].mxu0 %v3781
      %v3962 = vpop.f32.mrb[0].mxu0
      %v3963 = vadd.f32 0.0, %v3962
      %v3964 = vpop.f32.mrb[0].mxu0
      %3965 = vmatprep.mubr.f32.mxu0 0.0
      %3966 = vmatmul.mubr.f32.gmra.mrb[0].mxu0 %v3784
      %v3967 = vpop.f32.mrb[0].mxu0
      %v3968 = vadd.f32 0.0, %v3967
      %v3969 = vpop.f32.mrb[0].mxu0
      %3970 = vmatprep.mubr.f32.mxu0 0.0
      %3971 = vmatmul.mubr.f32.gmra.mrb[0].mxu0 %v3787
      %v3972 = vpop.f32.mrb[0].mxu0
      %v3973 = vadd.f32 0.0, %v3972
      %v3974 = vpop.f32.mrb[0].mxu0
      %3975 = vmatprep.mubr.f32.mxu0 0.0
      %3976 = vmatmul.mubr.f32.gmra.mrb[0].mxu0 %v3790
      %v3977 = vpop.f32.mrb[0].mxu0
      %v3978 = vadd.f32 0.0, %v3977
      %v3979 = vpop.f32.mrb[0].mxu0
      %3980 = vmatprep.mubr.f32.mxu0 0.0
      %3981 = vmatmul.mubr.f32.gmra.mrb[0].mxu0 %v3793
      %v3982 = vpop.f32.mrb[0].mxu0
      %v3983 = vadd.f32 0.0, %v3982
      %v3984 = vpop.f32.mrb[0].mxu0
      %3985 = vmatprep.mubr.f32.mxu0 0.0
      %3986 = vmatmul.mubr.f32.gmra.mrb[0].mxu0 %v3796
      %v3987 = vpop.f32.mrb[0].mxu0
      %v3988 = vadd.f32 0.0, %v3987
      %v3989 = vpop.f32.mrb[0].mxu0
      %3990 = vmatprep.mubr.f32.mxu0 0.0
      %3991 = vmatmul.mubr.f32.gmra.mrb[0].mxu0 %v3799
      %v3992 = vpop.f32.mrb[0].mxu0
      %v3993 = vadd.f32 0.0, %v3992
      %v3994 = vpop.f32.mrb[0].mxu0
      %3995 = vmatprep.mubr.f32.mxu0 0.0
      %3996 = vmatmul.mubr.f32.gmra.mrb[0].mxu0 %v3802
      %v3997 = vpop.f32.mrb[0].mxu0
      %v3998 = vadd.f32 0.0, %v3997
      %v3999 = vpop.f32.mrb[0].mxu0
      %4000 = vmatprep.mubr.f32.mxu0 0.0
      %4001 = vmatmul.mubr.f32.gmra.mrb[0].mxu0 %v3805
      %v4002 = vpop.f32.mrb[0].mxu0
      %v4003 = vadd.f32 0.0, %v4002
      %v4004 = vpop.f32.mrb[0].mxu0
      %4005 = vmatprep.mubr.f32.mxu0 0.0
      %4006 = vmatmul.mubr.f32.gmra.mrb[0].mxu0 %v3808
      %v4007 = vpop.f32.mrb[0].mxu0
      %v4008 = vadd.f32 0.0, %v4007
      %v4009 = vpop.f32.mrb[0].mxu0
      %4010 = vmatprep.mubr.f32.mxu0 0.0
      %4011 = vmatmul.mubr.f32.gmra.mrb[0].mxu0 %v3811
      %v4012 = vpop.f32.mrb[0].mxu0
      %v4013 = vadd.f32 0.0, %v4012
      %v4014 = vpop.f32.mrb[0].mxu0
      %4015 = vmatprep.mubr.f32.mxu0 0.0
      %4016 = vmatmul.mubr.f32.gmra.mrb[0].mxu0 %v3814
      %v4017 = vpop.f32.mrb[0].mxu0
      %v4018 = vadd.f32 0.0, %v4017
      %v4019 = vpop.f32.mrb[0].mxu0
      %4020 = vmatprep.mubr.f32.mxu0 0.0
      %4021 = vmatmul.mubr.f32.gmra.mrb[0].mxu0 %v3817
      %v4022 = vpop.f32.mrb[0].mxu0
      %v4023 = vadd.f32 0.0, %v4022
      %v4024 = vpop.f32.mrb[0].mxu0
      %4025 = vmatprep.mubr.f32.mxu0 0.0
      %4026 = vmatmul.mubr.f32.gmra.mrb[0].mxu0 %v3820
      %v4027 = vpop.f32.mrb[0].mxu0
      %v4028 = vadd.f32 0.0, %v4027
      %v4029 = vpop.f32.mrb[0].mxu0
      %4030 = vmatprep.mubr.f32.mxu0 0.0
      %4031 = vmatmul.mubr.f32.gmra.mrb[0].mxu0 %v3823
      %v4032 = vpop.f32.mrb[0].mxu0
      %v4033 = vadd.f32 0.0, %v4032
      %v4034 = vpop.f32.mrb[0].mxu0
      %4035 = vmatprep.mubr.f32.mxu0 0.0
      %4036 = vmatmul.mubr.f32.gmra.mrb[0].mxu0 %v3826
      %v4037 = vpop.f32.mrb[0].mxu0
      %v4038 = vadd.f32 0.0, %v4037
      %v4039 = vpop.f32.mrb[0].mxu0
      %4040 = vmatprep.mubr.f32.mxu0 0.0
      %4041 = vmatmul.mubr.f32.gmra.mrb[0].mxu0 %v3829
      %v4042 = vpop.f32.mrb[0].mxu0
      %v4043 = vadd.f32 0.0, %v4042
      %v4044 = vpop.f32.mrb[0].mxu0
      %4045 = vmatprep.mubr.f32.mxu0 0.0
      %4046 = vmatmul.mubr.f32.gmra.mrb[0].mxu0 %v3832
      %v4047 = vpop.f32.mrb[0].mxu0
      %v4048 = vadd.f32 0.0, %v4047
      %v4049 = vpop.f32.mrb[0].mxu0
      %4050 = vmatprep.mubr.f32.mxu0 0.0
      %4051 = vmatmul.mubr.f32.gmra.mrb[0].mxu0 %v3835
      %v4052 = vpop.f32.mrb[0].mxu0
      %v4053 = vadd.f32 0.0, %v4052
      %v4054 = vpop.f32.mrb[0].mxu0
      %4055 = vmatprep.mubr.f32.mxu0 0.0
      %4056 = vmatmul.mubr.f32.gmra.mrb[0].mxu0 %v3838
      %v4057 = vpop.f32.mrb[0].mxu0
      %v4058 = vadd.f32 0.0, %v4057
      %v4059 = vpop.f32.mrb[0].mxu0
      %4060 = vmatprep.mubr.f32.mxu0 0.0
      %4061 = vmatmul.mubr.f32.gmra.mrb[0].mxu0 %v3841
      %v4062 = vpop.f32.mrb[0].mxu0
      %v4063 = vadd.f32 0.0, %v4062
      %v4064 = vpop.f32.mrb[0].mxu0
      %4065 = vmatprep.mubr.f32.mxu0 0.0
      %4066 = vmatmul.mubr.f32.gmra.mrb[0].mxu0 %v3844
      %v4067 = vpop.f32.mrb[0].mxu0
      %v4068 = vadd.f32 0.0, %v4067
      %v4069 = vpop.f32.mrb[0].mxu0
      %4070 = vdwg.mxu0
      %v4071 = vadd.f32 %v3649, %v3913
      %v4072 = vadd.f32 %v3650, %v3918
      %v4073 = vadd.f32 %v3651, %v3923
      %v4074 = vadd.f32 %v3652, %v3928
      %v4075 = vadd.f32 %v3653, %v3933
      %v4076 = vadd.f32 %v3654, %v3938
      %v4077 = vadd.f32 %v3655, %v3943
      %v4078 = vadd.f32 %v3656, %v3948
      %v4079 = vadd.f32 %v3657, %v3953
      %v4080 = vadd.f32 %v3658, %v3958
      %v4081 = vadd.f32 %v3659, %v3963
      %v4082 = vadd.f32 %v3660, %v3968
      %v4083 = vadd.f32 %v3661, %v3973
      %v4084 = vadd.f32 %v3662, %v3978
      %v4085 = vadd.f32 %v3663, %v3983
      %v4086 = vadd.f32 %v3664, %v3988
      %v4087 = vadd.f32 %v3665, %v3993
      %v4088 = vadd.f32 %v3666, %v3998
      %v4089 = vadd.f32 %v3667, %v4003
      %v4090 = vadd.f32 %v3668, %v4008
      %v4091 = vadd.f32 %v3669, %v4013
      %v4092 = vadd.f32 %v3670, %v4018
      %v4093 = vadd.f32 %v3671, %v4023
      %v4094 = vadd.f32 %v3672, %v4028
      %v4095 = vadd.f32 %v3673, %v4033
      %v4096 = vadd.f32 %v3674, %v4038
      %v4097 = vadd.f32 %v3675, %v4043
      %v4098 = vadd.f32 %v3676, %v4048
      %v4099 = vadd.f32 %v3677, %v4053
      %v4100 = vadd.f32 %v3678, %v4058
      %v4101 = vadd.f32 %v3679, %v4063
      %v4102 = vadd.f32 %v3680, %v4068
      %v4103 = vld [vmem:[#allocation2 + $0x21] sm:$0xff]
      %v4104 = vld [vmem:[#allocation2 + $0x29] sm:$0xff]
      %v4105 = vld [vmem:[#allocation2 + $0x31] sm:$0xff]
      %v4106 = vld [vmem:[#allocation2 + $0x39] sm:$0xff]
      %v4107 = vld [vmem:[#allocation2 + $0x41] sm:$0xff]
      %v4108 = vld [vmem:[#allocation2 + $0x49] sm:$0xff]
      %v4109 = vld [vmem:[#allocation2 + $0x51] sm:$0xff]
      %v4110 = vld [vmem:[#allocation2 + $0x59] sm:$0xff]
      %v4111 = vld [vmem:[#allocation2 + $0x61] sm:$0xff]
      %v4112 = vld [vmem:[#allocation2 + $0x69] sm:$0xff]
      %v4113 = vld [vmem:[#allocation2 + $0x71] sm:$0xff]
      %v4114 = vld [vmem:[#allocation2 + $0x79] sm:$0xff]
      %v4115 = vld [vmem:[#allocation2 + $0x81] sm:$0xff]
      %v4116 = vld [vmem:[#allocation2 + $0x89] sm:$0xff]
      %v4117 = vld [vmem:[#allocation2 + $0x91] sm:$0xff]
      %v4118 = vld [vmem:[#allocation2 + $0x99] sm:$0xff]
      %v4119 = vld [vmem:[#allocation2 + $0xa1] sm:$0xff]
      %v4120 = vld [vmem:[#allocation2 + $0xa9] sm:$0xff]
      %v4121 = vld [vmem:[#allocation2 + $0xb1] sm:$0xff]
      %v4122 = vld [vmem:[#allocation2 + $0xb9] sm:$0xff]
      %v4123 = vld [vmem:[#allocation2 + $0xc1] sm:$0xff]
      %v4124 = vld [vmem:[#allocation2 + $0xc9] sm:$0xff]
      %v4125 = vld [vmem:[#allocation2 + $0xd1] sm:$0xff]
      %v4126 = vld [vmem:[#allocation2 + $0xd9] sm:$0xff]
      %v4127 = vld [vmem:[#allocation2 + $0xe1] sm:$0xff]
      %v4128 = vld [vmem:[#allocation2 + $0xe9] sm:$0xff]
      %v4129 = vld [vmem:[#allocation2 + $0xf1] sm:$0xff]
      %v4130 = vld [vmem:[#allocation2 + $0xf9] sm:$0xff]
      %v4131 = vld [vmem:[#allocation2 + $0x101] sm:$0xff]
      %v4132 = vld [vmem:[#allocation2 + $0x109] sm:$0xff]
      %v4133 = vld [vmem:[#allocation2 + $0x111] sm:$0xff]
      %v4134 = vld [vmem:[#allocation2 + $0x119] sm:$0xff]
      %s4135 = scalar_lea.vmem %s6, 224
      %v4136 = vld [vmem:[%s4135] sm:$0xff]
      %v4137 = vld [vmem:[%s4135 + $0x8] sm:$0xff]
      %v4138 = vld [vmem:[%s4135 + $0x10] sm:$0xff]
      %v4139 = vld [vmem:[%s4135 + $0x18] sm:$0xff]
      %v4141 = vsel %vm759, %v4103, 0
      %v4144 = vsel %vm759, %v4104, 0
      %v4147 = vsel %vm759, %v4105, 0
      %v4150 = vsel %vm759, %v4106, 0
      %v4153 = vsel %vm759, %v4107, 0
      %v4156 = vsel %vm759, %v4108, 0
      %v4159 = vsel %vm759, %v4109, 0
      %v4162 = vsel %vm759, %v4110, 0
      %v4165 = vsel %vm759, %v4111, 0
      %v4168 = vsel %vm759, %v4112, 0
      %v4171 = vsel %vm759, %v4113, 0
      %v4174 = vsel %vm759, %v4114, 0
      %v4177 = vsel %vm759, %v4115, 0
      %v4180 = vsel %vm759, %v4116, 0
      %v4183 = vsel %vm759, %v4117, 0
      %v4186 = vsel %vm759, %v4118, 0
      %v4189 = vsel %vm759, %v4119, 0
      %v4192 = vsel %vm759, %v4120, 0
      %v4195 = vsel %vm759, %v4121, 0
      %v4198 = vsel %vm759, %v4122, 0
      %v4201 = vsel %vm759, %v4123, 0
      %v4204 = vsel %vm759, %v4124, 0
      %v4207 = vsel %vm759, %v4125, 0
      %v4210 = vsel %vm759, %v4126, 0
      %v4213 = vsel %vm759, %v4127, 0
      %v4216 = vsel %vm759, %v4128, 0
      %v4219 = vsel %vm759, %v4129, 0
      %v4222 = vsel %vm759, %v4130, 0
      %v4225 = vsel %vm759, %v4131, 0
      %v4228 = vsel %vm759, %v4132, 0
      %v4231 = vsel %vm759, %v4133, 0
      %v4234 = vsel %vm759, %v4134, 0
      %4236 = vmatprep.subr.mxu0 0.0
      %4237 = vmatpush1.msra.mxu0 %v4136
      %4238 = vmatprep.subr.mxu0 0.0
      %4239 = vmatpush1.msra.mxu0 %v4137
      %4240 = vmatprep.subr.mxu0 0.0
      %4241 = vmatpush1.msra.mxu0 %v4138
      %4242 = vmatprep.subr.mxu0 0.0
      %4243 = vmatpush1.msra.mxu0 %v4139
      %4244 = vmatprep.subr.mxu0 0.0
      %4245 = vmatpush1.msra.mxu0 0.0
      %4246 = vmatprep.subr.mxu0 0.0
      %4247 = vmatpush1.msra.mxu0 0.0
      %4248 = vmatprep.subr.mxu0 0.0
      %4249 = vmatpush1.msra.mxu0 0.0
      %4250 = vmatprep.subr.mxu0 0.0
      %4251 = vmatpush1.msra.mxu0 0.0
      %4252 = vmatprep.subr.mxu0 0.0
      %4253 = vmatpush1.msra.mxu0 0.0
      %4254 = vmatprep.subr.mxu0 0.0
      %4255 = vmatpush1.msra.mxu0 0.0
      %4256 = vmatprep.subr.mxu0 0.0
      %4257 = vmatpush1.msra.mxu0 0.0
      %4258 = vmatprep.subr.mxu0 0.0
      %4259 = vmatpush1.msra.mxu0 0.0
      %4260 = vmatprep.subr.mxu0 0.0
      %4261 = vmatpush1.msra.mxu0 0.0
      %4262 = vmatprep.subr.mxu0 0.0
      %4263 = vmatpush1.msra.mxu0 0.0
      %4264 = vmatprep.subr.mxu0 0.0
      %4265 = vmatpush1.msra.mxu0 0.0
      %4266 = vmatprep.subr.mxu0 0.0
      %4267 = vmatpush1.msra.mxu0 0.0
      %4268 = vmatprep.subr.mxu0 0.0
      %4269 = vmatpush1.msra.mxu0 0.0
      %4270 = vmatprep.subr.mxu0 0.0
      %4271 = vmatpush1.msra.mxu0 0.0
      %4272 = vmatprep.subr.mxu0 0.0
      %4273 = vmatpush1.msra.mxu0 0.0
      %4274 = vmatprep.subr.mxu0 0.0
      %4275 = vmatpush1.msra.mxu0 0.0
      %4276 = vmatprep.subr.mxu0 0.0
      %4277 = vmatpush1.msra.mxu0 0.0
      %4278 = vmatprep.subr.mxu0 0.0
      %4279 = vmatpush1.msra.mxu0 0.0
      %4280 = vmatprep.subr.mxu0 0.0
      %4281 = vmatpush1.msra.mxu0 0.0
      %4282 = vmatprep.subr.mxu0 0.0
      %4283 = vmatpush1.msra.mxu0 0.0
      %4284 = vmatprep.subr.mxu0 0.0
      %4285 = vmatpush1.msra.mxu0 0.0
      %4286 = vmatprep.subr.mxu0 0.0
      %4287 = vmatpush1.msra.mxu0 0.0
      %4288 = vmatprep.subr.mxu0 0.0
      %4289 = vmatpush1.msra.mxu0 0.0
      %4290 = vmatprep.subr.mxu0 0.0
      %4291 = vmatpush1.msra.mxu0 0.0
      %4292 = vmatprep.subr.mxu0 0.0
      %4293 = vmatpush1.msra.mxu0 0.0
      %4294 = vmatprep.subr.mxu0 0.0
      %4295 = vmatpush1.msra.mxu0 0.0
      %4296 = vmatprep.subr.mxu0 0.0
      %4297 = vmatpush1.msra.mxu0 0.0
      %4298 = vmatprep.subr.mxu0 0.0
      %4299 = vmatpush1.msra.mxu0 0.0
      %4300 = vmatprep.mubr.f32.mxu0 0.0
      %4301 = vmatmul.mubr.f32.gmra.mrb[0].mxu0 %v4141
      %v4302 = vpop.f32.mrb[0].mxu0
      %v4303 = vadd.f32 0.0, %v4302
      %v4304 = vpop.f32.mrb[0].mxu0
      %4305 = vmatprep.mubr.f32.mxu0 0.0
      %4306 = vmatmul.mubr.f32.gmra.mrb[0].mxu0 %v4144
      %v4307 = vpop.f32.mrb[0].mxu0
      %v4308 = vadd.f32 0.0, %v4307
      %v4309 = vpop.f32.mrb[0].mxu0
      %4310 = vmatprep.mubr.f32.mxu0 0.0
      %4311 = vmatmul.mubr.f32.gmra.mrb[0].mxu0 %v4147
      %v4312 = vpop.f32.mrb[0].mxu0
      %v4313 = vadd.f32 0.0, %v4312
      %v4314 = vpop.f32.mrb[0].mxu0
      %4315 = vmatprep.mubr.f32.mxu0 0.0
      %4316 = vmatmul.mubr.f32.gmra.mrb[0].mxu0 %v4150
      %v4317 = vpop.f32.mrb[0].mxu0
      %v4318 = vadd.f32 0.0, %v4317
      %v4319 = vpop.f32.mrb[0].mxu0
      %4320 = vmatprep.mubr.f32.mxu0 0.0
      %4321 = vmatmul.mubr.f32.gmra.mrb[0].mxu0 %v4153
      %v4322 = vpop.f32.mrb[0].mxu0
      %v4323 = vadd.f32 0.0, %v4322
      %v4324 = vpop.f32.mrb[0].mxu0
      %4325 = vmatprep.mubr.f32.mxu0 0.0
      %4326 = vmatmul.mubr.f32.gmra.mrb[0].mxu0 %v4156
      %v4327 = vpop.f32.mrb[0].mxu0
      %v4328 = vadd.f32 0.0, %v4327
      %v4329 = vpop.f32.mrb[0].mxu0
      %4330 = vmatprep.mubr.f32.mxu0 0.0
      %4331 = vmatmul.mubr.f32.gmra.mrb[0].mxu0 %v4159
      %v4332 = vpop.f32.mrb[0].mxu0
      %v4333 = vadd.f32 0.0, %v4332
      %v4334 = vpop.f32.mrb[0].mxu0
      %4335 = vmatprep.mubr.f32.mxu0 0.0
      %4336 = vmatmul.mubr.f32.gmra.mrb[0].mxu0 %v4162
      %v4337 = vpop.f32.mrb[0].mxu0
      %v4338 = vadd.f32 0.0, %v4337
      %v4339 = vpop.f32.mrb[0].mxu0
      %4340 = vmatprep.mubr.f32.mxu0 0.0
      %4341 = vmatmul.mubr.f32.gmra.mrb[0].mxu0 %v4165
      %v4342 = vpop.f32.mrb[0].mxu0
      %v4343 = vadd.f32 0.0, %v4342
      %v4344 = vpop.f32.mrb[0].mxu0
      %4345 = vmatprep.mubr.f32.mxu0 0.0
      %4346 = vmatmul.mubr.f32.gmra.mrb[0].mxu0 %v4168
      %v4347 = vpop.f32.mrb[0].mxu0
      %v4348 = vadd.f32 0.0, %v4347
      %v4349 = vpop.f32.mrb[0].mxu0
      %4350 = vmatprep.mubr.f32.mxu0 0.0
      %4351 = vmatmul.mubr.f32.gmra.mrb[0].mxu0 %v4171
      %v4352 = vpop.f32.mrb[0].mxu0
      %v4353 = vadd.f32 0.0, %v4352
      %v4354 = vpop.f32.mrb[0].mxu0
      %4355 = vmatprep.mubr.f32.mxu0 0.0
      %4356 = vmatmul.mubr.f32.gmra.mrb[0].mxu0 %v4174
      %v4357 = vpop.f32.mrb[0].mxu0
      %v4358 = vadd.f32 0.0, %v4357
      %v4359 = vpop.f32.mrb[0].mxu0
      %4360 = vmatprep.mubr.f32.mxu0 0.0
      %4361 = vmatmul.mubr.f32.gmra.mrb[0].mxu0 %v4177
      %v4362 = vpop.f32.mrb[0].mxu0
      %v4363 = vadd.f32 0.0, %v4362
      %v4364 = vpop.f32.mrb[0].mxu0
      %4365 = vmatprep.mubr.f32.mxu0 0.0
      %4366 = vmatmul.mubr.f32.gmra.mrb[0].mxu0 %v4180
      %v4367 = vpop.f32.mrb[0].mxu0
      %v4368 = vadd.f32 0.0, %v4367
      %v4369 = vpop.f32.mrb[0].mxu0
      %4370 = vmatprep.mubr.f32.mxu0 0.0
      %4371 = vmatmul.mubr.f32.gmra.mrb[0].mxu0 %v4183
      %v4372 = vpop.f32.mrb[0].mxu0
      %v4373 = vadd.f32 0.0, %v4372
      %v4374 = vpop.f32.mrb[0].mxu0
      %4375 = vmatprep.mubr.f32.mxu0 0.0
      %4376 = vmatmul.mubr.f32.gmra.mrb[0].mxu0 %v4186
      %v4377 = vpop.f32.mrb[0].mxu0
      %v4378 = vadd.f32 0.0, %v4377
      %v4379 = vpop.f32.mrb[0].mxu0
      %4380 = vmatprep.mubr.f32.mxu0 0.0
      %4381 = vmatmul.mubr.f32.gmra.mrb[0].mxu0 %v4189
      %v4382 = vpop.f32.mrb[0].mxu0
      %v4383 = vadd.f32 0.0, %v4382
      %v4384 = vpop.f32.mrb[0].mxu0
      %4385 = vmatprep.mubr.f32.mxu0 0.0
      %4386 = vmatmul.mubr.f32.gmra.mrb[0].mxu0 %v4192
      %v4387 = vpop.f32.mrb[0].mxu0
      %v4388 = vadd.f32 0.0, %v4387
      %v4389 = vpop.f32.mrb[0].mxu0
      %4390 = vmatprep.mubr.f32.mxu0 0.0
      %4391 = vmatmul.mubr.f32.gmra.mrb[0].mxu0 %v4195
      %v4392 = vpop.f32.mrb[0].mxu0
      %v4393 = vadd.f32 0.0, %v4392
      %v4394 = vpop.f32.mrb[0].mxu0
      %4395 = vmatprep.mubr.f32.mxu0 0.0
      %4396 = vmatmul.mubr.f32.gmra.mrb[0].mxu0 %v4198
      %v4397 = vpop.f32.mrb[0].mxu0
      %v4398 = vadd.f32 0.0, %v4397
      %v4399 = vpop.f32.mrb[0].mxu0
      %4400 = vmatprep.mubr.f32.mxu0 0.0
      %4401 = vmatmul.mubr.f32.gmra.mrb[0].mxu0 %v4201
      %v4402 = vpop.f32.mrb[0].mxu0
      %v4403 = vadd.f32 0.0, %v4402
      %v4404 = vpop.f32.mrb[0].mxu0
      %4405 = vmatprep.mubr.f32.mxu0 0.0
      %4406 = vmatmul.mubr.f32.gmra.mrb[0].mxu0 %v4204
      %v4407 = vpop.f32.mrb[0].mxu0
      %v4408 = vadd.f32 0.0, %v4407
      %v4409 = vpop.f32.mrb[0].mxu0
      %4410 = vmatprep.mubr.f32.mxu0 0.0
      %4411 = vmatmul.mubr.f32.gmra.mrb[0].mxu0 %v4207
      %v4412 = vpop.f32.mrb[0].mxu0
      %v4413 = vadd.f32 0.0, %v4412
      %v4414 = vpop.f32.mrb[0].mxu0
      %4415 = vmatprep.mubr.f32.mxu0 0.0
      %4416 = vmatmul.mubr.f32.gmra.mrb[0].mxu0 %v4210
      %v4417 = vpop.f32.mrb[0].mxu0
      %v4418 = vadd.f32 0.0, %v4417
      %v4419 = vpop.f32.mrb[0].mxu0
      %4420 = vmatprep.mubr.f32.mxu0 0.0
      %4421 = vmatmul.mubr.f32.gmra.mrb[0].mxu0 %v4213
      %v4422 = vpop.f32.mrb[0].mxu0
      %v4423 = vadd.f32 0.0, %v4422
      %v4424 = vpop.f32.mrb[0].mxu0
      %4425 = vmatprep.mubr.f32.mxu0 0.0
      %4426 = vmatmul.mubr.f32.gmra.mrb[0].mxu0 %v4216
      %v4427 = vpop.f32.mrb[0].mxu0
      %v4428 = vadd.f32 0.0, %v4427
      %v4429 = vpop.f32.mrb[0].mxu0
      %4430 = vmatprep.mubr.f32.mxu0 0.0
      %4431 = vmatmul.mubr.f32.gmra.mrb[0].mxu0 %v4219
      %v4432 = vpop.f32.mrb[0].mxu0
      %v4433 = vadd.f32 0.0, %v4432
      %v4434 = vpop.f32.mrb[0].mxu0
      %4435 = vmatprep.mubr.f32.mxu0 0.0
      %4436 = vmatmul.mubr.f32.gmra.mrb[0].mxu0 %v4222
      %v4437 = vpop.f32.mrb[0].mxu0
      %v4438 = vadd.f32 0.0, %v4437
      %v4439 = vpop.f32.mrb[0].mxu0
      %4440 = vmatprep.mubr.f32.mxu0 0.0
      %4441 = vmatmul.mubr.f32.gmra.mrb[0].mxu0 %v4225
      %v4442 = vpop.f32.mrb[0].mxu0
      %v4443 = vadd.f32 0.0, %v4442
      %v4444 = vpop.f32.mrb[0].mxu0
      %4445 = vmatprep.mubr.f32.mxu0 0.0
      %4446 = vmatmul.mubr.f32.gmra.mrb[0].mxu0 %v4228
      %v4447 = vpop.f32.mrb[0].mxu0
      %v4448 = vadd.f32 0.0, %v4447
      %v4449 = vpop.f32.mrb[0].mxu0
      %4450 = vmatprep.mubr.f32.mxu0 0.0
      %4451 = vmatmul.mubr.f32.gmra.mrb[0].mxu0 %v4231
      %v4452 = vpop.f32.mrb[0].mxu0
      %v4453 = vadd.f32 0.0, %v4452
      %v4454 = vpop.f32.mrb[0].mxu0
      %4455 = vmatprep.mubr.f32.mxu0 0.0
      %4456 = vmatmul.mubr.f32.gmra.mrb[0].mxu0 %v4234
      %v4457 = vpop.f32.mrb[0].mxu0
      %v4458 = vadd.f32 0.0, %v4457
      %v4459 = vpop.f32.mrb[0].mxu0
      %4460 = vdwg.mxu0
      %v4461 = vadd.f32 %v4071, %v4303
      %v4462 = vadd.f32 %v4072, %v4308
      %v4463 = vadd.f32 %v4073, %v4313
      %v4464 = vadd.f32 %v4074, %v4318
      %v4465 = vadd.f32 %v4075, %v4323
      %v4466 = vadd.f32 %v4076, %v4328
      %v4467 = vadd.f32 %v4077, %v4333
      %v4468 = vadd.f32 %v4078, %v4338
      %v4469 = vadd.f32 %v4079, %v4343
      %v4470 = vadd.f32 %v4080, %v4348
      %v4471 = vadd.f32 %v4081, %v4353
      %v4472 = vadd.f32 %v4082, %v4358
      %v4473 = vadd.f32 %v4083, %v4363
      %v4474 = vadd.f32 %v4084, %v4368
      %v4475 = vadd.f32 %v4085, %v4373
      %v4476 = vadd.f32 %v4086, %v4378
      %v4477 = vadd.f32 %v4087, %v4383
      %v4478 = vadd.f32 %v4088, %v4388
      %v4479 = vadd.f32 %v4089, %v4393
      %v4480 = vadd.f32 %v4090, %v4398
      %v4481 = vadd.f32 %v4091, %v4403
      %v4482 = vadd.f32 %v4092, %v4408
      %v4483 = vadd.f32 %v4093, %v4413
      %v4484 = vadd.f32 %v4094, %v4418
      %v4485 = vadd.f32 %v4095, %v4423
      %v4486 = vadd.f32 %v4096, %v4428
      %v4487 = vadd.f32 %v4097, %v4433
      %v4488 = vadd.f32 %v4098, %v4438
      %v4489 = vadd.f32 %v4099, %v4443
      %v4490 = vadd.f32 %v4100, %v4448
      %v4491 = vadd.f32 %v4101, %v4453
      %v4492 = vadd.f32 %v4102, %v4458
      %v4493 = vld [vmem:[#allocation2 + $0x22] sm:$0xff]
      %v4494 = vld [vmem:[#allocation2 + $0x2a] sm:$0xff]
      %v4495 = vld [vmem:[#allocation2 + $0x32] sm:$0xff]
      %v4496 = vld [vmem:[#allocation2 + $0x3a] sm:$0xff]
      %v4497 = vld [vmem:[#allocation2 + $0x42] sm:$0xff]
      %v4498 = vld [vmem:[#allocation2 + $0x4a] sm:$0xff]
      %v4499 = vld [vmem:[#allocation2 + $0x52] sm:$0xff]
      %v4500 = vld [vmem:[#allocation2 + $0x5a] sm:$0xff]
      %v4501 = vld [vmem:[#allocation2 + $0x62] sm:$0xff]
      %v4502 = vld [vmem:[#allocation2 + $0x6a] sm:$0xff]
      %v4503 = vld [vmem:[#allocation2 + $0x72] sm:$0xff]
      %v4504 = vld [vmem:[#allocation2 + $0x7a] sm:$0xff]
      %v4505 = vld [vmem:[#allocation2 + $0x82] sm:$0xff]
      %v4506 = vld [vmem:[#allocation2 + $0x8a] sm:$0xff]
      %v4507 = vld [vmem:[#allocation2 + $0x92] sm:$0xff]
      %v4508 = vld [vmem:[#allocation2 + $0x9a] sm:$0xff]
      %v4509 = vld [vmem:[#allocation2 + $0xa2] sm:$0xff]
      %v4510 = vld [vmem:[#allocation2 + $0xaa] sm:$0xff]
      %v4511 = vld [vmem:[#allocation2 + $0xb2] sm:$0xff]
      %v4512 = vld [vmem:[#allocation2 + $0xba] sm:$0xff]
      %v4513 = vld [vmem:[#allocation2 + $0xc2] sm:$0xff]
      %v4514 = vld [vmem:[#allocation2 + $0xca] sm:$0xff]
      %v4515 = vld [vmem:[#allocation2 + $0xd2] sm:$0xff]
      %v4516 = vld [vmem:[#allocation2 + $0xda] sm:$0xff]
      %v4517 = vld [vmem:[#allocation2 + $0xe2] sm:$0xff]
      %v4518 = vld [vmem:[#allocation2 + $0xea] sm:$0xff]
      %v4519 = vld [vmem:[#allocation2 + $0xf2] sm:$0xff]
      %v4520 = vld [vmem:[#allocation2 + $0xfa] sm:$0xff]
      %v4521 = vld [vmem:[#allocation2 + $0x102] sm:$0xff]
      %v4522 = vld [vmem:[#allocation2 + $0x10a] sm:$0xff]
      %v4523 = vld [vmem:[#allocation2 + $0x112] sm:$0xff]
      %v4524 = vld [vmem:[#allocation2 + $0x11a] sm:$0xff]
      %v4525 = vsel %vm1246, %v4493, 0.0
      %v4526 = vsel %vm1247, %v4494, 0.0
      %v4527 = vsel %vm1248, %v4495, 0.0
      %v4528 = vsel %vm1249, %v4496, 0.0
      %v4529 = vsel %vm1250, %v4497, 0.0
      %v4530 = vsel %vm1251, %v4498, 0.0
      %v4531 = vsel %vm1252, %v4499, 0.0
      %v4532 = vsel %vm1253, %v4500, 0.0
      %v4533 = vsel %vm1254, %v4501, 0.0
      %v4534 = vsel %vm1255, %v4502, 0.0
      %v4535 = vsel %vm1256, %v4503, 0.0
      %v4536 = vsel %vm1257, %v4504, 0.0
      %v4537 = vsel %vm1258, %v4505, 0.0
      %v4538 = vsel %vm1259, %v4506, 0.0
      %v4539 = vsel %vm1260, %v4507, 0.0
      %v4540 = vsel %vm1261, %v4508, 0.0
      %v4541 = vsel %vm1262, %v4509, 0.0
      %v4542 = vsel %vm1263, %v4510, 0.0
      %v4543 = vsel %vm1264, %v4511, 0.0
      %v4544 = vsel %vm1265, %v4512, 0.0
      %v4545 = vsel %vm1266, %v4513, 0.0
      %v4546 = vsel %vm1267, %v4514, 0.0
      %v4547 = vsel %vm1268, %v4515, 0.0
      %v4548 = vsel %vm1269, %v4516, 0.0
      %v4549 = vsel %vm1270, %v4517, 0.0
      %v4550 = vsel %vm1271, %v4518, 0.0
      %v4551 = vsel %vm1272, %v4519, 0.0
      %v4552 = vsel %vm1273, %v4520, 0.0
      %v4553 = vsel %vm1274, %v4521, 0.0
      %v4554 = vsel %vm1275, %v4522, 0.0
      %v4555 = vsel %vm1276, %v4523, 0.0
      %v4556 = vsel %vm1277, %v4524, 0.0
      %s4557 = scalar_lea.vmem %s6, 256
      %v4558 = vld [vmem:[%s4557] sm:$0xff]
      %v4559 = vld [vmem:[%s4557 + $0x8] sm:$0xff]
      %v4560 = vld [vmem:[%s4557 + $0x10] sm:$0xff]
      %v4561 = vld [vmem:[%s4557 + $0x18] sm:$0xff]
      %v4563 = vsel %vm759, %v4525, 0
      %v4566 = vsel %vm759, %v4526, 0
      %v4569 = vsel %vm759, %v4527, 0
      %v4572 = vsel %vm759, %v4528, 0
      %v4575 = vsel %vm759, %v4529, 0
      %v4578 = vsel %vm759, %v4530, 0
      %v4581 = vsel %vm759, %v4531, 0
      %v4584 = vsel %vm759, %v4532, 0
      %v4587 = vsel %vm759, %v4533, 0
      %v4590 = vsel %vm759, %v4534, 0
      %v4593 = vsel %vm759, %v4535, 0
      %v4596 = vsel %vm759, %v4536, 0
      %v4599 = vsel %vm759, %v4537, 0
      %v4602 = vsel %vm759, %v4538, 0
      %v4605 = vsel %vm759, %v4539, 0
      %v4608 = vsel %vm759, %v4540, 0
      %v4611 = vsel %vm759, %v4541, 0
      %v4614 = vsel %vm759, %v4542, 0
      %v4617 = vsel %vm759, %v4543, 0
      %v4620 = vsel %vm759, %v4544, 0
      %v4623 = vsel %vm759, %v4545, 0
      %v4626 = vsel %vm759, %v4546, 0
      %v4629 = vsel %vm759, %v4547, 0
      %v4632 = vsel %vm759, %v4548, 0
      %v4635 = vsel %vm759, %v4549, 0
      %v4638 = vsel %vm759, %v4550, 0
      %v4641 = vsel %vm759, %v4551, 0
      %v4644 = vsel %vm759, %v4552, 0
      %v4647 = vsel %vm759, %v4553, 0
      %v4650 = vsel %vm759, %v4554, 0
      %v4653 = vsel %vm759, %v4555, 0
      %v4656 = vsel %vm759, %v4556, 0
      %4658 = vmatprep.subr.mxu0 0.0
      %4659 = vmatpush1.msra.mxu0 %v4558
      %4660 = vmatprep.subr.mxu0 0.0
      %4661 = vmatpush1.msra.mxu0 %v4559
      %4662 = vmatprep.subr.mxu0 0.0
      %4663 = vmatpush1.msra.mxu0 %v4560
      %4664 = vmatprep.subr.mxu0 0.0
      %4665 = vmatpush1.msra.mxu0 %v4561
      %4666 = vmatprep.subr.mxu0 0.0
      %4667 = vmatpush1.msra.mxu0 0.0
      %4668 = vmatprep.subr.mxu0 0.0
      %4669 = vmatpush1.msra.mxu0 0.0
      %4670 = vmatprep.subr.mxu0 0.0
      %4671 = vmatpush1.msra.mxu0 0.0
      %4672 = vmatprep.subr.mxu0 0.0
      %4673 = vmatpush1.msra.mxu0 0.0
      %4674 = vmatprep.subr.mxu0 0.0
      %4675 = vmatpush1.msra.mxu0 0.0
      %4676 = vmatprep.subr.mxu0 0.0
      %4677 = vmatpush1.msra.mxu0 0.0
      %4678 = vmatprep.subr.mxu0 0.0
      %4679 = vmatpush1.msra.mxu0 0.0
      %4680 = vmatprep.subr.mxu0 0.0
      %4681 = vmatpush1.msra.mxu0 0.0
      %4682 = vmatprep.subr.mxu0 0.0
      %4683 = vmatpush1.msra.mxu0 0.0
      %4684 = vmatprep.subr.mxu0 0.0
      %4685 = vmatpush1.msra.mxu0 0.0
      %4686 = vmatprep.subr.mxu0 0.0
      %4687 = vmatpush1.msra.mxu0 0.0
      %4688 = vmatprep.subr.mxu0 0.0
      %4689 = vmatpush1.msra.mxu0 0.0
      %4690 = vmatprep.subr.mxu0 0.0
      %4691 = vmatpush1.msra.mxu0 0.0
      %4692 = vmatprep.subr.mxu0 0.0
      %4693 = vmatpush1.msra.mxu0 0.0
      %4694 = vmatprep.subr.mxu0 0.0
      %4695 = vmatpush1.msra.mxu0 0.0
      %4696 = vmatprep.subr.mxu0 0.0
      %4697 = vmatpush1.msra.mxu0 0.0
      %4698 = vmatprep.subr.mxu0 0.0
      %4699 = vmatpush1.msra.mxu0 0.0
      %4700 = vmatprep.subr.mxu0 0.0
      %4701 = vmatpush1.msra.mxu0 0.0
      %4702 = vmatprep.subr.mxu0 0.0
      %4703 = vmatpush1.msra.mxu0 0.0
      %4704 = vmatprep.subr.mxu0 0.0
      %4705 = vmatpush1.msra.mxu0 0.0
      %4706 = vmatprep.subr.mxu0 0.0
      %4707 = vmatpush1.msra.mxu0 0.0
      %4708 = vmatprep.subr.mxu0 0.0
      %4709 = vmatpush1.msra.mxu0 0.0
      %4710 = vmatprep.subr.mxu0 0.0
      %4711 = vmatpush1.msra.mxu0 0.0
      %4712 = vmatprep.subr.mxu0 0.0
      %4713 = vmatpush1.msra.mxu0 0.0
      %4714 = vmatprep.subr.mxu0 0.0
      %4715 = vmatpush1.msra.mxu0 0.0
      %4716 = vmatprep.subr.mxu0 0.0
      %4717 = vmatpush1.msra.mxu0 0.0
      %4718 = vmatprep.subr.mxu0 0.0
      %4719 = vmatpush1.msra.mxu0 0.0
      %4720 = vmatprep.subr.mxu0 0.0
      %4721 = vmatpush1.msra.mxu0 0.0
      %4722 = vmatprep.mubr.f32.mxu0 0.0
      %4723 = vmatmul.mubr.f32.gmra.mrb[0].mxu0 %v4563
      %v4724 = vpop.f32.mrb[0].mxu0
      %v4725 = vadd.f32 0.0, %v4724
      %v4726 = vpop.f32.mrb[0].mxu0
      %4727 = vmatprep.mubr.f32.mxu0 0.0
      %4728 = vmatmul.mubr.f32.gmra.mrb[0].mxu0 %v4566
      %v4729 = vpop.f32.mrb[0].mxu0
      %v4730 = vadd.f32 0.0, %v4729
      %v4731 = vpop.f32.mrb[0].mxu0
      %4732 = vmatprep.mubr.f32.mxu0 0.0
      %4733 = vmatmul.mubr.f32.gmra.mrb[0].mxu0 %v4569
      %v4734 = vpop.f32.mrb[0].mxu0
      %v4735 = vadd.f32 0.0, %v4734
      %v4736 = vpop.f32.mrb[0].mxu0
      %4737 = vmatprep.mubr.f32.mxu0 0.0
      %4738 = vmatmul.mubr.f32.gmra.mrb[0].mxu0 %v4572
      %v4739 = vpop.f32.mrb[0].mxu0
      %v4740 = vadd.f32 0.0, %v4739
      %v4741 = vpop.f32.mrb[0].mxu0
      %4742 = vmatprep.mubr.f32.mxu0 0.0
      %4743 = vmatmul.mubr.f32.gmra.mrb[0].mxu0 %v4575
      %v4744 = vpop.f32.mrb[0].mxu0
      %v4745 = vadd.f32 0.0, %v4744
      %v4746 = vpop.f32.mrb[0].mxu0
      %4747 = vmatprep.mubr.f32.mxu0 0.0
      %4748 = vmatmul.mubr.f32.gmra.mrb[0].mxu0 %v4578
      %v4749 = vpop.f32.mrb[0].mxu0
      %v4750 = vadd.f32 0.0, %v4749
      %v4751 = vpop.f32.mrb[0].mxu0
      %4752 = vmatprep.mubr.f32.mxu0 0.0
      %4753 = vmatmul.mubr.f32.gmra.mrb[0].mxu0 %v4581
      %v4754 = vpop.f32.mrb[0].mxu0
      %v4755 = vadd.f32 0.0, %v4754
      %v4756 = vpop.f32.mrb[0].mxu0
      %4757 = vmatprep.mubr.f32.mxu0 0.0
      %4758 = vmatmul.mubr.f32.gmra.mrb[0].mxu0 %v4584
      %v4759 = vpop.f32.mrb[0].mxu0
      %v4760 = vadd.f32 0.0, %v4759
      %v4761 = vpop.f32.mrb[0].mxu0
      %4762 = vmatprep.mubr.f32.mxu0 0.0
      %4763 = vmatmul.mubr.f32.gmra.mrb[0].mxu0 %v4587
      %v4764 = vpop.f32.mrb[0].mxu0
      %v4765 = vadd.f32 0.0, %v4764
      %v4766 = vpop.f32.mrb[0].mxu0
      %4767 = vmatprep.mubr.f32.mxu0 0.0
      %4768 = vmatmul.mubr.f32.gmra.mrb[0].mxu0 %v4590
      %v4769 = vpop.f32.mrb[0].mxu0
      %v4770 = vadd.f32 0.0, %v4769
      %v4771 = vpop.f32.mrb[0].mxu0
      %4772 = vmatprep.mubr.f32.mxu0 0.0
      %4773 = vmatmul.mubr.f32.gmra.mrb[0].mxu0 %v4593
      %v4774 = vpop.f32.mrb[0].mxu0
      %v4775 = vadd.f32 0.0, %v4774
      %v4776 = vpop.f32.mrb[0].mxu0
      %4777 = vmatprep.mubr.f32.mxu0 0.0
      %4778 = vmatmul.mubr.f32.gmra.mrb[0].mxu0 %v4596
      %v4779 = vpop.f32.mrb[0].mxu0
      %v4780 = vadd.f32 0.0, %v4779
      %v4781 = vpop.f32.mrb[0].mxu0
      %4782 = vmatprep.mubr.f32.mxu0 0.0
      %4783 = vmatmul.mubr.f32.gmra.mrb[0].mxu0 %v4599
      %v4784 = vpop.f32.mrb[0].mxu0
      %v4785 = vadd.f32 0.0, %v4784
      %v4786 = vpop.f32.mrb[0].mxu0
      %4787 = vmatprep.mubr.f32.mxu0 0.0
      %4788 = vmatmul.mubr.f32.gmra.mrb[0].mxu0 %v4602
      %v4789 = vpop.f32.mrb[0].mxu0
      %v4790 = vadd.f32 0.0, %v4789
      %v4791 = vpop.f32.mrb[0].mxu0
      %4792 = vmatprep.mubr.f32.mxu0 0.0
      %4793 = vmatmul.mubr.f32.gmra.mrb[0].mxu0 %v4605
      %v4794 = vpop.f32.mrb[0].mxu0
      %v4795 = vadd.f32 0.0, %v4794
      %v4796 = vpop.f32.mrb[0].mxu0
      %4797 = vmatprep.mubr.f32.mxu0 0.0
      %4798 = vmatmul.mubr.f32.gmra.mrb[0].mxu0 %v4608
      %v4799 = vpop.f32.mrb[0].mxu0
      %v4800 = vadd.f32 0.0, %v4799
      %v4801 = vpop.f32.mrb[0].mxu0
      %4802 = vmatprep.mubr.f32.mxu0 0.0
      %4803 = vmatmul.mubr.f32.gmra.mrb[0].mxu0 %v4611
      %v4804 = vpop.f32.mrb[0].mxu0
      %v4805 = vadd.f32 0.0, %v4804
      %v4806 = vpop.f32.mrb[0].mxu0
      %4807 = vmatprep.mubr.f32.mxu0 0.0
      %4808 = vmatmul.mubr.f32.gmra.mrb[0].mxu0 %v4614
      %v4809 = vpop.f32.mrb[0].mxu0
      %v4810 = vadd.f32 0.0, %v4809
      %v4811 = vpop.f32.mrb[0].mxu0
      %4812 = vmatprep.mubr.f32.mxu0 0.0
      %4813 = vmatmul.mubr.f32.gmra.mrb[0].mxu0 %v4617
      %v4814 = vpop.f32.mrb[0].mxu0
      %v4815 = vadd.f32 0.0, %v4814
      %v4816 = vpop.f32.mrb[0].mxu0
      %4817 = vmatprep.mubr.f32.mxu0 0.0
      %4818 = vmatmul.mubr.f32.gmra.mrb[0].mxu0 %v4620
      %v4819 = vpop.f32.mrb[0].mxu0
      %v4820 = vadd.f32 0.0, %v4819
      %v4821 = vpop.f32.mrb[0].mxu0
      %4822 = vmatprep.mubr.f32.mxu0 0.0
      %4823 = vmatmul.mubr.f32.gmra.mrb[0].mxu0 %v4623
      %v4824 = vpop.f32.mrb[0].mxu0
      %v4825 = vadd.f32 0.0, %v4824
      %v4826 = vpop.f32.mrb[0].mxu0
      %4827 = vmatprep.mubr.f32.mxu0 0.0
      %4828 = vmatmul.mubr.f32.gmra.mrb[0].mxu0 %v4626
      %v4829 = vpop.f32.mrb[0].mxu0
      %v4830 = vadd.f32 0.0, %v4829
      %v4831 = vpop.f32.mrb[0].mxu0
      %4832 = vmatprep.mubr.f32.mxu0 0.0
      %4833 = vmatmul.mubr.f32.gmra.mrb[0].mxu0 %v4629
      %v4834 = vpop.f32.mrb[0].mxu0
      %v4835 = vadd.f32 0.0, %v4834
      %v4836 = vpop.f32.mrb[0].mxu0
      %4837 = vmatprep.mubr.f32.mxu0 0.0
      %4838 = vmatmul.mubr.f32.gmra.mrb[0].mxu0 %v4632
      %v4839 = vpop.f32.mrb[0].mxu0
      %v4840 = vadd.f32 0.0, %v4839
      %v4841 = vpop.f32.mrb[0].mxu0
      %4842 = vmatprep.mubr.f32.mxu0 0.0
      %4843 = vmatmul.mubr.f32.gmra.mrb[0].mxu0 %v4635
      %v4844 = vpop.f32.mrb[0].mxu0
      %v4845 = vadd.f32 0.0, %v4844
      %v4846 = vpop.f32.mrb[0].mxu0
      %4847 = vmatprep.mubr.f32.mxu0 0.0
      %4848 = vmatmul.mubr.f32.gmra.mrb[0].mxu0 %v4638
      %v4849 = vpop.f32.mrb[0].mxu0
      %v4850 = vadd.f32 0.0, %v4849
      %v4851 = vpop.f32.mrb[0].mxu0
      %4852 = vmatprep.mubr.f32.mxu0 0.0
      %4853 = vmatmul.mubr.f32.gmra.mrb[0].mxu0 %v4641
      %v4854 = vpop.f32.mrb[0].mxu0
      %v4855 = vadd.f32 0.0, %v4854
      %v4856 = vpop.f32.mrb[0].mxu0
      %4857 = vmatprep.mubr.f32.mxu0 0.0
      %4858 = vmatmul.mubr.f32.gmra.mrb[0].mxu0 %v4644
      %v4859 = vpop.f32.mrb[0].mxu0
      %v4860 = vadd.f32 0.0, %v4859
      %v4861 = vpop.f32.mrb[0].mxu0
      %4862 = vmatprep.mubr.f32.mxu0 0.0
      %4863 = vmatmul.mubr.f32.gmra.mrb[0].mxu0 %v4647
      %v4864 = vpop.f32.mrb[0].mxu0
      %v4865 = vadd.f32 0.0, %v4864
      %v4866 = vpop.f32.mrb[0].mxu0
      %4867 = vmatprep.mubr.f32.mxu0 0.0
      %4868 = vmatmul.mubr.f32.gmra.mrb[0].mxu0 %v4650
      %v4869 = vpop.f32.mrb[0].mxu0
      %v4870 = vadd.f32 0.0, %v4869
      %v4871 = vpop.f32.mrb[0].mxu0
      %4872 = vmatprep.mubr.f32.mxu0 0.0
      %4873 = vmatmul.mubr.f32.gmra.mrb[0].mxu0 %v4653
      %v4874 = vpop.f32.mrb[0].mxu0
      %v4875 = vadd.f32 0.0, %v4874
      %v4876 = vpop.f32.mrb[0].mxu0
      %4877 = vmatprep.mubr.f32.mxu0 0.0
      %4878 = vmatmul.mubr.f32.gmra.mrb[0].mxu0 %v4656
      %v4879 = vpop.f32.mrb[0].mxu0
      %v4880 = vadd.f32 0.0, %v4879
      %v4881 = vpop.f32.mrb[0].mxu0
      %4882 = vdwg.mxu0
      %v4883 = vadd.f32 %v4461, %v4725
      %v4884 = vadd.f32 %v4462, %v4730
      %v4885 = vadd.f32 %v4463, %v4735
      %v4886 = vadd.f32 %v4464, %v4740
      %v4887 = vadd.f32 %v4465, %v4745
      %v4888 = vadd.f32 %v4466, %v4750
      %v4889 = vadd.f32 %v4467, %v4755
      %v4890 = vadd.f32 %v4468, %v4760
      %v4891 = vadd.f32 %v4469, %v4765
      %v4892 = vadd.f32 %v4470, %v4770
      %v4893 = vadd.f32 %v4471, %v4775
      %v4894 = vadd.f32 %v4472, %v4780
      %v4895 = vadd.f32 %v4473, %v4785
      %v4896 = vadd.f32 %v4474, %v4790
      %v4897 = vadd.f32 %v4475, %v4795
      %v4898 = vadd.f32 %v4476, %v4800
      %v4899 = vadd.f32 %v4477, %v4805
      %v4900 = vadd.f32 %v4478, %v4810
      %v4901 = vadd.f32 %v4479, %v4815
      %v4902 = vadd.f32 %v4480, %v4820
      %v4903 = vadd.f32 %v4481, %v4825
      %v4904 = vadd.f32 %v4482, %v4830
      %v4905 = vadd.f32 %v4483, %v4835
      %v4906 = vadd.f32 %v4484, %v4840
      %v4907 = vadd.f32 %v4485, %v4845
      %v4908 = vadd.f32 %v4486, %v4850
      %v4909 = vadd.f32 %v4487, %v4855
      %v4910 = vadd.f32 %v4488, %v4860
      %v4911 = vadd.f32 %v4489, %v4865
      %v4912 = vadd.f32 %v4490, %v4870
      %v4913 = vadd.f32 %v4491, %v4875
      %v4914 = vadd.f32 %v4492, %v4880
      %v4915 = vadd.f32 %v637, %v4883
      %v4916 = vadd.f32 %v638, %v4884
      %v4917 = vadd.f32 %v639, %v4885
      %v4918 = vadd.f32 %v640, %v4886
      %v4919 = vadd.f32 %v641, %v4887
      %v4920 = vadd.f32 %v642, %v4888
      %v4921 = vadd.f32 %v643, %v4889
      %v4922 = vadd.f32 %v644, %v4890
      %v4923 = vadd.f32 %v645, %v4891
      %v4924 = vadd.f32 %v646, %v4892
      %v4925 = vadd.f32 %v647, %v4893
      %v4926 = vadd.f32 %v648, %v4894
      %v4927 = vadd.f32 %v649, %v4895
      %v4928 = vadd.f32 %v650, %v4896
      %v4929 = vadd.f32 %v651, %v4897
      %v4930 = vadd.f32 %v652, %v4898
      %v4931 = vadd.f32 %v653, %v4899
      %v4932 = vadd.f32 %v654, %v4900
      %v4933 = vadd.f32 %v655, %v4901
      %v4934 = vadd.f32 %v656, %v4902
      %v4935 = vadd.f32 %v657, %v4903
      %v4936 = vadd.f32 %v658, %v4904
      %v4937 = vadd.f32 %v659, %v4905
      %v4938 = vadd.f32 %v660, %v4906
      %v4939 = vadd.f32 %v661, %v4907
      %v4940 = vadd.f32 %v662, %v4908
      %v4941 = vadd.f32 %v663, %v4909
      %v4942 = vadd.f32 %v664, %v4910
      %v4943 = vadd.f32 %v665, %v4911
      %v4944 = vadd.f32 %v666, %v4912
      %v4945 = vadd.f32 %v667, %v4913
      %v4946 = vadd.f32 %v668, %v4914
      %v4947 = vld [vmem:[%s7] sm:$0x1]
      %v4949 = vlaneseq
      %v4950 = vshrl.u32 %v4949, 7
      %v4951 = vsub.s32 0, %v4950
      %v4952 = vrot.slane %v4947, %v4951
      %v4954 = vadd.f32 %v4915, %v4952
      %v4955 = vadd.f32 %v4916, %v4952
      %v4956 = vadd.f32 %v4917, %v4952
      %v4957 = vadd.f32 %v4918, %v4952
      %v4958 = vadd.f32 %v4919, %v4952
      %v4959 = vadd.f32 %v4920, %v4952
      %v4960 = vadd.f32 %v4921, %v4952
      %v4961 = vadd.f32 %v4922, %v4952
      %v4962 = vadd.f32 %v4923, %v4952
      %v4963 = vadd.f32 %v4924, %v4952
      %v4964 = vadd.f32 %v4925, %v4952
      %v4965 = vadd.f32 %v4926, %v4952
      %v4966 = vadd.f32 %v4927, %v4952
      %v4967 = vadd.f32 %v4928, %v4952
      %v4968 = vadd.f32 %v4929, %v4952
      %v4969 = vadd.f32 %v4930, %v4952
      %v4970 = vadd.f32 %v4931, %v4952
      %v4971 = vadd.f32 %v4932, %v4952
      %v4972 = vadd.f32 %v4933, %v4952
      %v4973 = vadd.f32 %v4934, %v4952
      %v4974 = vadd.f32 %v4935, %v4952
      %v4975 = vadd.f32 %v4936, %v4952
      %v4976 = vadd.f32 %v4937, %v4952
      %v4977 = vadd.f32 %v4938, %v4952
      %v4978 = vadd.f32 %v4939, %v4952
      %v4979 = vadd.f32 %v4940, %v4952
      %v4980 = vadd.f32 %v4941, %v4952
      %v4981 = vadd.f32 %v4942, %v4952
      %v4982 = vadd.f32 %v4943, %v4952
      %v4983 = vadd.f32 %v4944, %v4952
      %v4984 = vadd.f32 %v4945, %v4952
      %v4985 = vadd.f32 %v4946, %v4952
      %4986 = vst.msk [vmem:[%s635] sm:$0xff] %vm759, %v4954
      %4987 = vst.msk [vmem:[%s635 + $0x8] sm:$0xff] %vm759, %v4955
      %4988 = vst.msk [vmem:[%s635 + $0x10] sm:$0xff] %vm759, %v4956
      %4989 = vst.msk [vmem:[%s635 + $0x18] sm:$0xff] %vm759, %v4957
      %4990 = vst.msk [vmem:[%s635 + $0x20] sm:$0xff] %vm759, %v4958
      %4991 = vst.msk [vmem:[%s635 + $0x28] sm:$0xff] %vm759, %v4959
      %4992 = vst.msk [vmem:[%s635 + $0x30] sm:$0xff] %vm759, %v4960
      %4993 = vst.msk [vmem:[%s635 + $0x38] sm:$0xff] %vm759, %v4961
      %4994 = vst.msk [vmem:[%s635 + $0x40] sm:$0xff] %vm759, %v4962
      %4995 = vst.msk [vmem:[%s635 + $0x48] sm:$0xff] %vm759, %v4963
      %4996 = vst.msk [vmem:[%s635 + $0x50] sm:$0xff] %vm759, %v4964
      %4997 = vst.msk [vmem:[%s635 + $0x58] sm:$0xff] %vm759, %v4965
      %4998 = vst.msk [vmem:[%s635 + $0x60] sm:$0xff] %vm759, %v4966
      %4999 = vst.msk [vmem:[%s635 + $0x68] sm:$0xff] %vm759, %v4967
      %5000 = vst.msk [vmem:[%s635 + $0x70] sm:$0xff] %vm759, %v4968
      %5001 = vst.msk [vmem:[%s635 + $0x78] sm:$0xff] %vm759, %v4969
      %5002 = vst.msk [vmem:[%s635 + $0x80] sm:$0xff] %vm759, %v4970
      %5003 = vst.msk [vmem:[%s635 + $0x88] sm:$0xff] %vm759, %v4971
      %5004 = vst.msk [vmem:[%s635 + $0x90] sm:$0xff] %vm759, %v4972
      %5005 = vst.msk [vmem:[%s635 + $0x98] sm:$0xff] %vm759, %v4973
      %5006 = vst.msk [vmem:[%s635 + $0xa0] sm:$0xff] %vm759, %v4974
      %5007 = vst.msk [vmem:[%s635 + $0xa8] sm:$0xff] %vm759, %v4975
      %5008 = vst.msk [vmem:[%s635 + $0xb0] sm:$0xff] %vm759, %v4976
      %5009 = vst.msk [vmem:[%s635 + $0xb8] sm:$0xff] %vm759, %v4977
      %5010 = vst.msk [vmem:[%s635 + $0xc0] sm:$0xff] %vm759, %v4978
      %5011 = vst.msk [vmem:[%s635 + $0xc8] sm:$0xff] %vm759, %v4979
      %5012 = vst.msk [vmem:[%s635 + $0xd0] sm:$0xff] %vm759, %v4980
      %5013 = vst.msk [vmem:[%s635 + $0xd8] sm:$0xff] %vm759, %v4981
      %5014 = vst.msk [vmem:[%s635 + $0xe0] sm:$0xff] %vm759, %v4982
      %5015 = vst.msk [vmem:[%s635 + $0xe8] sm:$0xff] %vm759, %v4983
      %5016 = vst.msk [vmem:[%s635 + $0xf0] sm:$0xff] %vm759, %v4984
      %5017 = vst.msk [vmem:[%s635 + $0xf8] sm:$0xff] %vm759, %v4985
      %s5018 = smul.u32 32, %s24
      %p5019 = scmp.lt.s32.totalorder %s23, 1
      %s5020 = scalar_select %p5019, %s23, 1
      %p5021 = scmp.lt.s32.totalorder %s5018, 31
      %s5022 = scalar_select %p5021, %s5018, 31
      %s5023 = smul.addr %s5020, 32
      %s5024 = sadd.s32 %s5022, %s5023
      %s5025 = smul.addr %s5024, 8
      %s5026 = scalar_lea.vmem %s8, %s5025
      // Predicated region
      $region53: #{tpu_custom_call.1} parent=51 // pred_check
        %p5027 = pneg %p293
      $region54: #{tpu_custom_call.1} parent=51 // pred_check_branch
        %5029 = sbr.rel (%p5027) target = $region56
      $region55: #{tpu_custom_call.1} parent=51 // pred_region
        %s5030 = smul.u32 32, %s24
      $region56: #{tpu_custom_call.1} parent=51 // pred_fallthru
        _
    $region52: #{tpu_custom_call.1} parent=5 // pred_fallthru
      _
    %p5031 = scmp.le.s32.totalorder 2, %s14
    // Predicated region
    $region57: #{tpu_custom_call.1} parent=5 // pred_check
      %p5032 = pneg %p5031
    $region58: #{tpu_custom_call.1} parent=5 // pred_check_branch
      %5034 = sbr.rel (%p5032) target = $region60
    $region59: #{tpu_custom_call.1} parent=5 // pred_region
      %s5035 = ssub.s32 %s14, 2
      // Predicated region
      $region61: #{tpu_custom_call.1} parent=59 // pred_check
        %p5036 = pneg %p299
      $region62: #{tpu_custom_call.1} parent=59 // pred_check_branch
        %5038 = sbr.rel (%p5036) target = $region64
      $region63: #{tpu_custom_call.1} parent=59 // pred_region
        %s5039 = smul.u32 32, %s26
        %p5040 = scmp.lt.s32.totalorder %s25, 1
        %s5041 = scalar_select %p5040, %s25, 1
        %p5042 = scmp.lt.s32.totalorder %s5039, 31
        %s5043 = scalar_select %p5042, %s5039, 31
        %s5044 = smul.addr %s5041, 32
        %s5045 = sadd.s32 %s5043, %s5044
        %s5046 = smul.addr %s5045, 8
        %s5047 = scalar_lea.vmem %s8, %s5046
      $region64: #{tpu_custom_call.1} parent=59 // pred_fallthru
        _
    $region60: #{tpu_custom_call.1} parent=5 // pred_fallthru
      _
  $region6: #{tpu_custom_call.1} parent=0 // loop_footer
    %s18 = sadd.s32 1, %s14
  $region7: #{tpu_custom_call.1} parent=0 // loop_footer_branch
    %13 = sbr.rel target = $region3
  $region8: #{tpu_custom_call.1} parent=0 // loop_exit
    _

</llo_original>
